<compile_context>
chip_gen: v7x
topology: tpu7x:2x2x1
jax: 0.10.0
libtpu: 0.0.40
codegen_flags: <defaults>
</compile_context>

<pallas_src>
import functools

import jax
import jax.numpy as jnp
from jax.experimental import pallas as pl
from jax.experimental.pallas import tpu as pltpu


def _round_up(x: int, m: int) -> int:
    return ((x + m - 1) // m) * m


def _painn_interaction_kernel(
    q_ref,        # (Ap, Fp)      f32   scalar features (resident)
    mu_ref,       # (Ap, 3*Fp)    f32   vector features, lane-dense slab (resident)
    wij_ref,      # (TP, 3*Fp)    f32   filter tile (streamed)
    dir_ref,      # (TP, 3)       f32   unit directions (streamed)
    idxi_ref,     # (1, TP)       i32   center-atom indices (streamed)
    idxj_ref,     # (TP, 1)       i32   neighbor indices (streamed)
    w1_ref,       # (Fp, Fp)      f32
    b1_ref,       # (1, Fp)       f32
    w2_ref,       # (Fp, 3*Fp)    f32
    b2_ref,       # (1, 3*Fp)     f32
    q_out_ref,    # (Ap, Fp)      f32
    mu_out_ref,   # (Ap, 3*Fp)    f32
    x_scr,        # (Ap, 3*Fp)    f32   atom-MLP output, resident scratch
    acc_scr,      # (Ap, 4*Fp)    f32   [dq | dmu] accumulator scratch
    *,
    feat: int,            # Fp (padded feature width, multiple of 128)
    onehot_dtype,         # dtype of the one-hot matmul operands (f32 default)
):
    Fp = feat
    Ap = q_ref.shape[0]
    TP = wij_ref.shape[0]
    k = pl.program_id(0)

    # ---- step 0: atom MLP Dense(F->F, silu); Dense(F->3F), accumulator init ----
    @pl.when(k == 0)
    def _init():
        q = q_ref[...]
        h = jnp.dot(q, w1_ref[...], preferred_element_type=jnp.float32) + b1_ref[...]
        h = h * jax.nn.sigmoid(h)                                   # SiLU
        x_scr[...] = (jnp.dot(h, w2_ref[...], preferred_element_type=jnp.float32)
                      + b2_ref[...])
        acc_scr[...] = jnp.zeros_like(acc_scr)

    # ---- one-hot gather / scatter matrices for this pair tile (MXU path) ------
    a_cols = jax.lax.broadcasted_iota(jnp.int32, (TP, Ap), 1)
    G = (idxj_ref[...] == a_cols).astype(onehot_dtype)              # (TP, Ap)
    a_rows = jax.lax.broadcasted_iota(jnp.int32, (Ap, TP), 0)
    S = (idxi_ref[...] == a_rows).astype(onehot_dtype)              # (Ap, TP)

    # ---- fused wide gathers over lane-dense (A, 3Fp) slabs ---------------------
    xj = jnp.dot(G, x_scr[...].astype(onehot_dtype),
                 preferred_element_type=jnp.float32)                # (TP, 3Fp)
    muj = jnp.dot(G, mu_ref[...].astype(onehot_dtype),
                  preferred_element_type=jnp.float32)               # (TP, 3Fp)

    xw = wij_ref[...] * xj                                          # (TP, 3Fp)
    dq = xw[:, :Fp]                                                 # lane-aligned splits
    dmuR = xw[:, Fp:2 * Fp]
    dmumu = xw[:, 2 * Fp:]

    # ---- stacked pair messages [dq | dmu_x | dmu_y | dmu_z] --------------------
    parts = [dq]
    for c in range(3):
        dir_c = dir_ref[:, c:c + 1]                                 # (TP, 1)
        parts.append(dmuR * dir_c + dmumu * muj[:, c * Fp:(c + 1) * Fp])
    stacked = jnp.concatenate(parts, axis=-1)                       # (TP, 4Fp)

    # single fused scatter_add onto center atoms
    acc_scr[...] += jnp.dot(S, stacked.astype(onehot_dtype),
                            preferred_element_type=jnp.float32)     # (Ap, 4Fp)

    # ---- last step: add the accumulated messages into q / mu -------------------
    @pl.when(k == pl.num_programs(0) - 1)
    def _finalize():
        acc = acc_scr[...]
        q_out_ref[...] = q_ref[...] + acc[:, :Fp]
        mu_out_ref[...] = mu_ref[...] + acc[:, Fp:]


def _vmem_bytes(Ap: int, Fp: int, TP: int) -> int:
    f = 4  # f32
    # pipeline blocks (conservatively assume double buffering everywhere)
    blocks = 2 * f * (
        Ap * Fp + Ap * 3 * Fp              # q, mu inputs
        + Ap * Fp + Ap * 3 * Fp            # q, mu outputs
        + TP * 3 * Fp + TP * 128           # Wij tile, dir tile (lane footprint)
        + 2 * TP                           # idx_i, idx_j tiles
        + Fp * Fp + Fp                     # W1, b1
        + Fp * 3 * Fp + 3 * Fp             # W2, b2
    )
    scratch = f * (Ap * 3 * Fp + Ap * 4 * Fp)
    live = f * (
        2 * TP * Ap                        # one-hot G and S
        + 3 * TP * 3 * Fp                  # xj, muj, xw
        + TP * 4 * Fp                      # stacked messages
        + Ap * 4 * Fp                      # accumulator update temp
    )
    return blocks + scratch + live


def painn_interaction(q, mu, Wij, dir_ij, idx_i, idx_j, n_atoms, params,
                      *, pair_tile=None, onehot_dtype=jnp.float32):
    """PaiNN interaction block.

    Args (schnetpack conventions):
      q:      (n_atoms, 1, F)   scalar features
      mu:     (n_atoms, 3, F)   vector features
      Wij:    (n_pairs, 1, 3F)  filters
      dir_ij: (n_pairs, 3)      unit direction vectors
      idx_i, idx_j: (n_pairs,)  int32 center / neighbor indices
      n_atoms: int
      params: dict with W1 (F,F), b1 (F,), W2 (F,3F), b2 (3F,)
      pair_tile: pairs per grid step (rounded up to 128); None = auto
      onehot_dtype: dtype of the one-hot matmul operands (bf16 halves VMEM for
        the (TP,A) one-hot tensors at a small precision cost; default f32)
    Returns:
      (q_new, mu_new) with the same shapes as (q, mu).
    """
    F = q.shape[-1]
    A = int(n_atoms)
    P = idx_i.shape[0]

    LANE = 128
    Fp = _round_up(F, LANE)                       # lane-aligned feature width
    Ap = _round_up(A, LANE)                       # MXU-friendly contraction dim
    if pair_tile is None:
        pair_tile = min(_round_up(P, LANE), 512)
    TP = _round_up(int(pair_tile), LANE)
    Pp = _round_up(P, TP)
    nP = Pp // TP
    assert Pp % TP == 0 and nP >= 1

    f32 = jnp.float32

    # ---- pad / repack inputs (all splits become lane-aligned) ------------------
    q2 = jnp.zeros((Ap, Fp), f32).at[:A, :F].set(q.reshape(A, F).astype(f32))
    # mu kept as (A, 3, F) -> lane-dense (Ap, 3*Fp) slab; no transpose needed.
    mu2 = (jnp.zeros((Ap, 3, Fp), f32)
           .at[:A, :, :F].set(mu.astype(f32))
           .reshape(Ap, 3 * Fp))
    # Wij: each F-wide chunk placed at lane offset c*Fp.
    wij2 = (jnp.zeros((Pp, 3, Fp), f32)
            .at[:P, :, :F].set(Wij.reshape(P, 3, F).astype(f32))
            .reshape(Pp, 3 * Fp))
    dir2 = jnp.zeros((Pp, 3), f32).at[:P].set(dir_ij.astype(f32))
    # Padded pairs use sentinel = Ap (matches no atom row -> zero one-hot row/col).
    idxi2 = jnp.full((1, Pp), Ap, jnp.int32).at[0, :P].set(idx_i.astype(jnp.int32))
    idxj2 = jnp.full((Pp, 1), Ap, jnp.int32).at[:P, 0].set(idx_j.astype(jnp.int32))

    w1 = jnp.zeros((Fp, Fp), f32).at[:F, :F].set(params["W1"].astype(f32))
    b1 = jnp.zeros((1, Fp), f32).at[0, :F].set(params["b1"].astype(f32))
    w2 = (jnp.zeros((Fp, 3, Fp), f32)
          .at[:F, :, :F].set(params["W2"].reshape(F, 3, F).astype(f32))
          .reshape(Fp, 3 * Fp))
    b2 = (jnp.zeros((1, 3, Fp), f32)
          .at[0, :, :F].set(params["b2"].reshape(3, F).astype(f32))
          .reshape(1, 3 * Fp))

    kernel = functools.partial(_painn_interaction_kernel,
                               feat=Fp, onehot_dtype=onehot_dtype)

    grid_spec = pltpu.PrefetchScalarGridSpec(
        num_scalar_prefetch=0,
        grid=(nP,),
        in_specs=[
            pl.BlockSpec((Ap, Fp),       lambda k: (0, 0)),   # q       (resident)
            pl.BlockSpec((Ap, 3 * Fp),   lambda k: (0, 0)),   # mu      (resident)
            pl.BlockSpec((TP, 3 * Fp),   lambda k: (k, 0)),   # Wij     (streamed)
            pl.BlockSpec((TP, 3),        lambda k: (k, 0)),   # dir     (streamed)
            pl.BlockSpec((1, TP),        lambda k: (0, k)),   # idx_i   (streamed)
            pl.BlockSpec((TP, 1),        lambda k: (k, 0)),   # idx_j   (streamed)
            pl.BlockSpec((Fp, Fp),       lambda k: (0, 0)),   # W1
            pl.BlockSpec((1, Fp),        lambda k: (0, 0)),   # b1
            pl.BlockSpec((Fp, 3 * Fp),   lambda k: (0, 0)),   # W2
            pl.BlockSpec((1, 3 * Fp),    lambda k: (0, 0)),   # b2
        ],
        out_specs=(
            pl.BlockSpec((Ap, Fp),       lambda k: (0, 0)),   # q_out
            pl.BlockSpec((Ap, 3 * Fp),   lambda k: (0, 0)),   # mu_out
        ),
        scratch_shapes=[
            pltpu.VMEM((Ap, 3 * Fp), jnp.float32),            # atom-MLP output x
            pltpu.VMEM((Ap, 4 * Fp), jnp.float32),            # [dq | dmu] accumulator
        ],
    )

    vmem_limit = int(min(max(int(1.5 * _vmem_bytes(Ap, Fp, TP)), 8 * 1024 * 1024),
                         100 * 1024 * 1024))

    q_new, mu_new = pl.pallas_call(
        kernel,
        out_shape=(
            jax.ShapeDtypeStruct((Ap, Fp), jnp.float32),
            jax.ShapeDtypeStruct((Ap, 3 * Fp), jnp.float32),
        ),
        grid_spec=grid_spec,
        input_output_aliases={0: 0, 1: 1},        # q -> q_out, mu -> mu_out (in-place add)
        compiler_params=pltpu.CompilerParams(
            dimension_semantics=("arbitrary",),   # pair axis carries the accumulator
            vmem_limit_bytes=vmem_limit,
        ),
    )(q2, mu2, wij2, dir2, idxi2, idxj2, w1, b1, w2, b2)

    q_out = q_new[:A, :F].reshape(A, 1, F).astype(q.dtype)
    mu_out = mu_new.reshape(Ap, 3, Fp)[:A, :, :F].astype(mu.dtype)
    return q_out, mu_out


def _reference(q, mu, Wij, dir_ij, idx_i, idx_j, n_atoms, params):
    """Pure-JAX reference mirroring the PyTorch forward."""
    F = q.shape[-1]
    h = q @ params["W1"] + params["b1"]
    h = jax.nn.silu(h)
    x = h @ params["W2"] + params["b2"]                           # (A, 1, 3F)
    xj = x[idx_j]                                                 # (P, 1, 3F)
    xw = Wij * xj
    dq, dmuR, dmumu = jnp.split(xw, 3, axis=-1)
    dq = jnp.zeros((n_atoms, 1, F)).at[idx_i].add(dq)
    muj = mu[idx_j]                                               # (P, 3, F)
    dmu = dmuR * dir_ij[..., None] + dmumu * muj                  # (P, 3, F)
    dmu = jnp.zeros((n_atoms, 3, F)).at[idx_i].add(dmu)
    return q + dq, mu + dmu


if __name__ == "__main__":
    key = jax.random.PRNGKey(0)
    n_atoms, n_pairs, F = 10, 300, 32

    ks = jax.random.split(key, 10)
    q = jax.random.normal(ks[0], (n_atoms, 1, F), jnp.float32)
    mu = jax.random.normal(ks[1], (n_atoms, 3, F), jnp.float32)
    Wij = jax.random.normal(ks[2], (n_pairs, 1, 3 * F), jnp.float32)
    dvec = jax.random.normal(ks[3], (n_pairs, 3), jnp.float32)
    dir_ij = dvec / jnp.linalg.norm(dvec, axis=-1, keepdims=True)
    idx_i = jax.random.randint(ks[4], (n_pairs,), 0, n_atoms, jnp.int32)
    idx_j = jax.random.randint(ks[5], (n_pairs,), 0, n_atoms, jnp.int32)

    # Deterministic synthetic parameters (snn.Dense(F,F) then snn.Dense(F,3F)).
    params = {
        "W1": jax.random.normal(ks[6], (F, F), jnp.float32) / jnp.sqrt(F),
        "b1": jax.random.normal(ks[7], (F,), jnp.float32) * 0.1,
        "W2": jax.random.normal(ks[8], (F, 3 * F), jnp.float32) / jnp.sqrt(F),
        "b2": jax.random.normal(ks[9], (3 * F,), jnp.float32) * 0.1,
    }

    # pair_tile=128 -> 3 grid steps: exercises the streamed-pair accumulator path.
    q_out, mu_out = painn_interaction(q, mu, Wij, dir_ij, idx_i, idx_j,
                                      n_atoms, params, pair_tile=128)
    jax.block_until_ready((q_out, mu_out))

    q_ref, mu_ref = _reference(q, mu, Wij, dir_ij, idx_i, idx_j, n_atoms, params)
    assert q_out.shape == q.shape and mu_out.shape == mu.shape
    assert jnp.allclose(q_out, q_ref, atol=1e-3, rtol=1e-3)
    assert jnp.allclose(mu_out, mu_ref, atol=1e-3, rtol=1e-3)

    print("KERNEL_OK")
</pallas_src>

<mosaic_0001>
module attributes {stable_mosaic.version = 11 : i64} {
  func.func @_painn_interaction_kernel(%arg0: i32, %arg1: memref<128x128xf32, #tpu.memory_space<vmem>>, %arg2: memref<128x384xf32, #tpu.memory_space<vmem>>, %arg3: memref<128x384xf32, #tpu.memory_space<vmem>>, %arg4: memref<128x3xf32, #tpu.memory_space<vmem>>, %arg5: memref<1x128xi32, #tpu.memory_space<vmem>>, %arg6: memref<128x1xi32, #tpu.memory_space<vmem>>, %arg7: memref<128x128xf32, #tpu.memory_space<vmem>>, %arg8: memref<1x128xf32, #tpu.memory_space<vmem>>, %arg9: memref<128x384xf32, #tpu.memory_space<vmem>>, %arg10: memref<1x384xf32, #tpu.memory_space<vmem>>, %arg11: memref<128x128xf32, #tpu.memory_space<vmem>>, %arg12: memref<128x384xf32, #tpu.memory_space<vmem>>, %arg13: memref<128x384xf32, #tpu.memory_space<vmem>>, %arg14: memref<128x512xf32, #tpu.memory_space<vmem>>) attributes {dimension_semantics = [#tpu.dimension_semantics<arbitrary>], iteration_bounds = array<i64: 3>, scalar_prefetch = 0 : i64, scratch_operands = 2 : i64, tpu.core_type = #tpu.core_type<tc>, window_params = [{pipeline_mode = #tpu.pipeline_mode<synchronous>, transform_indices = @transform_0, window_bounds = array<i64: 128, 128>}, {pipeline_mode = #tpu.pipeline_mode<synchronous>, transform_indices = @transform_1, window_bounds = array<i64: 128, 384>}, {transform_indices = @transform_2, window_bounds = array<i64: 128, 384>}, {transform_indices = @transform_3, window_bounds = array<i64: 128, 3>}, {transform_indices = @transform_4, window_bounds = array<i64: 1, 128>}, {transform_indices = @transform_5, window_bounds = array<i64: 128, 1>}, {pipeline_mode = #tpu.pipeline_mode<synchronous>, transform_indices = @transform_6, window_bounds = array<i64: 128, 128>}, {pipeline_mode = #tpu.pipeline_mode<synchronous>, transform_indices = @transform_7, window_bounds = array<i64: 1, 128>}, {pipeline_mode = #tpu.pipeline_mode<synchronous>, transform_indices = @transform_8, window_bounds = array<i64: 128, 384>}, {pipeline_mode = #tpu.pipeline_mode<synchronous>, transform_indices = @transform_9, window_bounds = array<i64: 1, 384>}, {pipeline_mode = #tpu.pipeline_mode<synchronous>, transform_indices = @transform_10, window_bounds = array<i64: 128, 128>}, {pipeline_mode = #tpu.pipeline_mode<synchronous>, transform_indices = @transform_11, window_bounds = array<i64: 128, 384>}]} {
    %c0_i32 = arith.constant 0 : i32
    %0 = arith.cmpi eq, %arg0, %c0_i32 : i32
    %1 = arith.extui %0 : i1 to i32
    %c0_i32_0 = arith.constant 0 : i32
    %2 = arith.cmpi ne, %1, %c0_i32_0 : i32
    scf.if %2 {
      %c0_21 = arith.constant 0 : index
      %c0_22 = arith.constant 0 : index
      %50 = vector.load %arg1[%c0_21, %c0_22] : memref<128x128xf32, #tpu.memory_space<vmem>>, vector<128x128xf32>
      %c0_23 = arith.constant 0 : index
      %c0_24 = arith.constant 0 : index
      %51 = vector.load %arg7[%c0_23, %c0_24] : memref<128x128xf32, #tpu.memory_space<vmem>>, vector<128x128xf32>
      %cst_25 = arith.constant dense<0.000000e+00> : vector<128x128xf32>
      %52 = tpu.matmul %50, %51, %cst_25 {dimension_numbers = #tpu.dot_dimension_numbers<[1], [0], [0], [1], [0, 0, 1, 1], [], []>} : vector<128x128xf32>, vector<128x128xf32>, vector<128x128xf32> -> vector<128x128xf32>
      %c0_26 = arith.constant 0 : index
      %c0_27 = arith.constant 0 : index
      %53 = vector.load %arg8[%c0_26, %c0_27] : memref<1x128xf32, #tpu.memory_space<vmem>>, vector<1x128xf32>
      %54 = vector.broadcast %53 : vector<1x128xf32> to vector<128x128xf32>
      %55 = arith.addf %52, %54 : vector<128x128xf32>
      %56 = arith.negf %55 : vector<128x128xf32>
      %57 = math.exp %56 : vector<128x128xf32>
      %cst_28 = arith.constant 1.000000e+00 : f32
      %58 = vector.broadcast %cst_28 : f32 to vector<128x128xf32>
      %59 = arith.addf %58, %57 : vector<128x128xf32>
      %60 = arith.divf %58, %59 : vector<128x128xf32>
      %61 = arith.mulf %55, %60 : vector<128x128xf32>
      %c0_29 = arith.constant 0 : index
      %c0_30 = arith.constant 0 : index
      %62 = vector.load %arg9[%c0_29, %c0_30] : memref<128x384xf32, #tpu.memory_space<vmem>>, vector<128x384xf32>
      %cst_31 = arith.constant dense<0.000000e+00> : vector<128x384xf32>
      %63 = tpu.matmul %61, %62, %cst_31 {dimension_numbers = #tpu.dot_dimension_numbers<[1], [0], [0], [1], [0, 0, 1, 1], [], []>} : vector<128x128xf32>, vector<128x384xf32>, vector<128x384xf32> -> vector<128x384xf32>
      %c0_32 = arith.constant 0 : index
      %c0_33 = arith.constant 0 : index
      %64 = vector.load %arg10[%c0_32, %c0_33] : memref<1x384xf32, #tpu.memory_space<vmem>>, vector<1x384xf32>
      %65 = vector.broadcast %64 : vector<1x384xf32> to vector<128x384xf32>
      %66 = arith.addf %63, %65 : vector<128x384xf32>
      %c0_34 = arith.constant 0 : index
      %c0_35 = arith.constant 0 : index
      %67 = vector.load %arg13[%c0_34, %c0_35] : memref<128x384xf32, #tpu.memory_space<vmem>>, vector<128x384xf32>
      tpu.vector_store %arg13[%c0_34, %c0_35], %66 {strides = array<i32>} : memref<128x384xf32, #tpu.memory_space<vmem>>, vector<128x384xf32>,
      %cst_36 = arith.constant 0.000000e+00 : f32
      %68 = vector.broadcast %cst_36 : f32 to vector<128x512xf32>
      %c0_37 = arith.constant 0 : index
      %c0_38 = arith.constant 0 : index
      %69 = vector.load %arg14[%c0_37, %c0_38] : memref<128x512xf32, #tpu.memory_space<vmem>>, vector<128x512xf32>
      tpu.vector_store %arg14[%c0_37, %c0_38], %68 {strides = array<i32>} : memref<128x512xf32, #tpu.memory_space<vmem>>, vector<128x512xf32>,
    } else {
    }
    %3 = tpu.iota {dimensions = array<i32: 1>} : vector<128x128xi32>
    %c0 = arith.constant 0 : index
    %c0_1 = arith.constant 0 : index
    %4 = vector.load %arg6[%c0, %c0_1] : memref<128x1xi32, #tpu.memory_space<vmem>>, vector<128x1xi32>
    %5 = vector.broadcast %4 : vector<128x1xi32> to vector<128x128xi32>
    %6 = arith.cmpi eq, %5, %3 : vector<128x128xi32>
    %7 = arith.extui %6 : vector<128x128xi1> to vector<128x128xi32>
    %8 = arith.sitofp %7 : vector<128x128xi32> to vector<128x128xf32>
    %9 = tpu.iota {dimensions = array<i32: 0>} : vector<128x128xi32>
    %c0_2 = arith.constant 0 : index
    %c0_3 = arith.constant 0 : index
    %10 = vector.load %arg5[%c0_2, %c0_3] : memref<1x128xi32, #tpu.memory_space<vmem>>, vector<1x128xi32>
    %11 = vector.broadcast %10 : vector<1x128xi32> to vector<128x128xi32>
    %12 = arith.cmpi eq, %11, %9 : vector<128x128xi32>
    %13 = arith.extui %12 : vector<128x128xi1> to vector<128x128xi32>
    %14 = arith.sitofp %13 : vector<128x128xi32> to vector<128x128xf32>
    %c0_4 = arith.constant 0 : index
    %c0_5 = arith.constant 0 : index
    %15 = vector.load %arg13[%c0_4, %c0_5] : memref<128x384xf32, #tpu.memory_space<vmem>>, vector<128x384xf32>
    %cst = arith.constant dense<0.000000e+00> : vector<128x384xf32>
    %16 = tpu.matmul %8, %15, %cst {dimension_numbers = #tpu.dot_dimension_numbers<[1], [0], [0], [1], [0, 0, 1, 1], [], []>} : vector<128x128xf32>, vector<128x384xf32>, vector<128x384xf32> -> vector<128x384xf32>
    %c0_6 = arith.constant 0 : index
    %c0_7 = arith.constant 0 : index
    %17 = vector.load %arg2[%c0_6, %c0_7] : memref<128x384xf32, #tpu.memory_space<vmem>>, vector<128x384xf32>
    %cst_8 = arith.constant dense<0.000000e+00> : vector<128x384xf32>
    %18 = tpu.matmul %8, %17, %cst_8 {dimension_numbers = #tpu.dot_dimension_numbers<[1], [0], [0], [1], [0, 0, 1, 1], [], []>} : vector<128x128xf32>, vector<128x384xf32>, vector<128x384xf32> -> vector<128x384xf32>
    %c0_9 = arith.constant 0 : index
    %c0_10 = arith.constant 0 : index
    %19 = vector.load %arg3[%c0_9, %c0_10] : memref<128x384xf32, #tpu.memory_space<vmem>>, vector<128x384xf32>
    %20 = arith.mulf %19, %16 : vector<128x384xf32>
    %21 = vector.extract_strided_slice %20 {offsets = [0, 0], sizes = [128, 128], strides = [1, 1]} : vector<128x384xf32> to vector<128x128xf32>
    %22 = vector.extract_strided_slice %20 {offsets = [0, 128], sizes = [128, 128], strides = [1, 1]} : vector<128x384xf32> to vector<128x128xf32>
    %23 = vector.extract_strided_slice %20 {offsets = [0, 256], sizes = [128, 128], strides = [1, 1]} : vector<128x384xf32> to vector<128x128xf32>
    %c0_11 = arith.constant 0 : index
    %c0_12 = arith.constant 0 : index
    %24 = vector.load %arg4[%c0_11, %c0_12] : memref<128x3xf32, #tpu.memory_space<vmem>>, vector<128x1xf32>
    %25 = vector.broadcast %24 : vector<128x1xf32> to vector<128x128xf32>
    %26 = arith.mulf %22, %25 : vector<128x128xf32>
    %27 = vector.extract_strided_slice %18 {offsets = [0, 0], sizes = [128, 128], strides = [1, 1]} : vector<128x384xf32> to vector<128x128xf32>
    %28 = arith.mulf %23, %27 : vector<128x128xf32>
    %29 = arith.addf %26, %28 : vector<128x128xf32>
    %c0_13 = arith.constant 0 : index
    %c1 = arith.constant 1 : index
    %30 = vector.load %arg4[%c0_13, %c1] : memref<128x3xf32, #tpu.memory_space<vmem>>, vector<128x1xf32>
    %31 = vector.broadcast %30 : vector<128x1xf32> to vector<128x128xf32>
    %32 = arith.mulf %22, %31 : vector<128x128xf32>
    %33 = vector.extract_strided_slice %18 {offsets = [0, 128], sizes = [128, 128], strides = [1, 1]} : vector<128x384xf32> to vector<128x128xf32>
    %34 = arith.mulf %23, %33 : vector<128x128xf32>
    %35 = arith.addf %32, %34 : vector<128x128xf32>
    %c0_14 = arith.constant 0 : index
    %c2 = arith.constant 2 : index
    %36 = vector.load %arg4[%c0_14, %c2] : memref<128x3xf32, #tpu.memory_space<vmem>>, vector<128x1xf32>
    %37 = vector.broadcast %36 : vector<128x1xf32> to vector<128x128xf32>
    %38 = arith.mulf %22, %37 : vector<128x128xf32>
    %39 = vector.extract_strided_slice %18 {offsets = [0, 256], sizes = [128, 128], strides = [1, 1]} : vector<128x384xf32> to vector<128x128xf32>
    %40 = arith.mulf %23, %39 : vector<128x128xf32>
    %41 = arith.addf %38, %40 : vector<128x128xf32>
    %42 = tpu.concatenate %21, %29, %35, %41 in 1 : vector<128x128xf32>, vector<128x128xf32>, vector<128x128xf32>, vector<128x128xf32> -> vector<128x512xf32>
    %c0_15 = arith.constant 0 : index
    %c0_16 = arith.constant 0 : index
    %43 = vector.load %arg14[%c0_15, %c0_16] : memref<128x512xf32, #tpu.memory_space<vmem>>, vector<128x512xf32>
    %cst_17 = arith.constant dense<0.000000e+00> : vector<128x512xf32>
    %44 = tpu.matmul %14, %42, %cst_17 {dimension_numbers = #tpu.dot_dimension_numbers<[1], [0], [0], [1], [0, 0, 1, 1], [], []>} : vector<128x128xf32>, vector<128x512xf32>, vector<128x512xf32> -> vector<128x512xf32>
    %45 = arith.addf %43, %44 : vector<128x512xf32>
    %c0_18 = arith.constant 0 : index
    %c0_19 = arith.constant 0 : index
    %46 = vector.load %arg14[%c0_18, %c0_19] : memref<128x512xf32, #tpu.memory_space<vmem>>, vector<128x512xf32>
    tpu.vector_store %arg14[%c0_18, %c0_19], %45 {strides = array<i32>} : memref<128x512xf32, #tpu.memory_space<vmem>>, vector<128x512xf32>,
    %c2_i32 = arith.constant 2 : i32
    %47 = arith.cmpi eq, %arg0, %c2_i32 : i32
    %48 = arith.extui %47 : i1 to i32
    %c0_i32_20 = arith.constant 0 : i32
    %49 = arith.cmpi ne, %48, %c0_i32_20 : i32
    scf.if %49 {
      %c0_21 = arith.constant 0 : index
      %c0_22 = arith.constant 0 : index
      %50 = vector.load %arg14[%c0_21, %c0_22] : memref<128x512xf32, #tpu.memory_space<vmem>>, vector<128x512xf32>
      %c0_23 = arith.constant 0 : index
      %c0_24 = arith.constant 0 : index
      %51 = vector.load %arg1[%c0_23, %c0_24] : memref<128x128xf32, #tpu.memory_space<vmem>>, vector<128x128xf32>
      %52 = vector.extract_strided_slice %50 {offsets = [0, 0], sizes = [128, 128], strides = [1, 1]} : vector<128x512xf32> to vector<128x128xf32>
      %53 = arith.addf %51, %52 : vector<128x128xf32>
      %c0_25 = arith.constant 0 : index
      %c0_26 = arith.constant 0 : index
      %54 = vector.load %arg11[%c0_25, %c0_26] : memref<128x128xf32, #tpu.memory_space<vmem>>, vector<128x128xf32>
      tpu.vector_store %arg11[%c0_25, %c0_26], %53 {strides = array<i32>} : memref<128x128xf32, #tpu.memory_space<vmem>>, vector<128x128xf32>,
      %c0_27 = arith.constant 0 : index
      %c0_28 = arith.constant 0 : index
      %55 = vector.load %arg2[%c0_27, %c0_28] : memref<128x384xf32, #tpu.memory_space<vmem>>, vector<128x384xf32>
      %56 = vector.extract_strided_slice %50 {offsets = [0, 128], sizes = [128, 384], strides = [1, 1]} : vector<128x512xf32> to vector<128x384xf32>
      %57 = arith.addf %55, %56 : vector<128x384xf32>
      %c0_29 = arith.constant 0 : index
      %c0_30 = arith.constant 0 : index
      %58 = vector.load %arg12[%c0_29, %c0_30] : memref<128x384xf32, #tpu.memory_space<vmem>>, vector<128x384xf32>
      tpu.vector_store %arg12[%c0_29, %c0_30], %57 {strides = array<i32>} : memref<128x384xf32, #tpu.memory_space<vmem>>, vector<128x384xf32>,
    } else {
    }
    return
  }
  func.func @transform_0(%arg0: i32) -> (i32, i32) {
    %c0_i32 = arith.constant 0 : i32
    %c0_i32_0 = arith.constant 0 : i32
    %c0_i32_1 = arith.constant 0 : i32
    return %c0_i32, %c0_i32_0 : i32, i32
  }
  func.func @transform_1(%arg0: i32) -> (i32, i32) {
    %c0_i32 = arith.constant 0 : i32
    %c0_i32_0 = arith.constant 0 : i32
    %c0_i32_1 = arith.constant 0 : i32
    return %c0_i32, %c0_i32_0 : i32, i32
  }
  func.func @transform_2(%arg0: i32) -> (i32, i32) {
    %c0_i32 = arith.constant 0 : i32
    %c0_i32_0 = arith.constant 0 : i32
    return %arg0, %c0_i32 : i32, i32
  }
  func.func @transform_3(%arg0: i32) -> (i32, i32) {
    %c0_i32 = arith.constant 0 : i32
    %c0_i32_0 = arith.constant 0 : i32
    return %arg0, %c0_i32 : i32, i32
  }
  func.func @transform_4(%arg0: i32) -> (i32, i32) {
    %c0_i32 = arith.constant 0 : i32
    %c0_i32_0 = arith.constant 0 : i32
    return %c0_i32, %arg0 : i32, i32
  }
  func.func @transform_5(%arg0: i32) -> (i32, i32) {
    %c0_i32 = arith.constant 0 : i32
    %c0_i32_0 = arith.constant 0 : i32
    return %arg0, %c0_i32 : i32, i32
  }
  func.func @transform_6(%arg0: i32) -> (i32, i32) {
    %c0_i32 = arith.constant 0 : i32
    %c0_i32_0 = arith.constant 0 : i32
    %c0_i32_1 = arith.constant 0 : i32
    return %c0_i32, %c0_i32_0 : i32, i32
  }
  func.func @transform_7(%arg0: i32) -> (i32, i32) {
    %c0_i32 = arith.constant 0 : i32
    %c0_i32_0 = arith.constant 0 : i32
    %c0_i32_1 = arith.constant 0 : i32
    return %c0_i32, %c0_i32_0 : i32, i32
  }
  func.func @transform_8(%arg0: i32) -> (i32, i32) {
    %c0_i32 = arith.constant 0 : i32
    %c0_i32_0 = arith.constant 0 : i32
    %c0_i32_1 = arith.constant 0 : i32
    return %c0_i32, %c0_i32_0 : i32, i32
  }
  func.func @transform_9(%arg0: i32) -> (i32, i32) {
    %c0_i32 = arith.constant 0 : i32
    %c0_i32_0 = arith.constant 0 : i32
    %c0_i32_1 = arith.constant 0 : i32
    return %c0_i32, %c0_i32_0 : i32, i32
  }
  func.func @transform_10(%arg0: i32) -> (i32, i32) {
    %c0_i32 = arith.constant 0 : i32
    %c0_i32_0 = arith.constant 0 : i32
    %c0_i32_1 = arith.constant 0 : i32
    return %c0_i32, %c0_i32_0 : i32, i32
  }
  func.func @transform_11(%arg0: i32) -> (i32, i32) {
    %c0_i32 = arith.constant 0 : i32
    %c0_i32_0 = arith.constant 0 : i32
    %c0_i32_1 = arith.constant 0 : i32
    return %c0_i32, %c0_i32_0 : i32, i32
  }
}

</mosaic_0001>

<llo_original>
// kernel: tpu_custom_call.1
$region0: #{tpu_custom_call.1}
  #allocation0 [shape = 'u32[]', space=smem, size = 0x4, offset = 0x4, fixed_abs, tag = 'smem constant byte address 0x4 - core index']
  #allocation1 [shape = 'u32[144,128]{1,0:T(1,128)}', space=vmem, size = 0x12000, scoped, tag = 'internal scratch']
  #allocation2 [shape = 'f32[128,384]{1,0:T(8,128)}', space=vmem, size = 0x30000, scoped, tag = 'scratch operand']
  #allocation3 [shape = 'f32[128,512]{1,0:T(8,128)}', space=vmem, size = 0x40000, scoped, tag = 'scratch operand']
  %s0 = inlined_call_operand.hbm [shape: f32[128,128], index: 0, kind: input, shape index: {}, may-alias: {0,10}]
  %s1 = inlined_call_operand.hbm [shape: f32[128,384], index: 1, kind: input, shape index: {}, may-alias: {1,11}]
  %s2 = inlined_call_operand.vmem [shape: f32[384,384], index: 2, kind: input, shape index: {}]
  %s3 = inlined_call_operand.vmem [shape: f32[384,3], index: 3, kind: input, shape index: {}]
  %s4 = inlined_call_operand.vmem [shape: s32[1,384], index: 4, kind: input, shape index: {}]
  %s5 = inlined_call_operand.vmem [shape: s32[384,1], index: 5, kind: input, shape index: {}]
  %s6 = inlined_call_operand.vmem [shape: f32[128,128], index: 6, kind: input, shape index: {}]
  %s7 = inlined_call_operand.vmem [shape: f32[1,128], index: 7, kind: input, shape index: {}]
  %s8 = inlined_call_operand.vmem [shape: f32[128,384], index: 8, kind: input, shape index: {}]
  %s9 = inlined_call_operand.vmem [shape: f32[1,384], index: 9, kind: input, shape index: {}]
  %s10 = inlined_call_operand.hbm [shape: f32[128,128], index: 10, kind: output, shape index: {0}, may-alias: {0,10}]
  %s11 = inlined_call_operand.hbm [shape: f32[128,384], index: 11, kind: output, shape index: {1}, may-alias: {1,11}]
  %12 = xla_tuple %s10, %s11
  %s13 = sld [smem:[#allocation0]]
  $region97: #{tpu_custom_call.1} parent=0
    _
  %s15 = ssub.s32 1, %s13
  %s16 = scalar_select 0, %s15, %s13
  $region1: #{tpu_custom_call.1} parent=0
    #allocation4 [shape = 'u8[65536]{0}', space=vmem, size = 0x10000, scoped, tag = 'input window, operand 0, single buffered']
    #allocation5 [shape = 's32[2]{0}', space=sflag, size = 0x8, scoped, tag = 'scoped memory for tpu_custom_call.1']
    #allocation6 [shape = 's32[2]{0}', space=sflag, size = 0x8, scoped, tag = 'scoped memory for tpu_custom_call.1']
    #allocation7 [shape = 'u8[196608]{0}', space=vmem, size = 0x30000, scoped, tag = 'input window, operand 1, single buffered']
    #allocation8 [shape = 's32[1]{0}', space=sflag, size = 0x4, scoped, tag = 'scoped memory for tpu_custom_call.1']
    #allocation9 [shape = 'u8[65536]{0}', space=vmem, size = 0x10000, scoped, tag = 'output window, operand 0, single buffered']
    #allocation10 [shape = 'u8[196608]{0}', space=vmem, size = 0x30000, scoped, tag = 'output window, operand 1, single buffered']
    #allocation11 [shape = 's32[1]{0}', space=sflag, size = 0x4, scoped, tag = 'scoped memory for tpu_custom_call.1']
    %17 = vsyncpa [#allocation5], 0
    %18 = vsyncpa [#allocation8], 0
    %19 = vsyncpa [#allocation6], 0
    %20 = vsyncpa [#allocation11], 0
    loop: start=0, step=1, limit=5
    $region2: #{tpu_custom_call.1} parent=1 // loop_pre_header
      _
    $region3: #{tpu_custom_call.1} parent=1 // loop_header
      %s22 = sphi 0, %s26
      %p23 = scmp.ge.s32.totalorder %s22, 5
      %s30 = sphi 0, %s30
      %s32 = sphi 0, %s30
      %s33 = sphi 0, %s32
      %s47 = sphi 0, %s33
      %s51 = sphi 0, %s51
      %s53 = sphi 0, %s51
      %s54 = sphi 0, %s53
      %s68 = sphi 0, %s54
      %s74 = sphi 0, %s76
      %s77 = sphi 0, %s74
      %s78 = sphi 0, %s77
      %s94 = sphi 0, %s78
      %s100 = sphi 0, %s102
      %s103 = sphi 0, %s100
      %s104 = sphi 0, %s103
      %s120 = sphi 0, %s104
      %s126 = sphi 0, %s128
      %s129 = sphi 0, %s126
      %s130 = sphi 0, %s129
      %s146 = sphi 0, %s130
      %s152 = sphi 0, %s154
      %s155 = sphi 0, %s152
      %s156 = sphi 0, %s155
      %s172 = sphi 0, %s156
      %s176 = sphi 0, %s176
      %s178 = sphi 0, %s176
      %s179 = sphi 0, %s178
      %s193 = sphi 0, %s179
      %s197 = sphi 0, %s197
      %s199 = sphi 0, %s197
      %s200 = sphi 0, %s199
      %s214 = sphi 0, %s200
      %s218 = sphi 0, %s218
      %s220 = sphi 0, %s218
      %s221 = sphi 0, %s220
      %s235 = sphi 0, %s221
      %s239 = sphi 0, %s239
      %s241 = sphi 0, %s239
      %s242 = sphi 0, %s241
      %s256 = sphi 0, %s242
      %s260 = sphi 0, %s260
      %s262 = sphi 0, %s260
      %s263 = sphi 0, %s262
      %s277 = sphi 0, %s263
      %s281 = sphi 0, %s281
      %s283 = sphi 0, %s281
      %s284 = sphi 0, %s283
      %s298 = sphi 0, %s284
    $region4: #{tpu_custom_call.1} parent=1 // loop_header_branch
      %25 = sbr.rel (%p23) target = $region8
    $region5: #{tpu_custom_call.1} parent=1 // loop_body
      %s27 = ssub.s32 %s22, 1
      %s28 = ssub.s32 %s22, 2
      %s29 = sadd.s32 %s22, 1
      %s31 = sadd.s32 %s30, 1
      %p34 = scmp.eq.s32.totalorder %s22, 2
      %p35 = scmp.ne.s32.totalorder %s30, %s32
      %p36 = scmp.eq.s32.totalorder %s22, 0
      %p37 = por %p35, %p36
      %p38 = scmp.ne.s32.totalorder %s30, %s32
      %p39 = scmp.eq.s32.totalorder %s27, 2
      %p40 = por %p38, %p39
      %p41 = scmp.ne.s32.totalorder %s32, %s33
      %p42 = scmp.eq.s32.totalorder %s27, 0
      %p43 = por %p41, %p42
      %p44 = scmp.ne.s32.totalorder %s32, %s33
      %p45 = scmp.eq.s32.totalorder %s28, 2
      %p46 = por %p44, %p45
      %p48 = scmp.ne.s32.totalorder %s33, %s47
      %p49 = scmp.eq.s32.totalorder %s28, 0
      %p50 = por %p48, %p49
      %s52 = sadd.s32 %s51, 1
      %p55 = scmp.eq.s32.totalorder %s22, 2
      %p56 = scmp.ne.s32.totalorder %s51, %s53
      %p57 = scmp.eq.s32.totalorder %s22, 0
      %p58 = por %p56, %p57
      %p59 = scmp.ne.s32.totalorder %s51, %s53
      %p60 = scmp.eq.s32.totalorder %s27, 2
      %p61 = por %p59, %p60
      %p62 = scmp.ne.s32.totalorder %s53, %s54
      %p63 = scmp.eq.s32.totalorder %s27, 0
      %p64 = por %p62, %p63
      %p65 = scmp.ne.s32.totalorder %s53, %s54
      %p66 = scmp.eq.s32.totalorder %s28, 2
      %p67 = por %p65, %p66
      %p69 = scmp.ne.s32.totalorder %s54, %s68
      %p70 = scmp.eq.s32.totalorder %s28, 0
      %p71 = por %p69, %p70
      %s72 = ssub.s32 %s22, %s29
      %p73 = scmp.eq.s32.totalorder %s72, 0
      %s75 = sadd.s32 %s74, 1
      %s76 = scalar_select %p73, %s74, %s75
      %p79 = pneg %p73
      %p80 = scmp.eq.s32.totalorder %s22, 2
      %p81 = por %p79, %p80
      %p82 = scmp.ne.s32.totalorder %s74, %s77
      %p83 = scmp.eq.s32.totalorder %s22, 0
      %p84 = por %p82, %p83
      %p85 = scmp.ne.s32.totalorder %s74, %s77
      %p86 = scmp.eq.s32.totalorder %s27, 2
      %p87 = por %p85, %p86
      %p88 = scmp.ne.s32.totalorder %s77, %s78
      %p89 = scmp.eq.s32.totalorder %s27, 0
      %p90 = por %p88, %p89
      %p91 = scmp.ne.s32.totalorder %s77, %s78
      %p92 = scmp.eq.s32.totalorder %s28, 2
      %p93 = por %p91, %p92
      %p95 = scmp.ne.s32.totalorder %s78, %s94
      %p96 = scmp.eq.s32.totalorder %s28, 0
      %p97 = por %p95, %p96
      %s98 = ssub.s32 %s22, %s29
      %p99 = scmp.eq.s32.totalorder %s98, 0
      %s101 = sadd.s32 %s100, 1
      %s102 = scalar_select %p99, %s100, %s101
      %p105 = pneg %p99
      %p106 = scmp.eq.s32.totalorder %s22, 2
      %p107 = por %p105, %p106
      %p108 = scmp.ne.s32.totalorder %s100, %s103
      %p109 = scmp.eq.s32.totalorder %s22, 0
      %p110 = por %p108, %p109
      %p111 = scmp.ne.s32.totalorder %s100, %s103
      %p112 = scmp.eq.s32.totalorder %s27, 2
      %p113 = por %p111, %p112
      %p114 = scmp.ne.s32.totalorder %s103, %s104
      %p115 = scmp.eq.s32.totalorder %s27, 0
      %p116 = por %p114, %p115
      %p117 = scmp.ne.s32.totalorder %s103, %s104
      %p118 = scmp.eq.s32.totalorder %s28, 2
      %p119 = por %p117, %p118
      %p121 = scmp.ne.s32.totalorder %s104, %s120
      %p122 = scmp.eq.s32.totalorder %s28, 0
      %p123 = por %p121, %p122
      %s124 = ssub.s32 %s22, %s29
      %p125 = scmp.eq.s32.totalorder %s124, 0
      %s127 = sadd.s32 %s126, 1
      %s128 = scalar_select %p125, %s126, %s127
      %p131 = pneg %p125
      %p132 = scmp.eq.s32.totalorder %s22, 2
      %p133 = por %p131, %p132
      %p134 = scmp.ne.s32.totalorder %s126, %s129
      %p135 = scmp.eq.s32.totalorder %s22, 0
      %p136 = por %p134, %p135
      %p137 = scmp.ne.s32.totalorder %s126, %s129
      %p138 = scmp.eq.s32.totalorder %s27, 2
      %p139 = por %p137, %p138
      %p140 = scmp.ne.s32.totalorder %s129, %s130
      %p141 = scmp.eq.s32.totalorder %s27, 0
      %p142 = por %p140, %p141
      %p143 = scmp.ne.s32.totalorder %s129, %s130
      %p144 = scmp.eq.s32.totalorder %s28, 2
      %p145 = por %p143, %p144
      %p147 = scmp.ne.s32.totalorder %s130, %s146
      %p148 = scmp.eq.s32.totalorder %s28, 0
      %p149 = por %p147, %p148
      %s150 = ssub.s32 %s22, %s29
      %p151 = scmp.eq.s32.totalorder %s150, 0
      %s153 = sadd.s32 %s152, 1
      %s154 = scalar_select %p151, %s152, %s153
      %p157 = pneg %p151
      %p158 = scmp.eq.s32.totalorder %s22, 2
      %p159 = por %p157, %p158
      %p160 = scmp.ne.s32.totalorder %s152, %s155
      %p161 = scmp.eq.s32.totalorder %s22, 0
      %p162 = por %p160, %p161
      %p163 = scmp.ne.s32.totalorder %s152, %s155
      %p164 = scmp.eq.s32.totalorder %s27, 2
      %p165 = por %p163, %p164
      %p166 = scmp.ne.s32.totalorder %s155, %s156
      %p167 = scmp.eq.s32.totalorder %s27, 0
      %p168 = por %p166, %p167
      %p169 = scmp.ne.s32.totalorder %s155, %s156
      %p170 = scmp.eq.s32.totalorder %s28, 2
      %p171 = por %p169, %p170
      %p173 = scmp.ne.s32.totalorder %s156, %s172
      %p174 = scmp.eq.s32.totalorder %s28, 0
      %p175 = por %p173, %p174
      %s177 = sadd.s32 %s176, 1
      %p180 = scmp.eq.s32.totalorder %s22, 2
      %p181 = scmp.ne.s32.totalorder %s176, %s178
      %p182 = scmp.eq.s32.totalorder %s22, 0
      %p183 = por %p181, %p182
      %p184 = scmp.ne.s32.totalorder %s176, %s178
      %p185 = scmp.eq.s32.totalorder %s27, 2
      %p186 = por %p184, %p185
      %p187 = scmp.ne.s32.totalorder %s178, %s179
      %p188 = scmp.eq.s32.totalorder %s27, 0
      %p189 = por %p187, %p188
      %p190 = scmp.ne.s32.totalorder %s178, %s179
      %p191 = scmp.eq.s32.totalorder %s28, 2
      %p192 = por %p190, %p191
      %p194 = scmp.ne.s32.totalorder %s179, %s193
      %p195 = scmp.eq.s32.totalorder %s28, 0
      %p196 = por %p194, %p195
      %s198 = sadd.s32 %s197, 1
      %p201 = scmp.eq.s32.totalorder %s22, 2
      %p202 = scmp.ne.s32.totalorder %s197, %s199
      %p203 = scmp.eq.s32.totalorder %s22, 0
      %p204 = por %p202, %p203
      %p205 = scmp.ne.s32.totalorder %s197, %s199
      %p206 = scmp.eq.s32.totalorder %s27, 2
      %p207 = por %p205, %p206
      %p208 = scmp.ne.s32.totalorder %s199, %s200
      %p209 = scmp.eq.s32.totalorder %s27, 0
      %p210 = por %p208, %p209
      %p211 = scmp.ne.s32.totalorder %s199, %s200
      %p212 = scmp.eq.s32.totalorder %s28, 2
      %p213 = por %p211, %p212
      %p215 = scmp.ne.s32.totalorder %s200, %s214
      %p216 = scmp.eq.s32.totalorder %s28, 0
      %p217 = por %p215, %p216
      %s219 = sadd.s32 %s218, 1
      %p222 = scmp.eq.s32.totalorder %s22, 2
      %p223 = scmp.ne.s32.totalorder %s218, %s220
      %p224 = scmp.eq.s32.totalorder %s22, 0
      %p225 = por %p223, %p224
      %p226 = scmp.ne.s32.totalorder %s218, %s220
      %p227 = scmp.eq.s32.totalorder %s27, 2
      %p228 = por %p226, %p227
      %p229 = scmp.ne.s32.totalorder %s220, %s221
      %p230 = scmp.eq.s32.totalorder %s27, 0
      %p231 = por %p229, %p230
      %p232 = scmp.ne.s32.totalorder %s220, %s221
      %p233 = scmp.eq.s32.totalorder %s28, 2
      %p234 = por %p232, %p233
      %p236 = scmp.ne.s32.totalorder %s221, %s235
      %p237 = scmp.eq.s32.totalorder %s28, 0
      %p238 = por %p236, %p237
      %s240 = sadd.s32 %s239, 1
      %p243 = scmp.eq.s32.totalorder %s22, 2
      %p244 = scmp.ne.s32.totalorder %s239, %s241
      %p245 = scmp.eq.s32.totalorder %s22, 0
      %p246 = por %p244, %p245
      %p247 = scmp.ne.s32.totalorder %s239, %s241
      %p248 = scmp.eq.s32.totalorder %s27, 2
      %p249 = por %p247, %p248
      %p250 = scmp.ne.s32.totalorder %s241, %s242
      %p251 = scmp.eq.s32.totalorder %s27, 0
      %p252 = por %p250, %p251
      %p253 = scmp.ne.s32.totalorder %s241, %s242
      %p254 = scmp.eq.s32.totalorder %s28, 2
      %p255 = por %p253, %p254
      %p257 = scmp.ne.s32.totalorder %s242, %s256
      %p258 = scmp.eq.s32.totalorder %s28, 0
      %p259 = por %p257, %p258
      %s261 = sadd.s32 %s260, 1
      %p264 = scmp.eq.s32.totalorder %s22, 2
      %p265 = scmp.ne.s32.totalorder %s260, %s262
      %p266 = scmp.eq.s32.totalorder %s22, 0
      %p267 = por %p265, %p266
      %p268 = scmp.ne.s32.totalorder %s260, %s262
      %p269 = scmp.eq.s32.totalorder %s27, 2
      %p270 = por %p268, %p269
      %p271 = scmp.ne.s32.totalorder %s262, %s263
      %p272 = scmp.eq.s32.totalorder %s27, 0
      %p273 = por %p271, %p272
      %p274 = scmp.ne.s32.totalorder %s262, %s263
      %p275 = scmp.eq.s32.totalorder %s28, 2
      %p276 = por %p274, %p275
      %p278 = scmp.ne.s32.totalorder %s263, %s277
      %p279 = scmp.eq.s32.totalorder %s28, 0
      %p280 = por %p278, %p279
      %s282 = sadd.s32 %s281, 1
      %p285 = scmp.eq.s32.totalorder %s22, 2
      %p286 = scmp.ne.s32.totalorder %s281, %s283
      %p287 = scmp.eq.s32.totalorder %s22, 0
      %p288 = por %p286, %p287
      %p289 = scmp.ne.s32.totalorder %s281, %s283
      %p290 = scmp.eq.s32.totalorder %s27, 2
      %p291 = por %p289, %p290
      %p292 = scmp.ne.s32.totalorder %s283, %s284
      %p293 = scmp.eq.s32.totalorder %s27, 0
      %p294 = por %p292, %p293
      %p295 = scmp.ne.s32.totalorder %s283, %s284
      %p296 = scmp.eq.s32.totalorder %s28, 2
      %p297 = por %p295, %p296
      %p299 = scmp.ne.s32.totalorder %s284, %s298
      %p300 = scmp.eq.s32.totalorder %s28, 0
      %p301 = por %p299, %p300
      %p302 = scmp.le.s32.totalorder 1, %s22
      %p303 = scmp.lt.s32.totalorder %s22, 4
      %p304 = pnand %p302, %p303
      %p305 = pneg %p304
      // Predicated region
      $region9: #{tpu_custom_call.1} parent=5 // pred_check
        _
      $region10: #{tpu_custom_call.1} parent=5 // pred_check_branch
        %307 = sbr.rel (%p304) target = $region12
      $region11: #{tpu_custom_call.1} parent=5 // pred_region
        %s308 = ssub.s32 %s22, 1
        // Predicated region
        $region13: #{tpu_custom_call.1} parent=11 // pred_check
          %p309 = pneg %p43
        $region14: #{tpu_custom_call.1} parent=11 // pred_check_branch
          %311 = sbr.rel (%p309) target = $region16
        $region15: #{tpu_custom_call.1} parent=11 // pred_region
          %s313 = ssub.s32 2048, 2048
          %314 = vsyncadd [#allocation5], %s313
          %s315 = sshll.u32 [#allocation4], 4
          %s316 = int_to_ptr.vmem [resolvable:$true] %s315
          %321 = dma.hbm_to_vmem [thread:$0]  %s0, 2048, %s316, [#allocation5], 128, 128, 8
        $region16: #{tpu_custom_call.1} parent=11 // pred_fallthru
          _
        // Predicated region
        $region17: #{tpu_custom_call.1} parent=11 // pred_check
          %p322 = pneg %p64
        $region18: #{tpu_custom_call.1} parent=11 // pred_check_branch
          %324 = sbr.rel (%p322) target = $region20
        $region19: #{tpu_custom_call.1} parent=11 // pred_region
          %s326 = ssub.s32 6144, 6144
          %327 = vsyncadd [#allocation8], %s326
          %s328 = sshll.u32 [#allocation7], 4
          %s329 = int_to_ptr.vmem [resolvable:$true] %s328
          %334 = dma.hbm_to_vmem [thread:$0]  %s1, 6144, %s329, [#allocation8], 384, 384, 24
        $region20: #{tpu_custom_call.1} parent=11 // pred_fallthru
          _
        // Predicated region
        $region21: #{tpu_custom_call.1} parent=11 // pred_check
          %p335 = pneg %p189
        $region22: #{tpu_custom_call.1} parent=11 // pred_check_branch
          %337 = sbr.rel (%p335) target = $region24
        $region23: #{tpu_custom_call.1} parent=11 // pred_region
          _
        $region24: #{tpu_custom_call.1} parent=11 // pred_fallthru
          _
        // Predicated region
        $region25: #{tpu_custom_call.1} parent=11 // pred_check
          %p338 = pneg %p210
        $region26: #{tpu_custom_call.1} parent=11 // pred_check_branch
          %340 = sbr.rel (%p338) target = $region28
        $region27: #{tpu_custom_call.1} parent=11 // pred_region
          _
        $region28: #{tpu_custom_call.1} parent=11 // pred_fallthru
          _
        // Predicated region
        $region29: #{tpu_custom_call.1} parent=11 // pred_check
          %p341 = pneg %p231
        $region30: #{tpu_custom_call.1} parent=11 // pred_check_branch
          %343 = sbr.rel (%p341) target = $region32
        $region31: #{tpu_custom_call.1} parent=11 // pred_region
          _
        $region32: #{tpu_custom_call.1} parent=11 // pred_fallthru
          _
        // Predicated region
        $region33: #{tpu_custom_call.1} parent=11 // pred_check
          %p344 = pneg %p252
        $region34: #{tpu_custom_call.1} parent=11 // pred_check_branch
          %346 = sbr.rel (%p344) target = $region36
        $region35: #{tpu_custom_call.1} parent=11 // pred_region
          _
        $region36: #{tpu_custom_call.1} parent=11 // pred_fallthru
          _
      $region12: #{tpu_custom_call.1} parent=5 // pred_fallthru
        _
      %p347 = scmp.lt.s32.totalorder %s22, 3
      // Predicated region
      $region37: #{tpu_custom_call.1} parent=5 // pred_check
        %p348 = pneg %p347
      $region38: #{tpu_custom_call.1} parent=5 // pred_check_branch
        %350 = sbr.rel (%p348) target = $region40
      $region39: #{tpu_custom_call.1} parent=5 // pred_region
        // Predicated region
        $region41: #{tpu_custom_call.1} parent=39 // pred_check
          %p351 = pneg %p84
        $region42: #{tpu_custom_call.1} parent=39 // pred_check_branch
          %353 = sbr.rel (%p351) target = $region44
        $region43: #{tpu_custom_call.1} parent=39 // pred_region
          %s354 = smul.u32 16, %s22
          %p355 = scmp.lt.s32.totalorder %s354, 47
          %s356 = scalar_select %p355, %s354, 47
          %s357 = smul.addr %s356, 3
          %s358 = smul.addr %s357, 8
          %s359 = scalar_lea.vmem %s2, %s358
          %s360 = smul.u32 16, %s22
        $region44: #{tpu_custom_call.1} parent=39 // pred_fallthru
          _
        // Predicated region
        $region45: #{tpu_custom_call.1} parent=39 // pred_check
          %p361 = pneg %p110
        $region46: #{tpu_custom_call.1} parent=39 // pred_check_branch
          %363 = sbr.rel (%p361) target = $region48
        $region47: #{tpu_custom_call.1} parent=39 // pred_region
          %s364 = smul.u32 16, %s22
          %p365 = scmp.lt.s32.totalorder %s364, 47
          %s366 = scalar_select %p365, %s364, 47
          %s367 = smul.addr %s366, 8
          %s368 = scalar_lea.vmem %s3, %s367
          %s369 = smul.u32 16, %s22
        $region48: #{tpu_custom_call.1} parent=39 // pred_fallthru
          _
        // Predicated region
        $region49: #{tpu_custom_call.1} parent=39 // pred_check
          %p370 = pneg %p136
        $region50: #{tpu_custom_call.1} parent=39 // pred_check_branch
          %372 = sbr.rel (%p370) target = $region52
        $region51: #{tpu_custom_call.1} parent=39 // pred_region
          %p373 = scmp.lt.s32.totalorder %s22, 2
          %s374 = scalar_select %p373, %s22, 2
          %s375 = scalar_lea.vmem %s4, %s374
        $region52: #{tpu_custom_call.1} parent=39 // pred_fallthru
          _
        // Predicated region
        $region53: #{tpu_custom_call.1} parent=39 // pred_check
          %p376 = pneg %p162
        $region54: #{tpu_custom_call.1} parent=39 // pred_check_branch
          %378 = sbr.rel (%p376) target = $region56
        $region55: #{tpu_custom_call.1} parent=39 // pred_region
          %s379 = smul.u32 16, %s22
          %p380 = scmp.lt.s32.totalorder %s379, 47
          %s381 = scalar_select %p380, %s379, 47
          %s382 = smul.addr %s381, 8
          %s383 = scalar_lea.vmem %s5, %s382
          %s384 = smul.u32 16, %s22
        $region56: #{tpu_custom_call.1} parent=39 // pred_fallthru
          _
      $region40: #{tpu_custom_call.1} parent=5 // pred_fallthru
        _
      %p385 = scmp.le.s32.totalorder 1, %s22
      %p386 = scmp.lt.s32.totalorder %s22, 4
      %p387 = pnand %p385, %p386
      %p388 = pneg %p387
      // Predicated region
      $region57: #{tpu_custom_call.1} parent=5 // pred_check
        _
      $region58: #{tpu_custom_call.1} parent=5 // pred_check_branch
        %390 = sbr.rel (%p387) target = $region60
      $region59: #{tpu_custom_call.1} parent=5 // pred_region
        %s391 = ssub.s32 %s22, 1
        // Predicated region
        $region61: #{tpu_custom_call.1} parent=59 // pred_check
          %p392 = pneg %p43
        $region62: #{tpu_custom_call.1} parent=59 // pred_check_branch
          %394 = sbr.rel (%p392) target = $region64
        $region63: #{tpu_custom_call.1} parent=59 // pred_region
          %395 = dma.done [#allocation5], 2048
        $region64: #{tpu_custom_call.1} parent=59 // pred_fallthru
          _
        // Predicated region
        $region65: #{tpu_custom_call.1} parent=59 // pred_check
          %p396 = pneg %p64
        $region66: #{tpu_custom_call.1} parent=59 // pred_check_branch
          %398 = sbr.rel (%p396) target = $region68
        $region67: #{tpu_custom_call.1} parent=59 // pred_region
          %399 = dma.done [#allocation8], 6144
        $region68: #{tpu_custom_call.1} parent=59 // pred_fallthru
          _
        %p400 = pneg %p43
        %p401 = pneg %p40
        %p402 = pneg %p64
        %p403 = pneg %p61
        %s404 = smul.u32 16, %s27
        %p405 = scmp.lt.s32.totalorder %s404, 47
        %s406 = scalar_select %p405, %s404, 47
        %s407 = smul.addr %s406, 3
        %s408 = smul.addr %s407, 8
        %s409 = scalar_lea.vmem %s2, %s408
        %p410 = pneg %p90
        %p411 = pneg %p87
        %s412 = smul.u32 16, %s27
        %p413 = scmp.lt.s32.totalorder %s412, 47
        %s414 = scalar_select %p413, %s412, 47
        %s415 = smul.addr %s414, 8
        %s416 = scalar_lea.vmem %s3, %s415
        %p417 = pneg %p116
        %p418 = pneg %p113
        %p419 = scmp.lt.s32.totalorder %s27, 2
        %s420 = scalar_select %p419, %s27, 2
        %s421 = scalar_lea.vmem %s4, %s420
        %p422 = pneg %p142
        %p423 = pneg %p139
        %s424 = smul.u32 16, %s27
        %p425 = scmp.lt.s32.totalorder %s424, 47
        %s426 = scalar_select %p425, %s424, 47
        %s427 = smul.addr %s426, 8
        %s428 = scalar_lea.vmem %s5, %s427
        %p429 = pneg %p168
        %p430 = pneg %p165
        %p431 = pneg %p189
        %p432 = pneg %p186
        %p433 = pneg %p210
        %p434 = pneg %p207
        %p435 = pneg %p231
        %p436 = pneg %p228
        %p437 = pneg %p252
        %p438 = pneg %p249
        %p439 = pneg %p273
        %p440 = pneg %p270
        %p441 = pneg %p294
        %p442 = pneg %p291
        %s443 = smul.u32 16, %s27
        %p444 = scmp.lt.s32.totalorder %s443, 47
        %s445 = scalar_select %p444, %s443, 47
        %s446 = smul.addr %s445, 3
        %s447 = smul.addr %s446, 8
        %s448 = scalar_lea.vmem %s2, %s447
        %s449 = smul.u32 16, %s27
        %s450 = smul.u32 16, %s27
        %p451 = scmp.lt.s32.totalorder %s450, 47
        %s452 = scalar_select %p451, %s450, 47
        %s453 = smul.addr %s452, 8
        %s454 = scalar_lea.vmem %s3, %s453
        %s455 = smul.u32 16, %s27
        %p456 = scmp.lt.s32.totalorder %s27, 2
        %s457 = scalar_select %p456, %s27, 2
        %s458 = scalar_lea.vmem %s4, %s457
        %s459 = smul.u32 16, %s27
        %p460 = scmp.lt.s32.totalorder %s459, 47
        %s461 = scalar_select %p460, %s459, 47
        %s462 = smul.addr %s461, 8
        %s463 = scalar_lea.vmem %s5, %s462
        %s464 = smul.u32 16, %s27
        %p465 = scmp.eq.s32.totalorder %s27, 0
        // Predicated region
        $region69: #{tpu_custom_call.1} parent=59 // pred_check
          %p466 = pneg %p465
        $region70: #{tpu_custom_call.1} parent=59 // pred_check_branch
          %468 = sbr.rel (%p466) target = $region72
        $region71: #{tpu_custom_call.1} parent=59 // pred_region
          %v469 = vld [vmem:[#allocation4] sm:$0xff]
          %v470 = vld [vmem:[#allocation4 + $0x8] sm:$0xff]
          %v471 = vld [vmem:[#allocation4 + $0x10] sm:$0xff]
          %v472 = vld [vmem:[#allocation4 + $0x18] sm:$0xff]
          %v473 = vld [vmem:[#allocation4 + $0x20] sm:$0xff]
          %v474 = vld [vmem:[#allocation4 + $0x28] sm:$0xff]
          %v475 = vld [vmem:[#allocation4 + $0x30] sm:$0xff]
          %v476 = vld [vmem:[#allocation4 + $0x38] sm:$0xff]
          %v477 = vld [vmem:[#allocation4 + $0x40] sm:$0xff]
          %v478 = vld [vmem:[#allocation4 + $0x48] sm:$0xff]
          %v479 = vld [vmem:[#allocation4 + $0x50] sm:$0xff]
          %v480 = vld [vmem:[#allocation4 + $0x58] sm:$0xff]
          %v481 = vld [vmem:[#allocation4 + $0x60] sm:$0xff]
          %v482 = vld [vmem:[#allocation4 + $0x68] sm:$0xff]
          %v483 = vld [vmem:[#allocation4 + $0x70] sm:$0xff]
          %v484 = vld [vmem:[#allocation4 + $0x78] sm:$0xff]
          %v485 = vld [vmem:[%s6] sm:$0xff]
          %v486 = vld [vmem:[%s6 + $0x8] sm:$0xff]
          %v487 = vld [vmem:[%s6 + $0x10] sm:$0xff]
          %v488 = vld [vmem:[%s6 + $0x18] sm:$0xff]
          %v489 = vld [vmem:[%s6 + $0x20] sm:$0xff]
          %v490 = vld [vmem:[%s6 + $0x28] sm:$0xff]
          %v491 = vld [vmem:[%s6 + $0x30] sm:$0xff]
          %v492 = vld [vmem:[%s6 + $0x38] sm:$0xff]
          %v493 = vld [vmem:[%s6 + $0x40] sm:$0xff]
          %v494 = vld [vmem:[%s6 + $0x48] sm:$0xff]
          %v495 = vld [vmem:[%s6 + $0x50] sm:$0xff]
          %v496 = vld [vmem:[%s6 + $0x58] sm:$0xff]
          %v497 = vld [vmem:[%s6 + $0x60] sm:$0xff]
          %v498 = vld [vmem:[%s6 + $0x68] sm:$0xff]
          %v499 = vld [vmem:[%s6 + $0x70] sm:$0xff]
          %v500 = vld [vmem:[%s6 + $0x78] sm:$0xff]
          %v501 = vld [vmem:[%s7] sm:$0x1]
          %v503 = vlaneseq
          %v504 = vshrl.u32 %v503, 7
          %v505 = vsub.s32 0, %v504
          %v506 = vrot.slane %v501, %v505
          %508 = vmatprep.subr.mxu0 0.0
          %509 = vmatpush1.msra.mxu0 %v485
          %510 = vmatprep.subr.mxu0 0.0
          %511 = vmatpush1.msra.mxu0 %v486
          %512 = vmatprep.subr.mxu0 0.0
          %513 = vmatpush1.msra.mxu0 %v487
          %514 = vmatprep.subr.mxu0 0.0
          %515 = vmatpush1.msra.mxu0 %v488
          %516 = vmatprep.subr.mxu0 0.0
          %517 = vmatpush1.msra.mxu0 %v489
          %518 = vmatprep.subr.mxu0 0.0
          %519 = vmatpush1.msra.mxu0 %v490
          %520 = vmatprep.subr.mxu0 0.0
          %521 = vmatpush1.msra.mxu0 %v491
          %522 = vmatprep.subr.mxu0 0.0
          %523 = vmatpush1.msra.mxu0 %v492
          %524 = vmatprep.subr.mxu0 0.0
          %525 = vmatpush1.msra.mxu0 %v493
          %526 = vmatprep.subr.mxu0 0.0
          %527 = vmatpush1.msra.mxu0 %v494
          %528 = vmatprep.subr.mxu0 0.0
          %529 = vmatpush1.msra.mxu0 %v495
          %530 = vmatprep.subr.mxu0 0.0
          %531 = vmatpush1.msra.mxu0 %v496
          %532 = vmatprep.subr.mxu0 0.0
          %533 = vmatpush1.msra.mxu0 %v497
          %534 = vmatprep.subr.mxu0 0.0
          %535 = vmatpush1.msra.mxu0 %v498
          %536 = vmatprep.subr.mxu0 0.0
          %537 = vmatpush1.msra.mxu0 %v499
          %538 = vmatprep.subr.mxu0 0.0
          %539 = vmatpush1.msra.mxu0 %v500
          %540 = vmatprep.subr.mxu0 0.0
          %541 = vmatpush1.msra.mxu0 0.0
          %542 = vmatprep.subr.mxu0 0.0
          %543 = vmatpush1.msra.mxu0 0.0
          %544 = vmatprep.subr.mxu0 0.0
          %545 = vmatpush1.msra.mxu0 0.0
          %546 = vmatprep.subr.mxu0 0.0
          %547 = vmatpush1.msra.mxu0 0.0
          %548 = vmatprep.subr.mxu0 0.0
          %549 = vmatpush1.msra.mxu0 0.0
          %550 = vmatprep.subr.mxu0 0.0
          %551 = vmatpush1.msra.mxu0 0.0
          %552 = vmatprep.subr.mxu0 0.0
          %553 = vmatpush1.msra.mxu0 0.0
          %554 = vmatprep.subr.mxu0 0.0
          %555 = vmatpush1.msra.mxu0 0.0
          %556 = vmatprep.subr.mxu0 0.0
          %557 = vmatpush1.msra.mxu0 0.0
          %558 = vmatprep.subr.mxu0 0.0
          %559 = vmatpush1.msra.mxu0 0.0
          %560 = vmatprep.subr.mxu0 0.0
          %561 = vmatpush1.msra.mxu0 0.0
          %562 = vmatprep.subr.mxu0 0.0
          %563 = vmatpush1.msra.mxu0 0.0
          %564 = vmatprep.subr.mxu0 0.0
          %565 = vmatpush1.msra.mxu0 0.0
          %566 = vmatprep.subr.mxu0 0.0
          %567 = vmatpush1.msra.mxu0 0.0
          %568 = vmatprep.subr.mxu0 0.0
          %569 = vmatpush1.msra.mxu0 0.0
          %570 = vmatprep.subr.mxu0 0.0
          %571 = vmatpush1.msra.mxu0 0.0
          %572 = vmatprep.mubr.f32.mxu0 0.0
          %573 = vmatmul.mubr.f32.gmra.mrb[0].mxu0 %v469
          %v574 = vpop.f32.mrb[0].mxu0
          %v575 = vadd.f32 %v506, %v574
          %v576 = vpop.f32.mrb[0].mxu0
          %577 = vmatprep.mubr.f32.mxu0 0.0
          %578 = vmatmul.mubr.f32.gmra.mrb[0].mxu0 %v470
          %v579 = vpop.f32.mrb[0].mxu0
          %v580 = vadd.f32 %v506, %v579
          %v581 = vpop.f32.mrb[0].mxu0
          %582 = vmatprep.mubr.f32.mxu0 0.0
          %583 = vmatmul.mubr.f32.gmra.mrb[0].mxu0 %v471
          %v584 = vpop.f32.mrb[0].mxu0
          %v585 = vadd.f32 %v506, %v584
          %v586 = vpop.f32.mrb[0].mxu0
          %587 = vmatprep.mubr.f32.mxu0 0.0
          %588 = vmatmul.mubr.f32.gmra.mrb[0].mxu0 %v472
          %v589 = vpop.f32.mrb[0].mxu0
          %v590 = vadd.f32 %v506, %v589
          %v591 = vpop.f32.mrb[0].mxu0
          %592 = vmatprep.mubr.f32.mxu0 0.0
          %593 = vmatmul.mubr.f32.gmra.mrb[0].mxu0 %v473
          %v594 = vpop.f32.mrb[0].mxu0
          %v595 = vadd.f32 %v506, %v594
          %v596 = vpop.f32.mrb[0].mxu0
          %597 = vmatprep.mubr.f32.mxu0 0.0
          %598 = vmatmul.mubr.f32.gmra.mrb[0].mxu0 %v474
          %v599 = vpop.f32.mrb[0].mxu0
          %v600 = vadd.f32 %v506, %v599
          %v601 = vpop.f32.mrb[0].mxu0
          %602 = vmatprep.mubr.f32.mxu0 0.0
          %603 = vmatmul.mubr.f32.gmra.mrb[0].mxu0 %v475
          %v604 = vpop.f32.mrb[0].mxu0
          %v605 = vadd.f32 %v506, %v604
          %v606 = vpop.f32.mrb[0].mxu0
          %607 = vmatprep.mubr.f32.mxu0 0.0
          %608 = vmatmul.mubr.f32.gmra.mrb[0].mxu0 %v476
          %v609 = vpop.f32.mrb[0].mxu0
          %v610 = vadd.f32 %v506, %v609
          %v611 = vpop.f32.mrb[0].mxu0
          %612 = vmatprep.mubr.f32.mxu0 0.0
          %613 = vmatmul.mubr.f32.gmra.mrb[0].mxu0 %v477
          %v614 = vpop.f32.mrb[0].mxu0
          %v615 = vadd.f32 %v506, %v614
          %v616 = vpop.f32.mrb[0].mxu0
          %617 = vmatprep.mubr.f32.mxu0 0.0
          %618 = vmatmul.mubr.f32.gmra.mrb[0].mxu0 %v478
          %v619 = vpop.f32.mrb[0].mxu0
          %v620 = vadd.f32 %v506, %v619
          %v621 = vpop.f32.mrb[0].mxu0
          %622 = vmatprep.mubr.f32.mxu0 0.0
          %623 = vmatmul.mubr.f32.gmra.mrb[0].mxu0 %v479
          %v624 = vpop.f32.mrb[0].mxu0
          %v625 = vadd.f32 %v506, %v624
          %v626 = vpop.f32.mrb[0].mxu0
          %627 = vmatprep.mubr.f32.mxu0 0.0
          %628 = vmatmul.mubr.f32.gmra.mrb[0].mxu0 %v480
          %v629 = vpop.f32.mrb[0].mxu0
          %v630 = vadd.f32 %v506, %v629
          %v631 = vpop.f32.mrb[0].mxu0
          %632 = vmatprep.mubr.f32.mxu0 0.0
          %633 = vmatmul.mubr.f32.gmra.mrb[0].mxu0 %v481
          %v634 = vpop.f32.mrb[0].mxu0
          %v635 = vadd.f32 %v506, %v634
          %v636 = vpop.f32.mrb[0].mxu0
          %637 = vmatprep.mubr.f32.mxu0 0.0
          %638 = vmatmul.mubr.f32.gmra.mrb[0].mxu0 %v482
          %v639 = vpop.f32.mrb[0].mxu0
          %v640 = vadd.f32 %v506, %v639
          %v641 = vpop.f32.mrb[0].mxu0
          %642 = vmatprep.mubr.f32.mxu0 0.0
          %643 = vmatmul.mubr.f32.gmra.mrb[0].mxu0 %v483
          %v644 = vpop.f32.mrb[0].mxu0
          %v645 = vadd.f32 %v506, %v644
          %v646 = vpop.f32.mrb[0].mxu0
          %647 = vmatprep.mubr.f32.mxu0 0.0
          %648 = vmatmul.mubr.f32.gmra.mrb[0].mxu0 %v484
          %v649 = vpop.f32.mrb[0].mxu0
          %v650 = vadd.f32 %v506, %v649
          %v651 = vpop.f32.mrb[0].mxu0
          %652 = vdwg.mxu0
          %v653 = vxor.u32 %v575, 2147483648
          %v654 = vxor.u32 %v580, 2147483648
          %v655 = vxor.u32 %v585, 2147483648
          %v656 = vxor.u32 %v590, 2147483648
          %v657 = vxor.u32 %v595, 2147483648
          %v658 = vxor.u32 %v600, 2147483648
          %v659 = vxor.u32 %v605, 2147483648
          %v660 = vxor.u32 %v610, 2147483648
          %v661 = vxor.u32 %v615, 2147483648
          %v662 = vxor.u32 %v620, 2147483648
          %v663 = vxor.u32 %v625, 2147483648
          %v664 = vxor.u32 %v630, 2147483648
          %v665 = vxor.u32 %v635, 2147483648
          %v666 = vxor.u32 %v640, 2147483648
          %v667 = vxor.u32 %v645, 2147483648
          %v668 = vxor.u32 %v650, 2147483648
          %v669 = vmul.f32 %v653, 1.442695
          %v670 = vpow.pop %v669
          %v671 = vmul.f32 %v654, 1.442695
          %v672 = vpow.pop %v671
          %v673 = vmul.f32 %v655, 1.442695
          %v674 = vpow.pop %v673
          %v675 = vmul.f32 %v656, 1.442695
          %v676 = vpow.pop %v675
          %v677 = vmul.f32 %v657, 1.442695
          %v678 = vpow.pop %v677
          %v679 = vmul.f32 %v658, 1.442695
          %v680 = vpow.pop %v679
          %v681 = vmul.f32 %v659, 1.442695
          %v682 = vpow.pop %v681
          %v683 = vmul.f32 %v660, 1.442695
          %v684 = vpow.pop %v683
          %v685 = vmul.f32 %v661, 1.442695
          %v686 = vpow.pop %v685
          %v687 = vmul.f32 %v662, 1.442695
          %v688 = vpow.pop %v687
          %v689 = vmul.f32 %v663, 1.442695
          %v690 = vpow.pop %v689
          %v691 = vmul.f32 %v664, 1.442695
          %v692 = vpow.pop %v691
          %v693 = vmul.f32 %v665, 1.442695
          %v694 = vpow.pop %v693
          %v695 = vmul.f32 %v666, 1.442695
          %v696 = vpow.pop %v695
          %v697 = vmul.f32 %v667, 1.442695
          %v698 = vpow.pop %v697
          %v699 = vmul.f32 %v668, 1.442695
          %v700 = vpow.pop %v699
          %v701 = vadd.f32 %v670, 1.0
          %v702 = vadd.f32 %v672, 1.0
          %v703 = vadd.f32 %v674, 1.0
          %v704 = vadd.f32 %v676, 1.0
          %v705 = vadd.f32 %v678, 1.0
          %v706 = vadd.f32 %v680, 1.0
          %v707 = vadd.f32 %v682, 1.0
          %v708 = vadd.f32 %v684, 1.0
          %v709 = vadd.f32 %v686, 1.0
          %v710 = vadd.f32 %v688, 1.0
          %v711 = vadd.f32 %v690, 1.0
          %v712 = vadd.f32 %v692, 1.0
          %v713 = vadd.f32 %v694, 1.0
          %v714 = vadd.f32 %v696, 1.0
          %v715 = vadd.f32 %v698, 1.0
          %v716 = vadd.f32 %v700, 1.0
          %v717 = vrcp.pop %v701
          %v718 = vmul.f32 1.0, %v717
          %v719 = vrcp.pop %v702
          %v720 = vmul.f32 1.0, %v719
          %v721 = vrcp.pop %v703
          %v722 = vmul.f32 1.0, %v721
          %v723 = vrcp.pop %v704
          %v724 = vmul.f32 1.0, %v723
          %v725 = vrcp.pop %v705
          %v726 = vmul.f32 1.0, %v725
          %v727 = vrcp.pop %v706
          %v728 = vmul.f32 1.0, %v727
          %v729 = vrcp.pop %v707
          %v730 = vmul.f32 1.0, %v729
          %v731 = vrcp.pop %v708
          %v732 = vmul.f32 1.0, %v731
          %v733 = vrcp.pop %v709
          %v734 = vmul.f32 1.0, %v733
          %v735 = vrcp.pop %v710
          %v736 = vmul.f32 1.0, %v735
          %v737 = vrcp.pop %v711
          %v738 = vmul.f32 1.0, %v737
          %v739 = vrcp.pop %v712
          %v740 = vmul.f32 1.0, %v739
          %v741 = vrcp.pop %v713
          %v742 = vmul.f32 1.0, %v741
          %v743 = vrcp.pop %v714
          %v744 = vmul.f32 1.0, %v743
          %v745 = vrcp.pop %v715
          %v746 = vmul.f32 1.0, %v745
          %v747 = vrcp.pop %v716
          %v748 = vmul.f32 1.0, %v747
          %v749 = vmul.f32 %v575, %v718
          %v750 = vmul.f32 %v580, %v720
          %v751 = vmul.f32 %v585, %v722
          %v752 = vmul.f32 %v590, %v724
          %v753 = vmul.f32 %v595, %v726
          %v754 = vmul.f32 %v600, %v728
          %v755 = vmul.f32 %v605, %v730
          %v756 = vmul.f32 %v610, %v732
          %v757 = vmul.f32 %v615, %v734
          %v758 = vmul.f32 %v620, %v736
          %v759 = vmul.f32 %v625, %v738
          %v760 = vmul.f32 %v630, %v740
          %v761 = vmul.f32 %v635, %v742
          %v762 = vmul.f32 %v640, %v744
          %v763 = vmul.f32 %v645, %v746
          %v764 = vmul.f32 %v650, %v748
          %v765 = vld [vmem:[%s8] sm:$0xff]
          %v766 = vld [vmem:[%s8 + $0x8] sm:$0xff]
          %v767 = vld [vmem:[%s8 + $0x10] sm:$0xff]
          %v768 = vld [vmem:[%s8 + $0x18] sm:$0xff]
          %v769 = vld [vmem:[%s8 + $0x20] sm:$0xff]
          %v770 = vld [vmem:[%s8 + $0x28] sm:$0xff]
          %v771 = vld [vmem:[%s8 + $0x30] sm:$0xff]
          %v772 = vld [vmem:[%s8 + $0x38] sm:$0xff]
          %v773 = vld [vmem:[%s8 + $0x40] sm:$0xff]
          %v774 = vld [vmem:[%s8 + $0x48] sm:$0xff]
          %v775 = vld [vmem:[%s8 + $0x50] sm:$0xff]
          %v776 = vld [vmem:[%s8 + $0x58] sm:$0xff]
          %v777 = vld [vmem:[%s8 + $0x60] sm:$0xff]
          %v778 = vld [vmem:[%s8 + $0x68] sm:$0xff]
          %v779 = vld [vmem:[%s8 + $0x70] sm:$0xff]
          %v780 = vld [vmem:[%s8 + $0x78] sm:$0xff]
          %v781 = vld [vmem:[%s8 + $0x80] sm:$0xff]
          %v782 = vld [vmem:[%s8 + $0x88] sm:$0xff]
          %v783 = vld [vmem:[%s8 + $0x90] sm:$0xff]
          %v784 = vld [vmem:[%s8 + $0x98] sm:$0xff]
          %v785 = vld [vmem:[%s8 + $0xa0] sm:$0xff]
          %v786 = vld [vmem:[%s8 + $0xa8] sm:$0xff]
          %v787 = vld [vmem:[%s8 + $0xb0] sm:$0xff]
          %v788 = vld [vmem:[%s8 + $0xb8] sm:$0xff]
          %v789 = vld [vmem:[%s8 + $0xc0] sm:$0xff]
          %v790 = vld [vmem:[%s8 + $0xc8] sm:$0xff]
          %v791 = vld [vmem:[%s8 + $0xd0] sm:$0xff]
          %v792 = vld [vmem:[%s8 + $0xd8] sm:$0xff]
          %v793 = vld [vmem:[%s8 + $0xe0] sm:$0xff]
          %v794 = vld [vmem:[%s8 + $0xe8] sm:$0xff]
          %v795 = vld [vmem:[%s8 + $0xf0] sm:$0xff]
          %v796 = vld [vmem:[%s8 + $0xf8] sm:$0xff]
          %v797 = vld [vmem:[%s8 + $0x100] sm:$0xff]
          %v798 = vld [vmem:[%s8 + $0x108] sm:$0xff]
          %v799 = vld [vmem:[%s8 + $0x110] sm:$0xff]
          %v800 = vld [vmem:[%s8 + $0x118] sm:$0xff]
          %v801 = vld [vmem:[%s8 + $0x120] sm:$0xff]
          %v802 = vld [vmem:[%s8 + $0x128] sm:$0xff]
          %v803 = vld [vmem:[%s8 + $0x130] sm:$0xff]
          %v804 = vld [vmem:[%s8 + $0x138] sm:$0xff]
          %v805 = vld [vmem:[%s8 + $0x140] sm:$0xff]
          %v806 = vld [vmem:[%s8 + $0x148] sm:$0xff]
          %v807 = vld [vmem:[%s8 + $0x150] sm:$0xff]
          %v808 = vld [vmem:[%s8 + $0x158] sm:$0xff]
          %v809 = vld [vmem:[%s8 + $0x160] sm:$0xff]
          %v810 = vld [vmem:[%s8 + $0x168] sm:$0xff]
          %v811 = vld [vmem:[%s8 + $0x170] sm:$0xff]
          %v812 = vld [vmem:[%s8 + $0x178] sm:$0xff]
          %v813 = vld [vmem:[%s9] sm:$0x7]
          %v815 = vlaneseq
          %v816 = vshrl.u32 %v815, 7
          %v817 = vsub.s32 0, %v816
          %v818 = vrot.slane %v813, %v817
          %v819 = vlaneseq
          %v820 = vshrl.u32 %v819, 7
          %v821 = vsub.s32 1, %v820
          %v822 = vrot.slane %v813, %v821
          %v823 = vlaneseq
          %v824 = vshrl.u32 %v823, 7
          %v825 = vsub.s32 2, %v824
          %v826 = vrot.slane %v813, %v825
          %830 = vmatprep.subr.mxu0 %v766
          %831 = vmatpush1.msra.mxu0 %v765
          %832 = vmatprep.subr.mxu0 %v769
          %833 = vmatpush1.msra.mxu0 %v768
          %834 = vmatprep.subr.mxu0 %v772
          %835 = vmatpush1.msra.mxu0 %v771
          %836 = vmatprep.subr.mxu0 %v775
          %837 = vmatpush1.msra.mxu0 %v774
          %838 = vmatprep.subr.mxu0 %v778
          %839 = vmatpush1.msra.mxu0 %v777
          %840 = vmatprep.subr.mxu0 %v781
          %841 = vmatpush1.msra.mxu0 %v780
          %842 = vmatprep.subr.mxu0 %v784
          %843 = vmatpush1.msra.mxu0 %v783
          %844 = vmatprep.subr.mxu0 %v787
          %845 = vmatpush1.msra.mxu0 %v786
          %846 = vmatprep.subr.mxu0 %v790
          %847 = vmatpush1.msra.mxu0 %v789
          %848 = vmatprep.subr.mxu0 %v793
          %849 = vmatpush1.msra.mxu0 %v792
          %850 = vmatprep.subr.mxu0 %v796
          %851 = vmatpush1.msra.mxu0 %v795
          %852 = vmatprep.subr.mxu0 %v799
          %853 = vmatpush1.msra.mxu0 %v798
          %854 = vmatprep.subr.mxu0 %v802
          %855 = vmatpush1.msra.mxu0 %v801
          %856 = vmatprep.subr.mxu0 %v805
          %857 = vmatpush1.msra.mxu0 %v804
          %858 = vmatprep.subr.mxu0 %v808
          %859 = vmatpush1.msra.mxu0 %v807
          %860 = vmatprep.subr.mxu0 %v811
          %861 = vmatpush1.msra.mxu0 %v810
          %862 = vmatprep.subr.mxu0 0.0
          %863 = vmatpush1.msra.mxu0 0.0
          %864 = vmatprep.subr.mxu0 0.0
          %865 = vmatpush1.msra.mxu0 0.0
          %866 = vmatprep.subr.mxu0 0.0
          %867 = vmatpush1.msra.mxu0 0.0
          %868 = vmatprep.subr.mxu0 0.0
          %869 = vmatpush1.msra.mxu0 0.0
          %870 = vmatprep.subr.mxu0 0.0
          %871 = vmatpush1.msra.mxu0 0.0
          %872 = vmatprep.subr.mxu0 0.0
          %873 = vmatpush1.msra.mxu0 0.0
          %874 = vmatprep.subr.mxu0 0.0
          %875 = vmatpush1.msra.mxu0 0.0
          %876 = vmatprep.subr.mxu0 0.0
          %877 = vmatpush1.msra.mxu0 0.0
          %878 = vmatprep.subr.mxu0 0.0
          %879 = vmatpush1.msra.mxu0 0.0
          %880 = vmatprep.subr.mxu0 0.0
          %881 = vmatpush1.msra.mxu0 0.0
          %882 = vmatprep.subr.mxu0 0.0
          %883 = vmatpush1.msra.mxu0 0.0
          %884 = vmatprep.subr.mxu0 0.0
          %885 = vmatpush1.msra.mxu0 0.0
          %886 = vmatprep.subr.mxu0 0.0
          %887 = vmatpush1.msra.mxu0 0.0
          %888 = vmatprep.subr.mxu0 0.0
          %889 = vmatpush1.msra.mxu0 0.0
          %890 = vmatprep.subr.mxu0 0.0
          %891 = vmatpush1.msra.mxu0 0.0
          %892 = vmatprep.subr.mxu0 0.0
          %893 = vmatpush1.msra.mxu0 0.0
          %894 = vmatprep.mubr.f32.mxu0 0.0
          %895 = vmatmul.mubr.f32.gmra.mrb[0].mxu0 %v749
          %v896 = vpop.f32.mrb[0].mxu0
          %v897 = vadd.f32 %v818, %v896
          %v898 = vpop.f32.mrb[0].mxu0
          %v899 = vadd.f32 %v822, %v898
          %900 = vmatprep.mubr.f32.mxu0 0.0
          %901 = vmatmul.mubr.f32.gmra.mrb[0].mxu0 %v750
          %v902 = vpop.f32.mrb[0].mxu0
          %v903 = vadd.f32 %v818, %v902
          %v904 = vpop.f32.mrb[0].mxu0
          %v905 = vadd.f32 %v822, %v904
          %906 = vmatprep.mubr.f32.mxu0 0.0
          %907 = vmatmul.mubr.f32.gmra.mrb[0].mxu0 %v751
          %v908 = vpop.f32.mrb[0].mxu0
          %v909 = vadd.f32 %v818, %v908
          %v910 = vpop.f32.mrb[0].mxu0
          %v911 = vadd.f32 %v822, %v910
          %912 = vmatprep.mubr.f32.mxu0 0.0
          %913 = vmatmul.mubr.f32.gmra.mrb[0].mxu0 %v752
          %v914 = vpop.f32.mrb[0].mxu0
          %v915 = vadd.f32 %v818, %v914
          %v916 = vpop.f32.mrb[0].mxu0
          %v917 = vadd.f32 %v822, %v916
          %918 = vmatprep.mubr.f32.mxu0 0.0
          %919 = vmatmul.mubr.f32.gmra.mrb[0].mxu0 %v753
          %v920 = vpop.f32.mrb[0].mxu0
          %v921 = vadd.f32 %v818, %v920
          %v922 = vpop.f32.mrb[0].mxu0
          %v923 = vadd.f32 %v822, %v922
          %924 = vmatprep.mubr.f32.mxu0 0.0
          %925 = vmatmul.mubr.f32.gmra.mrb[0].mxu0 %v754
          %v926 = vpop.f32.mrb[0].mxu0
          %v927 = vadd.f32 %v818, %v926
          %v928 = vpop.f32.mrb[0].mxu0
          %v929 = vadd.f32 %v822, %v928
          %930 = vmatprep.mubr.f32.mxu0 0.0
          %931 = vmatmul.mubr.f32.gmra.mrb[0].mxu0 %v755
          %v932 = vpop.f32.mrb[0].mxu0
          %v933 = vadd.f32 %v818, %v932
          %v934 = vpop.f32.mrb[0].mxu0
          %v935 = vadd.f32 %v822, %v934
          %936 = vmatprep.mubr.f32.mxu0 0.0
          %937 = vmatmul.mubr.f32.gmra.mrb[0].mxu0 %v756
          %v938 = vpop.f32.mrb[0].mxu0
          %v939 = vadd.f32 %v818, %v938
          %v940 = vpop.f32.mrb[0].mxu0
          %v941 = vadd.f32 %v822, %v940
          %942 = vmatprep.mubr.f32.mxu0 0.0
          %943 = vmatmul.mubr.f32.gmra.mrb[0].mxu0 %v757
          %v944 = vpop.f32.mrb[0].mxu0
          %v945 = vadd.f32 %v818, %v944
          %v946 = vpop.f32.mrb[0].mxu0
          %v947 = vadd.f32 %v822, %v946
          %948 = vmatprep.mubr.f32.mxu0 0.0
          %949 = vmatmul.mubr.f32.gmra.mrb[0].mxu0 %v758
          %v950 = vpop.f32.mrb[0].mxu0
          %v951 = vadd.f32 %v818, %v950
          %v952 = vpop.f32.mrb[0].mxu0
          %v953 = vadd.f32 %v822, %v952
          %954 = vmatprep.mubr.f32.mxu0 0.0
          %955 = vmatmul.mubr.f32.gmra.mrb[0].mxu0 %v759
          %v956 = vpop.f32.mrb[0].mxu0
          %v957 = vadd.f32 %v818, %v956
          %v958 = vpop.f32.mrb[0].mxu0
          %v959 = vadd.f32 %v822, %v958
          %960 = vmatprep.mubr.f32.mxu0 0.0
          %961 = vmatmul.mubr.f32.gmra.mrb[0].mxu0 %v760
          %v962 = vpop.f32.mrb[0].mxu0
          %v963 = vadd.f32 %v818, %v962
          %v964 = vpop.f32.mrb[0].mxu0
          %v965 = vadd.f32 %v822, %v964
          %966 = vmatprep.mubr.f32.mxu0 0.0
          %967 = vmatmul.mubr.f32.gmra.mrb[0].mxu0 %v761
          %v968 = vpop.f32.mrb[0].mxu0
          %v969 = vadd.f32 %v818, %v968
          %v970 = vpop.f32.mrb[0].mxu0
          %v971 = vadd.f32 %v822, %v970
          %972 = vmatprep.mubr.f32.mxu0 0.0
          %973 = vmatmul.mubr.f32.gmra.mrb[0].mxu0 %v762
          %v974 = vpop.f32.mrb[0].mxu0
          %v975 = vadd.f32 %v818, %v974
          %v976 = vpop.f32.mrb[0].mxu0
          %v977 = vadd.f32 %v822, %v976
          %978 = vmatprep.mubr.f32.mxu0 0.0
          %979 = vmatmul.mubr.f32.gmra.mrb[0].mxu0 %v763
          %v980 = vpop.f32.mrb[0].mxu0
          %v981 = vadd.f32 %v818, %v980
          %v982 = vpop.f32.mrb[0].mxu0
          %v983 = vadd.f32 %v822, %v982
          %984 = vmatprep.mubr.f32.mxu0 0.0
          %985 = vmatmul.mubr.f32.gmra.mrb[0].mxu0 %v764
          %v986 = vpop.f32.mrb[0].mxu0
          %v987 = vadd.f32 %v818, %v986
          %v988 = vpop.f32.mrb[0].mxu0
          %v989 = vadd.f32 %v822, %v988
          %990 = vdwg.mxu0
          %991 = vmatprep.subr.mxu0 0.0
          %992 = vmatpush1.msra.mxu0 %v767
          %993 = vmatprep.subr.mxu0 0.0
          %994 = vmatpush1.msra.mxu0 %v770
          %995 = vmatprep.subr.mxu0 0.0
          %996 = vmatpush1.msra.mxu0 %v773
          %997 = vmatprep.subr.mxu0 0.0
          %998 = vmatpush1.msra.mxu0 %v776
          %999 = vmatprep.subr.mxu0 0.0
          %1000 = vmatpush1.msra.mxu0 %v779
          %1001 = vmatprep.subr.mxu0 0.0
          %1002 = vmatpush1.msra.mxu0 %v782
          %1003 = vmatprep.subr.mxu0 0.0
          %1004 = vmatpush1.msra.mxu0 %v785
          %1005 = vmatprep.subr.mxu0 0.0
          %1006 = vmatpush1.msra.mxu0 %v788
          %1007 = vmatprep.subr.mxu0 0.0
          %1008 = vmatpush1.msra.mxu0 %v791
          %1009 = vmatprep.subr.mxu0 0.0
          %1010 = vmatpush1.msra.mxu0 %v794
          %1011 = vmatprep.subr.mxu0 0.0
          %1012 = vmatpush1.msra.mxu0 %v797
          %1013 = vmatprep.subr.mxu0 0.0
          %1014 = vmatpush1.msra.mxu0 %v800
          %1015 = vmatprep.subr.mxu0 0.0
          %1016 = vmatpush1.msra.mxu0 %v803
          %1017 = vmatprep.subr.mxu0 0.0
          %1018 = vmatpush1.msra.mxu0 %v806
          %1019 = vmatprep.subr.mxu0 0.0
          %1020 = vmatpush1.msra.mxu0 %v809
          %1021 = vmatprep.subr.mxu0 0.0
          %1022 = vmatpush1.msra.mxu0 %v812
          %1023 = vmatprep.subr.mxu0 0.0
          %1024 = vmatpush1.msra.mxu0 0.0
          %1025 = vmatprep.subr.mxu0 0.0
          %1026 = vmatpush1.msra.mxu0 0.0
          %1027 = vmatprep.subr.mxu0 0.0
          %1028 = vmatpush1.msra.mxu0 0.0
          %1029 = vmatprep.subr.mxu0 0.0
          %1030 = vmatpush1.msra.mxu0 0.0
          %1031 = vmatprep.subr.mxu0 0.0
          %1032 = vmatpush1.msra.mxu0 0.0
          %1033 = vmatprep.subr.mxu0 0.0
          %1034 = vmatpush1.msra.mxu0 0.0
          %1035 = vmatprep.subr.mxu0 0.0
          %1036 = vmatpush1.msra.mxu0 0.0
          %1037 = vmatprep.subr.mxu0 0.0
          %1038 = vmatpush1.msra.mxu0 0.0
          %1039 = vmatprep.subr.mxu0 0.0
          %1040 = vmatpush1.msra.mxu0 0.0
          %1041 = vmatprep.subr.mxu0 0.0
          %1042 = vmatpush1.msra.mxu0 0.0
          %1043 = vmatprep.subr.mxu0 0.0
          %1044 = vmatpush1.msra.mxu0 0.0
          %1045 = vmatprep.subr.mxu0 0.0
          %1046 = vmatpush1.msra.mxu0 0.0
          %1047 = vmatprep.subr.mxu0 0.0
          %1048 = vmatpush1.msra.mxu0 0.0
          %1049 = vmatprep.subr.mxu0 0.0
          %1050 = vmatpush1.msra.mxu0 0.0
          %1051 = vmatprep.subr.mxu0 0.0
          %1052 = vmatpush1.msra.mxu0 0.0
          %1053 = vmatprep.subr.mxu0 0.0
          %1054 = vmatpush1.msra.mxu0 0.0
          %1055 = vmatprep.mubr.f32.mxu0 0.0
          %1056 = vmatmul.mubr.f32.gmra.mrb[0].mxu0 %v749
          %v1057 = vpop.f32.mrb[0].mxu0
          %v1058 = vadd.f32 %v826, %v1057
          %v1059 = vpop.f32.mrb[0].mxu0
          %1060 = vmatprep.mubr.f32.mxu0 0.0
          %1061 = vmatmul.mubr.f32.gmra.mrb[0].mxu0 %v750
          %v1062 = vpop.f32.mrb[0].mxu0
          %v1063 = vadd.f32 %v826, %v1062
          %v1064 = vpop.f32.mrb[0].mxu0
          %1065 = vmatprep.mubr.f32.mxu0 0.0
          %1066 = vmatmul.mubr.f32.gmra.mrb[0].mxu0 %v751
          %v1067 = vpop.f32.mrb[0].mxu0
          %v1068 = vadd.f32 %v826, %v1067
          %v1069 = vpop.f32.mrb[0].mxu0
          %1070 = vmatprep.mubr.f32.mxu0 0.0
          %1071 = vmatmul.mubr.f32.gmra.mrb[0].mxu0 %v752
          %v1072 = vpop.f32.mrb[0].mxu0
          %v1073 = vadd.f32 %v826, %v1072
          %v1074 = vpop.f32.mrb[0].mxu0
          %1075 = vmatprep.mubr.f32.mxu0 0.0
          %1076 = vmatmul.mubr.f32.gmra.mrb[0].mxu0 %v753
          %v1077 = vpop.f32.mrb[0].mxu0
          %v1078 = vadd.f32 %v826, %v1077
          %v1079 = vpop.f32.mrb[0].mxu0
          %1080 = vmatprep.mubr.f32.mxu0 0.0
          %1081 = vmatmul.mubr.f32.gmra.mrb[0].mxu0 %v754
          %v1082 = vpop.f32.mrb[0].mxu0
          %v1083 = vadd.f32 %v826, %v1082
          %v1084 = vpop.f32.mrb[0].mxu0
          %1085 = vmatprep.mubr.f32.mxu0 0.0
          %1086 = vmatmul.mubr.f32.gmra.mrb[0].mxu0 %v755
          %v1087 = vpop.f32.mrb[0].mxu0
          %v1088 = vadd.f32 %v826, %v1087
          %v1089 = vpop.f32.mrb[0].mxu0
          %1090 = vmatprep.mubr.f32.mxu0 0.0
          %1091 = vmatmul.mubr.f32.gmra.mrb[0].mxu0 %v756
          %v1092 = vpop.f32.mrb[0].mxu0
          %v1093 = vadd.f32 %v826, %v1092
          %v1094 = vpop.f32.mrb[0].mxu0
          %1095 = vmatprep.mubr.f32.mxu0 0.0
          %1096 = vmatmul.mubr.f32.gmra.mrb[0].mxu0 %v757
          %v1097 = vpop.f32.mrb[0].mxu0
          %v1098 = vadd.f32 %v826, %v1097
          %v1099 = vpop.f32.mrb[0].mxu0
          %1100 = vmatprep.mubr.f32.mxu0 0.0
          %1101 = vmatmul.mubr.f32.gmra.mrb[0].mxu0 %v758
          %v1102 = vpop.f32.mrb[0].mxu0
          %v1103 = vadd.f32 %v826, %v1102
          %v1104 = vpop.f32.mrb[0].mxu0
          %1105 = vmatprep.mubr.f32.mxu0 0.0
          %1106 = vmatmul.mubr.f32.gmra.mrb[0].mxu0 %v759
          %v1107 = vpop.f32.mrb[0].mxu0
          %v1108 = vadd.f32 %v826, %v1107
          %v1109 = vpop.f32.mrb[0].mxu0
          %1110 = vmatprep.mubr.f32.mxu0 0.0
          %1111 = vmatmul.mubr.f32.gmra.mrb[0].mxu0 %v760
          %v1112 = vpop.f32.mrb[0].mxu0
          %v1113 = vadd.f32 %v826, %v1112
          %v1114 = vpop.f32.mrb[0].mxu0
          %1115 = vmatprep.mubr.f32.mxu0 0.0
          %1116 = vmatmul.mubr.f32.gmra.mrb[0].mxu0 %v761
          %v1117 = vpop.f32.mrb[0].mxu0
          %v1118 = vadd.f32 %v826, %v1117
          %v1119 = vpop.f32.mrb[0].mxu0
          %1120 = vmatprep.mubr.f32.mxu0 0.0
          %1121 = vmatmul.mubr.f32.gmra.mrb[0].mxu0 %v762
          %v1122 = vpop.f32.mrb[0].mxu0
          %v1123 = vadd.f32 %v826, %v1122
          %v1124 = vpop.f32.mrb[0].mxu0
          %1125 = vmatprep.mubr.f32.mxu0 0.0
          %1126 = vmatmul.mubr.f32.gmra.mrb[0].mxu0 %v763
          %v1127 = vpop.f32.mrb[0].mxu0
          %v1128 = vadd.f32 %v826, %v1127
          %v1129 = vpop.f32.mrb[0].mxu0
          %1130 = vmatprep.mubr.f32.mxu0 0.0
          %1131 = vmatmul.mubr.f32.gmra.mrb[0].mxu0 %v764
          %v1132 = vpop.f32.mrb[0].mxu0
          %v1133 = vadd.f32 %v826, %v1132
          %v1134 = vpop.f32.mrb[0].mxu0
          %1135 = vdwg.mxu0
          %1136 = vst [vmem:[#allocation2] sm:$0xff] %v897
          %1137 = vst [vmem:[#allocation2 + $0x8] sm:$0xff] %v899
          %1138 = vst [vmem:[#allocation2 + $0x10] sm:$0xff] %v1058
          %1139 = vst [vmem:[#allocation2 + $0x18] sm:$0xff] %v903
          %1140 = vst [vmem:[#allocation2 + $0x20] sm:$0xff] %v905
          %1141 = vst [vmem:[#allocation2 + $0x28] sm:$0xff] %v1063
          %1142 = vst [vmem:[#allocation2 + $0x30] sm:$0xff] %v909
          %1143 = vst [vmem:[#allocation2 + $0x38] sm:$0xff] %v911
          %1144 = vst [vmem:[#allocation2 + $0x40] sm:$0xff] %v1068
          %1145 = vst [vmem:[#allocation2 + $0x48] sm:$0xff] %v915
          %1146 = vst [vmem:[#allocation2 + $0x50] sm:$0xff] %v917
          %1147 = vst [vmem:[#allocation2 + $0x58] sm:$0xff] %v1073
          %1148 = vst [vmem:[#allocation2 + $0x60] sm:$0xff] %v921
          %1149 = vst [vmem:[#allocation2 + $0x68] sm:$0xff] %v923
          %1150 = vst [vmem:[#allocation2 + $0x70] sm:$0xff] %v1078
          %1151 = vst [vmem:[#allocation2 + $0x78] sm:$0xff] %v927
          %1152 = vst [vmem:[#allocation2 + $0x80] sm:$0xff] %v929
          %1153 = vst [vmem:[#allocation2 + $0x88] sm:$0xff] %v1083
          %1154 = vst [vmem:[#allocation2 + $0x90] sm:$0xff] %v933
          %1155 = vst [vmem:[#allocation2 + $0x98] sm:$0xff] %v935
          %1156 = vst [vmem:[#allocation2 + $0xa0] sm:$0xff] %v1088
          %1157 = vst [vmem:[#allocation2 + $0xa8] sm:$0xff] %v939
          %1158 = vst [vmem:[#allocation2 + $0xb0] sm:$0xff] %v941
          %1159 = vst [vmem:[#allocation2 + $0xb8] sm:$0xff] %v1093
          %1160 = vst [vmem:[#allocation2 + $0xc0] sm:$0xff] %v945
          %1161 = vst [vmem:[#allocation2 + $0xc8] sm:$0xff] %v947
          %1162 = vst [vmem:[#allocation2 + $0xd0] sm:$0xff] %v1098
          %1163 = vst [vmem:[#allocation2 + $0xd8] sm:$0xff] %v951
          %1164 = vst [vmem:[#allocation2 + $0xe0] sm:$0xff] %v953
          %1165 = vst [vmem:[#allocation2 + $0xe8] sm:$0xff] %v1103
          %1166 = vst [vmem:[#allocation2 + $0xf0] sm:$0xff] %v957
          %1167 = vst [vmem:[#allocation2 + $0xf8] sm:$0xff] %v959
          %1168 = vst [vmem:[#allocation2 + $0x100] sm:$0xff] %v1108
          %1169 = vst [vmem:[#allocation2 + $0x108] sm:$0xff] %v963
          %1170 = vst [vmem:[#allocation2 + $0x110] sm:$0xff] %v965
          %1171 = vst [vmem:[#allocation2 + $0x118] sm:$0xff] %v1113
          %1172 = vst [vmem:[#allocation2 + $0x120] sm:$0xff] %v969
          %1173 = vst [vmem:[#allocation2 + $0x128] sm:$0xff] %v971
          %1174 = vst [vmem:[#allocation2 + $0x130] sm:$0xff] %v1118
          %1175 = vst [vmem:[#allocation2 + $0x138] sm:$0xff] %v975
          %1176 = vst [vmem:[#allocation2 + $0x140] sm:$0xff] %v977
          %1177 = vst [vmem:[#allocation2 + $0x148] sm:$0xff] %v1123
          %1178 = vst [vmem:[#allocation2 + $0x150] sm:$0xff] %v981
          %1179 = vst [vmem:[#allocation2 + $0x158] sm:$0xff] %v983
          %1180 = vst [vmem:[#allocation2 + $0x160] sm:$0xff] %v1128
          %1181 = vst [vmem:[#allocation2 + $0x168] sm:$0xff] %v987
          %1182 = vst [vmem:[#allocation2 + $0x170] sm:$0xff] %v989
          %1183 = vst [vmem:[#allocation2 + $0x178] sm:$0xff] %v1133
          %1184 = vst [vmem:[#allocation3] sm:$0xff] 0.0
          %1185 = vst [vmem:[#allocation3 + $0x8] sm:$0xff] 0.0
          %1186 = vst [vmem:[#allocation3 + $0x10] sm:$0xff] 0.0
          %1187 = vst [vmem:[#allocation3 + $0x18] sm:$0xff] 0.0
          %1188 = vst [vmem:[#allocation3 + $0x20] sm:$0xff] 0.0
          %1189 = vst [vmem:[#allocation3 + $0x28] sm:$0xff] 0.0
          %1190 = vst [vmem:[#allocation3 + $0x30] sm:$0xff] 0.0
          %1191 = vst [vmem:[#allocation3 + $0x38] sm:$0xff] 0.0
          %1192 = vst [vmem:[#allocation3 + $0x40] sm:$0xff] 0.0
          %1193 = vst [vmem:[#allocation3 + $0x48] sm:$0xff] 0.0
          %1194 = vst [vmem:[#allocation3 + $0x50] sm:$0xff] 0.0
          %1195 = vst [vmem:[#allocation3 + $0x58] sm:$0xff] 0.0
          %1196 = vst [vmem:[#allocation3 + $0x60] sm:$0xff] 0.0
          %1197 = vst [vmem:[#allocation3 + $0x68] sm:$0xff] 0.0
          %1198 = vst [vmem:[#allocation3 + $0x70] sm:$0xff] 0.0
          %1199 = vst [vmem:[#allocation3 + $0x78] sm:$0xff] 0.0
          %1200 = vst [vmem:[#allocation3 + $0x80] sm:$0xff] 0.0
          %1201 = vst [vmem:[#allocation3 + $0x88] sm:$0xff] 0.0
          %1202 = vst [vmem:[#allocation3 + $0x90] sm:$0xff] 0.0
          %1203 = vst [vmem:[#allocation3 + $0x98] sm:$0xff] 0.0
          %1204 = vst [vmem:[#allocation3 + $0xa0] sm:$0xff] 0.0
          %1205 = vst [vmem:[#allocation3 + $0xa8] sm:$0xff] 0.0
          %1206 = vst [vmem:[#allocation3 + $0xb0] sm:$0xff] 0.0
          %1207 = vst [vmem:[#allocation3 + $0xb8] sm:$0xff] 0.0
          %1208 = vst [vmem:[#allocation3 + $0xc0] sm:$0xff] 0.0
          %1209 = vst [vmem:[#allocation3 + $0xc8] sm:$0xff] 0.0
          %1210 = vst [vmem:[#allocation3 + $0xd0] sm:$0xff] 0.0
          %1211 = vst [vmem:[#allocation3 + $0xd8] sm:$0xff] 0.0
          %1212 = vst [vmem:[#allocation3 + $0xe0] sm:$0xff] 0.0
          %1213 = vst [vmem:[#allocation3 + $0xe8] sm:$0xff] 0.0
          %1214 = vst [vmem:[#allocation3 + $0xf0] sm:$0xff] 0.0
          %1215 = vst [vmem:[#allocation3 + $0xf8] sm:$0xff] 0.0
          %1216 = vst [vmem:[#allocation3 + $0x100] sm:$0xff] 0.0
          %1217 = vst [vmem:[#allocation3 + $0x108] sm:$0xff] 0.0
          %1218 = vst [vmem:[#allocation3 + $0x110] sm:$0xff] 0.0
          %1219 = vst [vmem:[#allocation3 + $0x118] sm:$0xff] 0.0
          %1220 = vst [vmem:[#allocation3 + $0x120] sm:$0xff] 0.0
          %1221 = vst [vmem:[#allocation3 + $0x128] sm:$0xff] 0.0
          %1222 = vst [vmem:[#allocation3 + $0x130] sm:$0xff] 0.0
          %1223 = vst [vmem:[#allocation3 + $0x138] sm:$0xff] 0.0
          %1224 = vst [vmem:[#allocation3 + $0x140] sm:$0xff] 0.0
          %1225 = vst [vmem:[#allocation3 + $0x148] sm:$0xff] 0.0
          %1226 = vst [vmem:[#allocation3 + $0x150] sm:$0xff] 0.0
          %1227 = vst [vmem:[#allocation3 + $0x158] sm:$0xff] 0.0
          %1228 = vst [vmem:[#allocation3 + $0x160] sm:$0xff] 0.0
          %1229 = vst [vmem:[#allocation3 + $0x168] sm:$0xff] 0.0
          %1230 = vst [vmem:[#allocation3 + $0x170] sm:$0xff] 0.0
          %1231 = vst [vmem:[#allocation3 + $0x178] sm:$0xff] 0.0
          %1232 = vst [vmem:[#allocation3 + $0x180] sm:$0xff] 0.0
          %1233 = vst [vmem:[#allocation3 + $0x188] sm:$0xff] 0.0
          %1234 = vst [vmem:[#allocation3 + $0x190] sm:$0xff] 0.0
          %1235 = vst [vmem:[#allocation3 + $0x198] sm:$0xff] 0.0
          %1236 = vst [vmem:[#allocation3 + $0x1a0] sm:$0xff] 0.0
          %1237 = vst [vmem:[#allocation3 + $0x1a8] sm:$0xff] 0.0
          %1238 = vst [vmem:[#allocation3 + $0x1b0] sm:$0xff] 0.0
          %1239 = vst [vmem:[#allocation3 + $0x1b8] sm:$0xff] 0.0
          %1240 = vst [vmem:[#allocation3 + $0x1c0] sm:$0xff] 0.0
          %1241 = vst [vmem:[#allocation3 + $0x1c8] sm:$0xff] 0.0
          %1242 = vst [vmem:[#allocation3 + $0x1d0] sm:$0xff] 0.0
          %1243 = vst [vmem:[#allocation3 + $0x1d8] sm:$0xff] 0.0
          %1244 = vst [vmem:[#allocation3 + $0x1e0] sm:$0xff] 0.0
          %1245 = vst [vmem:[#allocation3 + $0x1e8] sm:$0xff] 0.0
          %1246 = vst [vmem:[#allocation3 + $0x1f0] sm:$0xff] 0.0
          %1247 = vst [vmem:[#allocation3 + $0x1f8] sm:$0xff] 0.0
        $region72: #{tpu_custom_call.1} parent=59 // pred_fallthru
          _
        %v1248 = vlaneseq
        %v1249 = vand.u32 %v1248, 127
        %v1250 = vld [vmem:[%s463] sm:$0xff]
        %v1251 = vld [vmem:[%s463 + $0x8] sm:$0xff]
        %v1252 = vld [vmem:[%s463 + $0x10] sm:$0xff]
        %v1253 = vld [vmem:[%s463 + $0x18] sm:$0xff]
        %v1254 = vld [vmem:[%s463 + $0x20] sm:$0xff]
        %v1255 = vld [vmem:[%s463 + $0x28] sm:$0xff]
        %v1256 = vld [vmem:[%s463 + $0x30] sm:$0xff]
        %v1257 = vld [vmem:[%s463 + $0x38] sm:$0xff]
        %v1258 = vld [vmem:[%s463 + $0x40] sm:$0xff]
        %v1259 = vld [vmem:[%s463 + $0x48] sm:$0xff]
        %v1260 = vld [vmem:[%s463 + $0x50] sm:$0xff]
        %v1261 = vld [vmem:[%s463 + $0x58] sm:$0xff]
        %v1262 = vld [vmem:[%s463 + $0x60] sm:$0xff]
        %v1263 = vld [vmem:[%s463 + $0x68] sm:$0xff]
        %v1264 = vld [vmem:[%s463 + $0x70] sm:$0xff]
        %v1265 = vld [vmem:[%s463 + $0x78] sm:$0xff]
        %1266 = vset.pattern.permute.xlu0 0
        %1267 = vperm.xlu0 %1266, %v1250
        %v1268 = vpop.permute.xlu0 %1267
        %1269 = vset.pattern.permute.xlu0 0
        %1270 = vperm.xlu0 %1269, %v1251
        %v1271 = vpop.permute.xlu0 %1270
        %1272 = vset.pattern.permute.xlu0 0
        %1273 = vperm.xlu0 %1272, %v1252
        %v1274 = vpop.permute.xlu0 %1273
        %1275 = vset.pattern.permute.xlu0 0
        %1276 = vperm.xlu0 %1275, %v1253
        %v1277 = vpop.permute.xlu0 %1276
        %1278 = vset.pattern.permute.xlu0 0
        %1279 = vperm.xlu0 %1278, %v1254
        %v1280 = vpop.permute.xlu0 %1279
        %1281 = vset.pattern.permute.xlu0 0
        %1282 = vperm.xlu0 %1281, %v1255
        %v1283 = vpop.permute.xlu0 %1282
        %1284 = vset.pattern.permute.xlu0 0
        %1285 = vperm.xlu0 %1284, %v1256
        %v1286 = vpop.permute.xlu0 %1285
        %1287 = vset.pattern.permute.xlu0 0
        %1288 = vperm.xlu0 %1287, %v1257
        %v1289 = vpop.permute.xlu0 %1288
        %1290 = vset.pattern.permute.xlu0 0
        %1291 = vperm.xlu0 %1290, %v1258
        %v1292 = vpop.permute.xlu0 %1291
        %1293 = vset.pattern.permute.xlu0 0
        %1294 = vperm.xlu0 %1293, %v1259
        %v1295 = vpop.permute.xlu0 %1294
        %1296 = vset.pattern.permute.xlu0 0
        %1297 = vperm.xlu0 %1296, %v1260
        %v1298 = vpop.permute.xlu0 %1297
        %1299 = vset.pattern.permute.xlu0 0
        %1300 = vperm.xlu0 %1299, %v1261
        %v1301 = vpop.permute.xlu0 %1300
        %1302 = vset.pattern.permute.xlu0 0
        %1303 = vperm.xlu0 %1302, %v1262
        %v1304 = vpop.permute.xlu0 %1303
        %1305 = vset.pattern.permute.xlu0 0
        %1306 = vperm.xlu0 %1305, %v1263
        %v1307 = vpop.permute.xlu0 %1306
        %1308 = vset.pattern.permute.xlu0 0
        %1309 = vperm.xlu0 %1308, %v1264
        %v1310 = vpop.permute.xlu0 %1309
        %1311 = vset.pattern.permute.xlu0 0
        %1312 = vperm.xlu0 %1311, %v1265
        %v1313 = vpop.permute.xlu0 %1312
        %vm1314 = vcmp.eq.s32.totalorder %v1268, %v1249
        %vm1315 = vcmp.eq.s32.totalorder %v1271, %v1249
        %vm1316 = vcmp.eq.s32.totalorder %v1274, %v1249
        %vm1317 = vcmp.eq.s32.totalorder %v1277, %v1249
        %vm1318 = vcmp.eq.s32.totalorder %v1280, %v1249
        %vm1319 = vcmp.eq.s32.totalorder %v1283, %v1249
        %vm1320 = vcmp.eq.s32.totalorder %v1286, %v1249
        %vm1321 = vcmp.eq.s32.totalorder %v1289, %v1249
        %vm1322 = vcmp.eq.s32.totalorder %v1292, %v1249
        %vm1323 = vcmp.eq.s32.totalorder %v1295, %v1249
        %vm1324 = vcmp.eq.s32.totalorder %v1298, %v1249
        %vm1325 = vcmp.eq.s32.totalorder %v1301, %v1249
        %vm1326 = vcmp.eq.s32.totalorder %v1304, %v1249
        %vm1327 = vcmp.eq.s32.totalorder %v1307, %v1249
        %vm1328 = vcmp.eq.s32.totalorder %v1310, %v1249
        %vm1329 = vcmp.eq.s32.totalorder %v1313, %v1249
        %v1330 = vsel %vm1314, 1, 0
        %v1331 = vsel %vm1315, 1, 0
        %v1332 = vsel %vm1316, 1, 0
        %v1333 = vsel %vm1317, 1, 0
        %v1334 = vsel %vm1318, 1, 0
        %v1335 = vsel %vm1319, 1, 0
        %v1336 = vsel %vm1320, 1, 0
        %v1337 = vsel %vm1321, 1, 0
        %v1338 = vsel %vm1322, 1, 0
        %v1339 = vsel %vm1323, 1, 0
        %v1340 = vsel %vm1324, 1, 0
        %v1341 = vsel %vm1325, 1, 0
        %v1342 = vsel %vm1326, 1, 0
        %v1343 = vsel %vm1327, 1, 0
        %v1344 = vsel %vm1328, 1, 0
        %v1345 = vsel %vm1329, 1, 0
        %v1346 = vcvt.s32.f32 %v1330
        %v1347 = vcvt.s32.f32 %v1331
        %v1348 = vcvt.s32.f32 %v1332
        %v1349 = vcvt.s32.f32 %v1333
        %v1350 = vcvt.s32.f32 %v1334
        %v1351 = vcvt.s32.f32 %v1335
        %v1352 = vcvt.s32.f32 %v1336
        %v1353 = vcvt.s32.f32 %v1337
        %v1354 = vcvt.s32.f32 %v1338
        %v1355 = vcvt.s32.f32 %v1339
        %v1356 = vcvt.s32.f32 %v1340
        %v1357 = vcvt.s32.f32 %v1341
        %v1358 = vcvt.s32.f32 %v1342
        %v1359 = vcvt.s32.f32 %v1343
        %v1360 = vcvt.s32.f32 %v1344
        %v1361 = vcvt.s32.f32 %v1345
        %v1362 = vlaneseq
        %v1363 = vshrl.u32 %v1362, 7
        %v1364 = vadd.s32 %v1363, 8
        %v1365 = vadd.s32 %v1363, 16
        %v1366 = vadd.s32 %v1363, 24
        %v1367 = vadd.s32 %v1363, 32
        %v1368 = vadd.s32 %v1363, 40
        %v1369 = vadd.s32 %v1363, 48
        %v1370 = vadd.s32 %v1363, 56
        %v1371 = vadd.s32 %v1363, 64
        %v1372 = vadd.s32 %v1363, 72
        %v1373 = vadd.s32 %v1363, 80
        %v1374 = vadd.s32 %v1363, 88
        %v1375 = vadd.s32 %v1363, 96
        %v1376 = vadd.s32 %v1363, 104
        %v1377 = vadd.s32 %v1363, 112
        %v1378 = vadd.s32 %v1363, 120
        %v1379 = vld [vmem:[%s458] sm:$0x1]
        %v1380 = vlaneseq
        %v1381 = vshrl.u32 %v1380, 7
        %v1382 = vsub.s32 0, %v1381
        %v1383 = vrot.slane %v1379, %v1382
        %vm1384 = vcmp.eq.s32.totalorder %v1383, %v1363
        %vm1385 = vcmp.eq.s32.totalorder %v1383, %v1364
        %vm1386 = vcmp.eq.s32.totalorder %v1383, %v1365
        %vm1387 = vcmp.eq.s32.totalorder %v1383, %v1366
        %vm1388 = vcmp.eq.s32.totalorder %v1383, %v1367
        %vm1389 = vcmp.eq.s32.totalorder %v1383, %v1368
        %vm1390 = vcmp.eq.s32.totalorder %v1383, %v1369
        %vm1391 = vcmp.eq.s32.totalorder %v1383, %v1370
        %vm1392 = vcmp.eq.s32.totalorder %v1383, %v1371
        %vm1393 = vcmp.eq.s32.totalorder %v1383, %v1372
        %vm1394 = vcmp.eq.s32.totalorder %v1383, %v1373
        %vm1395 = vcmp.eq.s32.totalorder %v1383, %v1374
        %vm1396 = vcmp.eq.s32.totalorder %v1383, %v1375
        %vm1397 = vcmp.eq.s32.totalorder %v1383, %v1376
        %vm1398 = vcmp.eq.s32.totalorder %v1383, %v1377
        %vm1399 = vcmp.eq.s32.totalorder %v1383, %v1378
        %v1400 = vsel %vm1384, 1, 0
        %v1401 = vsel %vm1385, 1, 0
        %v1402 = vsel %vm1386, 1, 0
        %v1403 = vsel %vm1387, 1, 0
        %v1404 = vsel %vm1388, 1, 0
        %v1405 = vsel %vm1389, 1, 0
        %v1406 = vsel %vm1390, 1, 0
        %v1407 = vsel %vm1391, 1, 0
        %v1408 = vsel %vm1392, 1, 0
        %v1409 = vsel %vm1393, 1, 0
        %v1410 = vsel %vm1394, 1, 0
        %v1411 = vsel %vm1395, 1, 0
        %v1412 = vsel %vm1396, 1, 0
        %v1413 = vsel %vm1397, 1, 0
        %v1414 = vsel %vm1398, 1, 0
        %v1415 = vsel %vm1399, 1, 0
        %v1416 = vcvt.s32.f32 %v1400
        %v1417 = vcvt.s32.f32 %v1401
        %v1418 = vcvt.s32.f32 %v1402
        %v1419 = vcvt.s32.f32 %v1403
        %v1420 = vcvt.s32.f32 %v1404
        %v1421 = vcvt.s32.f32 %v1405
        %v1422 = vcvt.s32.f32 %v1406
        %v1423 = vcvt.s32.f32 %v1407
        %v1424 = vcvt.s32.f32 %v1408
        %v1425 = vcvt.s32.f32 %v1409
        %v1426 = vcvt.s32.f32 %v1410
        %v1427 = vcvt.s32.f32 %v1411
        %v1428 = vcvt.s32.f32 %v1412
        %v1429 = vcvt.s32.f32 %v1413
        %v1430 = vcvt.s32.f32 %v1414
        %v1431 = vcvt.s32.f32 %v1415
        %v1432 = vld [vmem:[#allocation2] sm:$0xff]
        %v1433 = vld [vmem:[#allocation2 + $0x8] sm:$0xff]
        %v1434 = vld [vmem:[#allocation2 + $0x10] sm:$0xff]
        %v1435 = vld [vmem:[#allocation2 + $0x18] sm:$0xff]
        %v1436 = vld [vmem:[#allocation2 + $0x20] sm:$0xff]
        %v1437 = vld [vmem:[#allocation2 + $0x28] sm:$0xff]
        %v1438 = vld [vmem:[#allocation2 + $0x30] sm:$0xff]
        %v1439 = vld [vmem:[#allocation2 + $0x38] sm:$0xff]
        %v1440 = vld [vmem:[#allocation2 + $0x40] sm:$0xff]
        %v1441 = vld [vmem:[#allocation2 + $0x48] sm:$0xff]
        %v1442 = vld [vmem:[#allocation2 + $0x50] sm:$0xff]
        %v1443 = vld [vmem:[#allocation2 + $0x58] sm:$0xff]
        %v1444 = vld [vmem:[#allocation2 + $0x60] sm:$0xff]
        %v1445 = vld [vmem:[#allocation2 + $0x68] sm:$0xff]
        %v1446 = vld [vmem:[#allocation2 + $0x70] sm:$0xff]
        %v1447 = vld [vmem:[#allocation2 + $0x78] sm:$0xff]
        %v1448 = vld [vmem:[#allocation2 + $0x80] sm:$0xff]
        %v1449 = vld [vmem:[#allocation2 + $0x88] sm:$0xff]
        %v1450 = vld [vmem:[#allocation2 + $0x90] sm:$0xff]
        %v1451 = vld [vmem:[#allocation2 + $0x98] sm:$0xff]
        %v1452 = vld [vmem:[#allocation2 + $0xa0] sm:$0xff]
        %v1453 = vld [vmem:[#allocation2 + $0xa8] sm:$0xff]
        %v1454 = vld [vmem:[#allocation2 + $0xb0] sm:$0xff]
        %v1455 = vld [vmem:[#allocation2 + $0xb8] sm:$0xff]
        %v1456 = vld [vmem:[#allocation2 + $0xc0] sm:$0xff]
        %v1457 = vld [vmem:[#allocation2 + $0xc8] sm:$0xff]
        %v1458 = vld [vmem:[#allocation2 + $0xd0] sm:$0xff]
        %v1459 = vld [vmem:[#allocation2 + $0xd8] sm:$0xff]
        %v1460 = vld [vmem:[#allocation2 + $0xe0] sm:$0xff]
        %v1461 = vld [vmem:[#allocation2 + $0xe8] sm:$0xff]
        %v1462 = vld [vmem:[#allocation2 + $0xf0] sm:$0xff]
        %v1463 = vld [vmem:[#allocation2 + $0xf8] sm:$0xff]
        %v1464 = vld [vmem:[#allocation2 + $0x100] sm:$0xff]
        %v1465 = vld [vmem:[#allocation2 + $0x108] sm:$0xff]
        %v1466 = vld [vmem:[#allocation2 + $0x110] sm:$0xff]
        %v1467 = vld [vmem:[#allocation2 + $0x118] sm:$0xff]
        %v1468 = vld [vmem:[#allocation2 + $0x120] sm:$0xff]
        %v1469 = vld [vmem:[#allocation2 + $0x128] sm:$0xff]
        %v1470 = vld [vmem:[#allocation2 + $0x130] sm:$0xff]
        %v1471 = vld [vmem:[#allocation2 + $0x138] sm:$0xff]
        %v1472 = vld [vmem:[#allocation2 + $0x140] sm:$0xff]
        %v1473 = vld [vmem:[#allocation2 + $0x148] sm:$0xff]
        %v1474 = vld [vmem:[#allocation2 + $0x150] sm:$0xff]
        %v1475 = vld [vmem:[#allocation2 + $0x158] sm:$0xff]
        %v1476 = vld [vmem:[#allocation2 + $0x160] sm:$0xff]
        %v1477 = vld [vmem:[#allocation2 + $0x168] sm:$0xff]
        %v1478 = vld [vmem:[#allocation2 + $0x170] sm:$0xff]
        %v1479 = vld [vmem:[#allocation2 + $0x178] sm:$0xff]
        %1480 = vmatprep.subr.mxu0 %v1433
        %1481 = vmatpush1.msra.mxu0 %v1432
        %1482 = vmatprep.subr.mxu0 %v1436
        %1483 = vmatpush1.msra.mxu0 %v1435
        %1484 = vmatprep.subr.mxu0 %v1439
        %1485 = vmatpush1.msra.mxu0 %v1438
        %1486 = vmatprep.subr.mxu0 %v1442
        %1487 = vmatpush1.msra.mxu0 %v1441
        %1488 = vmatprep.subr.mxu0 %v1445
        %1489 = vmatpush1.msra.mxu0 %v1444
        %1490 = vmatprep.subr.mxu0 %v1448
        %1491 = vmatpush1.msra.mxu0 %v1447
        %1492 = vmatprep.subr.mxu0 %v1451
        %1493 = vmatpush1.msra.mxu0 %v1450
        %1494 = vmatprep.subr.mxu0 %v1454
        %1495 = vmatpush1.msra.mxu0 %v1453
        %1496 = vmatprep.subr.mxu0 %v1457
        %1497 = vmatpush1.msra.mxu0 %v1456
        %1498 = vmatprep.subr.mxu0 %v1460
        %1499 = vmatpush1.msra.mxu0 %v1459
        %1500 = vmatprep.subr.mxu0 %v1463
        %1501 = vmatpush1.msra.mxu0 %v1462
        %1502 = vmatprep.subr.mxu0 %v1466
        %1503 = vmatpush1.msra.mxu0 %v1465
        %1504 = vmatprep.subr.mxu0 %v1469
        %1505 = vmatpush1.msra.mxu0 %v1468
        %1506 = vmatprep.subr.mxu0 %v1472
        %1507 = vmatpush1.msra.mxu0 %v1471
        %1508 = vmatprep.subr.mxu0 %v1475
        %1509 = vmatpush1.msra.mxu0 %v1474
        %1510 = vmatprep.subr.mxu0 %v1478
        %1511 = vmatpush1.msra.mxu0 %v1477
        %1512 = vmatprep.subr.mxu0 0.0
        %1513 = vmatpush1.msra.mxu0 0.0
        %1514 = vmatprep.subr.mxu0 0.0
        %1515 = vmatpush1.msra.mxu0 0.0
        %1516 = vmatprep.subr.mxu0 0.0
        %1517 = vmatpush1.msra.mxu0 0.0
        %1518 = vmatprep.subr.mxu0 0.0
        %1519 = vmatpush1.msra.mxu0 0.0
        %1520 = vmatprep.subr.mxu0 0.0
        %1521 = vmatpush1.msra.mxu0 0.0
        %1522 = vmatprep.subr.mxu0 0.0
        %1523 = vmatpush1.msra.mxu0 0.0
        %1524 = vmatprep.subr.mxu0 0.0
        %1525 = vmatpush1.msra.mxu0 0.0
        %1526 = vmatprep.subr.mxu0 0.0
        %1527 = vmatpush1.msra.mxu0 0.0
        %1528 = vmatprep.subr.mxu0 0.0
        %1529 = vmatpush1.msra.mxu0 0.0
        %1530 = vmatprep.subr.mxu0 0.0
        %1531 = vmatpush1.msra.mxu0 0.0
        %1532 = vmatprep.subr.mxu0 0.0
        %1533 = vmatpush1.msra.mxu0 0.0
        %1534 = vmatprep.subr.mxu0 0.0
        %1535 = vmatpush1.msra.mxu0 0.0
        %1536 = vmatprep.subr.mxu0 0.0
        %1537 = vmatpush1.msra.mxu0 0.0
        %1538 = vmatprep.subr.mxu0 0.0
        %1539 = vmatpush1.msra.mxu0 0.0
        %1540 = vmatprep.subr.mxu0 0.0
        %1541 = vmatpush1.msra.mxu0 0.0
        %1542 = vmatprep.subr.mxu0 0.0
        %1543 = vmatpush1.msra.mxu0 0.0
        %1544 = vmatprep.mubr.f32.mxu0 0.0
        %1545 = vmatmul.mubr.f32.gmra.mrb[0].mxu0 %v1346
        %v1546 = vpop.f32.mrb[0].mxu0
        %v1547 = vadd.f32 0.0, %v1546
        %v1548 = vpop.f32.mrb[0].mxu0
        %v1549 = vadd.f32 0.0, %v1548
        %1550 = vmatprep.mubr.f32.mxu0 0.0
        %1551 = vmatmul.mubr.f32.gmra.mrb[0].mxu0 %v1347
        %v1552 = vpop.f32.mrb[0].mxu0
        %v1553 = vadd.f32 0.0, %v1552
        %v1554 = vpop.f32.mrb[0].mxu0
        %v1555 = vadd.f32 0.0, %v1554
        %1556 = vmatprep.mubr.f32.mxu0 0.0
        %1557 = vmatmul.mubr.f32.gmra.mrb[0].mxu0 %v1348
        %v1558 = vpop.f32.mrb[0].mxu0
        %v1559 = vadd.f32 0.0, %v1558
        %v1560 = vpop.f32.mrb[0].mxu0
        %v1561 = vadd.f32 0.0, %v1560
        %1562 = vmatprep.mubr.f32.mxu0 0.0
        %1563 = vmatmul.mubr.f32.gmra.mrb[0].mxu0 %v1349
        %v1564 = vpop.f32.mrb[0].mxu0
        %v1565 = vadd.f32 0.0, %v1564
        %v1566 = vpop.f32.mrb[0].mxu0
        %v1567 = vadd.f32 0.0, %v1566
        %1568 = vmatprep.mubr.f32.mxu0 0.0
        %1569 = vmatmul.mubr.f32.gmra.mrb[0].mxu0 %v1350
        %v1570 = vpop.f32.mrb[0].mxu0
        %v1571 = vadd.f32 0.0, %v1570
        %v1572 = vpop.f32.mrb[0].mxu0
        %v1573 = vadd.f32 0.0, %v1572
        %1574 = vmatprep.mubr.f32.mxu0 0.0
        %1575 = vmatmul.mubr.f32.gmra.mrb[0].mxu0 %v1351
        %v1576 = vpop.f32.mrb[0].mxu0
        %v1577 = vadd.f32 0.0, %v1576
        %v1578 = vpop.f32.mrb[0].mxu0
        %v1579 = vadd.f32 0.0, %v1578
        %1580 = vmatprep.mubr.f32.mxu0 0.0
        %1581 = vmatmul.mubr.f32.gmra.mrb[0].mxu0 %v1352
        %v1582 = vpop.f32.mrb[0].mxu0
        %v1583 = vadd.f32 0.0, %v1582
        %v1584 = vpop.f32.mrb[0].mxu0
        %v1585 = vadd.f32 0.0, %v1584
        %1586 = vmatprep.mubr.f32.mxu0 0.0
        %1587 = vmatmul.mubr.f32.gmra.mrb[0].mxu0 %v1353
        %v1588 = vpop.f32.mrb[0].mxu0
        %v1589 = vadd.f32 0.0, %v1588
        %v1590 = vpop.f32.mrb[0].mxu0
        %v1591 = vadd.f32 0.0, %v1590
        %1592 = vmatprep.mubr.f32.mxu0 0.0
        %1593 = vmatmul.mubr.f32.gmra.mrb[0].mxu0 %v1354
        %v1594 = vpop.f32.mrb[0].mxu0
        %v1595 = vadd.f32 0.0, %v1594
        %v1596 = vpop.f32.mrb[0].mxu0
        %v1597 = vadd.f32 0.0, %v1596
        %1598 = vmatprep.mubr.f32.mxu0 0.0
        %1599 = vmatmul.mubr.f32.gmra.mrb[0].mxu0 %v1355
        %v1600 = vpop.f32.mrb[0].mxu0
        %v1601 = vadd.f32 0.0, %v1600
        %v1602 = vpop.f32.mrb[0].mxu0
        %v1603 = vadd.f32 0.0, %v1602
        %1604 = vmatprep.mubr.f32.mxu0 0.0
        %1605 = vmatmul.mubr.f32.gmra.mrb[0].mxu0 %v1356
        %v1606 = vpop.f32.mrb[0].mxu0
        %v1607 = vadd.f32 0.0, %v1606
        %v1608 = vpop.f32.mrb[0].mxu0
        %v1609 = vadd.f32 0.0, %v1608
        %1610 = vmatprep.mubr.f32.mxu0 0.0
        %1611 = vmatmul.mubr.f32.gmra.mrb[0].mxu0 %v1357
        %v1612 = vpop.f32.mrb[0].mxu0
        %v1613 = vadd.f32 0.0, %v1612
        %v1614 = vpop.f32.mrb[0].mxu0
        %v1615 = vadd.f32 0.0, %v1614
        %1616 = vmatprep.mubr.f32.mxu0 0.0
        %1617 = vmatmul.mubr.f32.gmra.mrb[0].mxu0 %v1358
        %v1618 = vpop.f32.mrb[0].mxu0
        %v1619 = vadd.f32 0.0, %v1618
        %v1620 = vpop.f32.mrb[0].mxu0
        %v1621 = vadd.f32 0.0, %v1620
        %1622 = vmatprep.mubr.f32.mxu0 0.0
        %1623 = vmatmul.mubr.f32.gmra.mrb[0].mxu0 %v1359
        %v1624 = vpop.f32.mrb[0].mxu0
        %v1625 = vadd.f32 0.0, %v1624
        %v1626 = vpop.f32.mrb[0].mxu0
        %v1627 = vadd.f32 0.0, %v1626
        %1628 = vmatprep.mubr.f32.mxu0 0.0
        %1629 = vmatmul.mubr.f32.gmra.mrb[0].mxu0 %v1360
        %v1630 = vpop.f32.mrb[0].mxu0
        %v1631 = vadd.f32 0.0, %v1630
        %v1632 = vpop.f32.mrb[0].mxu0
        %v1633 = vadd.f32 0.0, %v1632
        %1634 = vmatprep.mubr.f32.mxu0 0.0
        %1635 = vmatmul.mubr.f32.gmra.mrb[0].mxu0 %v1361
        %v1636 = vpop.f32.mrb[0].mxu0
        %v1637 = vadd.f32 0.0, %v1636
        %v1638 = vpop.f32.mrb[0].mxu0
        %v1639 = vadd.f32 0.0, %v1638
        %1640 = vdwg.mxu0
        %1641 = vmatprep.subr.mxu0 0.0
        %1642 = vmatpush1.msra.mxu0 %v1434
        %1643 = vmatprep.subr.mxu0 0.0
        %1644 = vmatpush1.msra.mxu0 %v1437
        %1645 = vmatprep.subr.mxu0 0.0
        %1646 = vmatpush1.msra.mxu0 %v1440
        %1647 = vmatprep.subr.mxu0 0.0
        %1648 = vmatpush1.msra.mxu0 %v1443
        %1649 = vmatprep.subr.mxu0 0.0
        %1650 = vmatpush1.msra.mxu0 %v1446
        %1651 = vmatprep.subr.mxu0 0.0
        %1652 = vmatpush1.msra.mxu0 %v1449
        %1653 = vmatprep.subr.mxu0 0.0
        %1654 = vmatpush1.msra.mxu0 %v1452
        %1655 = vmatprep.subr.mxu0 0.0
        %1656 = vmatpush1.msra.mxu0 %v1455
        %1657 = vmatprep.subr.mxu0 0.0
        %1658 = vmatpush1.msra.mxu0 %v1458
        %1659 = vmatprep.subr.mxu0 0.0
        %1660 = vmatpush1.msra.mxu0 %v1461
        %1661 = vmatprep.subr.mxu0 0.0
        %1662 = vmatpush1.msra.mxu0 %v1464
        %1663 = vmatprep.subr.mxu0 0.0
        %1664 = vmatpush1.msra.mxu0 %v1467
        %1665 = vmatprep.subr.mxu0 0.0
        %1666 = vmatpush1.msra.mxu0 %v1470
        %1667 = vmatprep.subr.mxu0 0.0
        %1668 = vmatpush1.msra.mxu0 %v1473
        %1669 = vmatprep.subr.mxu0 0.0
        %1670 = vmatpush1.msra.mxu0 %v1476
        %1671 = vmatprep.subr.mxu0 0.0
        %1672 = vmatpush1.msra.mxu0 %v1479
        %1673 = vmatprep.subr.mxu0 0.0
        %1674 = vmatpush1.msra.mxu0 0.0
        %1675 = vmatprep.subr.mxu0 0.0
        %1676 = vmatpush1.msra.mxu0 0.0
        %1677 = vmatprep.subr.mxu0 0.0
        %1678 = vmatpush1.msra.mxu0 0.0
        %1679 = vmatprep.subr.mxu0 0.0
        %1680 = vmatpush1.msra.mxu0 0.0
        %1681 = vmatprep.subr.mxu0 0.0
        %1682 = vmatpush1.msra.mxu0 0.0
        %1683 = vmatprep.subr.mxu0 0.0
        %1684 = vmatpush1.msra.mxu0 0.0
        %1685 = vmatprep.subr.mxu0 0.0
        %1686 = vmatpush1.msra.mxu0 0.0
        %1687 = vmatprep.subr.mxu0 0.0
        %1688 = vmatpush1.msra.mxu0 0.0
        %1689 = vmatprep.subr.mxu0 0.0
        %1690 = vmatpush1.msra.mxu0 0.0
        %1691 = vmatprep.subr.mxu0 0.0
        %1692 = vmatpush1.msra.mxu0 0.0
        %1693 = vmatprep.subr.mxu0 0.0
        %1694 = vmatpush1.msra.mxu0 0.0
        %1695 = vmatprep.subr.mxu0 0.0
        %1696 = vmatpush1.msra.mxu0 0.0
        %1697 = vmatprep.subr.mxu0 0.0
        %1698 = vmatpush1.msra.mxu0 0.0
        %1699 = vmatprep.subr.mxu0 0.0
        %1700 = vmatpush1.msra.mxu0 0.0
        %1701 = vmatprep.subr.mxu0 0.0
        %1702 = vmatpush1.msra.mxu0 0.0
        %1703 = vmatprep.subr.mxu0 0.0
        %1704 = vmatpush1.msra.mxu0 0.0
        %1705 = vmatprep.mubr.f32.mxu0 0.0
        %1706 = vmatmul.mubr.f32.gmra.mrb[0].mxu0 %v1346
        %v1707 = vpop.f32.mrb[0].mxu0
        %v1708 = vadd.f32 0.0, %v1707
        %v1709 = vpop.f32.mrb[0].mxu0
        %1710 = vmatprep.mubr.f32.mxu0 0.0
        %1711 = vmatmul.mubr.f32.gmra.mrb[0].mxu0 %v1347
        %v1712 = vpop.f32.mrb[0].mxu0
        %v1713 = vadd.f32 0.0, %v1712
        %v1714 = vpop.f32.mrb[0].mxu0
        %1715 = vmatprep.mubr.f32.mxu0 0.0
        %1716 = vmatmul.mubr.f32.gmra.mrb[0].mxu0 %v1348
        %v1717 = vpop.f32.mrb[0].mxu0
        %v1718 = vadd.f32 0.0, %v1717
        %v1719 = vpop.f32.mrb[0].mxu0
        %1720 = vmatprep.mubr.f32.mxu0 0.0
        %1721 = vmatmul.mubr.f32.gmra.mrb[0].mxu0 %v1349
        %v1722 = vpop.f32.mrb[0].mxu0
        %v1723 = vadd.f32 0.0, %v1722
        %v1724 = vpop.f32.mrb[0].mxu0
        %1725 = vmatprep.mubr.f32.mxu0 0.0
        %1726 = vmatmul.mubr.f32.gmra.mrb[0].mxu0 %v1350
        %v1727 = vpop.f32.mrb[0].mxu0
        %v1728 = vadd.f32 0.0, %v1727
        %v1729 = vpop.f32.mrb[0].mxu0
        %1730 = vmatprep.mubr.f32.mxu0 0.0
        %1731 = vmatmul.mubr.f32.gmra.mrb[0].mxu0 %v1351
        %v1732 = vpop.f32.mrb[0].mxu0
        %v1733 = vadd.f32 0.0, %v1732
        %v1734 = vpop.f32.mrb[0].mxu0
        %1735 = vmatprep.mubr.f32.mxu0 0.0
        %1736 = vmatmul.mubr.f32.gmra.mrb[0].mxu0 %v1352
        %v1737 = vpop.f32.mrb[0].mxu0
        %v1738 = vadd.f32 0.0, %v1737
        %v1739 = vpop.f32.mrb[0].mxu0
        %1740 = vmatprep.mubr.f32.mxu0 0.0
        %1741 = vmatmul.mubr.f32.gmra.mrb[0].mxu0 %v1353
        %v1742 = vpop.f32.mrb[0].mxu0
        %v1743 = vadd.f32 0.0, %v1742
        %v1744 = vpop.f32.mrb[0].mxu0
        %1745 = vmatprep.mubr.f32.mxu0 0.0
        %1746 = vmatmul.mubr.f32.gmra.mrb[0].mxu0 %v1354
        %v1747 = vpop.f32.mrb[0].mxu0
        %v1748 = vadd.f32 0.0, %v1747
        %v1749 = vpop.f32.mrb[0].mxu0
        %1750 = vmatprep.mubr.f32.mxu0 0.0
        %1751 = vmatmul.mubr.f32.gmra.mrb[0].mxu0 %v1355
        %v1752 = vpop.f32.mrb[0].mxu0
        %v1753 = vadd.f32 0.0, %v1752
        %v1754 = vpop.f32.mrb[0].mxu0
        %1755 = vmatprep.mubr.f32.mxu0 0.0
        %1756 = vmatmul.mubr.f32.gmra.mrb[0].mxu0 %v1356
        %v1757 = vpop.f32.mrb[0].mxu0
        %v1758 = vadd.f32 0.0, %v1757
        %v1759 = vpop.f32.mrb[0].mxu0
        %1760 = vmatprep.mubr.f32.mxu0 0.0
        %1761 = vmatmul.mubr.f32.gmra.mrb[0].mxu0 %v1357
        %v1762 = vpop.f32.mrb[0].mxu0
        %v1763 = vadd.f32 0.0, %v1762
        %v1764 = vpop.f32.mrb[0].mxu0
        %1765 = vmatprep.mubr.f32.mxu0 0.0
        %1766 = vmatmul.mubr.f32.gmra.mrb[0].mxu0 %v1358
        %v1767 = vpop.f32.mrb[0].mxu0
        %v1768 = vadd.f32 0.0, %v1767
        %v1769 = vpop.f32.mrb[0].mxu0
        %1770 = vmatprep.mubr.f32.mxu0 0.0
        %1771 = vmatmul.mubr.f32.gmra.mrb[0].mxu0 %v1359
        %v1772 = vpop.f32.mrb[0].mxu0
        %v1773 = vadd.f32 0.0, %v1772
        %v1774 = vpop.f32.mrb[0].mxu0
        %1775 = vmatprep.mubr.f32.mxu0 0.0
        %1776 = vmatmul.mubr.f32.gmra.mrb[0].mxu0 %v1360
        %v1777 = vpop.f32.mrb[0].mxu0
        %v1778 = vadd.f32 0.0, %v1777
        %v1779 = vpop.f32.mrb[0].mxu0
        %1780 = vmatprep.mubr.f32.mxu0 0.0
        %1781 = vmatmul.mubr.f32.gmra.mrb[0].mxu0 %v1361
        %v1782 = vpop.f32.mrb[0].mxu0
        %v1783 = vadd.f32 0.0, %v1782
        %v1784 = vpop.f32.mrb[0].mxu0
        %1785 = vdwg.mxu0
        %v1786 = vld [vmem:[#allocation7] sm:$0xff]
        %v1787 = vld [vmem:[#allocation7 + $0x8] sm:$0xff]
        %v1788 = vld [vmem:[#allocation7 + $0x10] sm:$0xff]
        %v1789 = vld [vmem:[#allocation7 + $0x18] sm:$0xff]
        %v1790 = vld [vmem:[#allocation7 + $0x20] sm:$0xff]
        %v1791 = vld [vmem:[#allocation7 + $0x28] sm:$0xff]
        %v1792 = vld [vmem:[#allocation7 + $0x30] sm:$0xff]
        %v1793 = vld [vmem:[#allocation7 + $0x38] sm:$0xff]
        %v1794 = vld [vmem:[#allocation7 + $0x40] sm:$0xff]
        %v1795 = vld [vmem:[#allocation7 + $0x48] sm:$0xff]
        %v1796 = vld [vmem:[#allocation7 + $0x50] sm:$0xff]
        %v1797 = vld [vmem:[#allocation7 + $0x58] sm:$0xff]
        %v1798 = vld [vmem:[#allocation7 + $0x60] sm:$0xff]
        %v1799 = vld [vmem:[#allocation7 + $0x68] sm:$0xff]
        %v1800 = vld [vmem:[#allocation7 + $0x70] sm:$0xff]
        %v1801 = vld [vmem:[#allocation7 + $0x78] sm:$0xff]
        %v1802 = vld [vmem:[#allocation7 + $0x80] sm:$0xff]
        %v1803 = vld [vmem:[#allocation7 + $0x88] sm:$0xff]
        %v1804 = vld [vmem:[#allocation7 + $0x90] sm:$0xff]
        %v1805 = vld [vmem:[#allocation7 + $0x98] sm:$0xff]
        %v1806 = vld [vmem:[#allocation7 + $0xa0] sm:$0xff]
        %v1807 = vld [vmem:[#allocation7 + $0xa8] sm:$0xff]
        %v1808 = vld [vmem:[#allocation7 + $0xb0] sm:$0xff]
        %v1809 = vld [vmem:[#allocation7 + $0xb8] sm:$0xff]
        %v1810 = vld [vmem:[#allocation7 + $0xc0] sm:$0xff]
        %v1811 = vld [vmem:[#allocation7 + $0xc8] sm:$0xff]
        %v1812 = vld [vmem:[#allocation7 + $0xd0] sm:$0xff]
        %v1813 = vld [vmem:[#allocation7 + $0xd8] sm:$0xff]
        %v1814 = vld [vmem:[#allocation7 + $0xe0] sm:$0xff]
        %v1815 = vld [vmem:[#allocation7 + $0xe8] sm:$0xff]
        %v1816 = vld [vmem:[#allocation7 + $0xf0] sm:$0xff]
        %v1817 = vld [vmem:[#allocation7 + $0xf8] sm:$0xff]
        %v1818 = vld [vmem:[#allocation7 + $0x100] sm:$0xff]
        %v1819 = vld [vmem:[#allocation7 + $0x108] sm:$0xff]
        %v1820 = vld [vmem:[#allocation7 + $0x110] sm:$0xff]
        %v1821 = vld [vmem:[#allocation7 + $0x118] sm:$0xff]
        %v1822 = vld [vmem:[#allocation7 + $0x120] sm:$0xff]
        %v1823 = vld [vmem:[#allocation7 + $0x128] sm:$0xff]
        %v1824 = vld [vmem:[#allocation7 + $0x130] sm:$0xff]
        %v1825 = vld [vmem:[#allocation7 + $0x138] sm:$0xff]
        %v1826 = vld [vmem:[#allocation7 + $0x140] sm:$0xff]
        %v1827 = vld [vmem:[#allocation7 + $0x148] sm:$0xff]
        %v1828 = vld [vmem:[#allocation7 + $0x150] sm:$0xff]
        %v1829 = vld [vmem:[#allocation7 + $0x158] sm:$0xff]
        %v1830 = vld [vmem:[#allocation7 + $0x160] sm:$0xff]
        %v1831 = vld [vmem:[#allocation7 + $0x168] sm:$0xff]
        %v1832 = vld [vmem:[#allocation7 + $0x170] sm:$0xff]
        %v1833 = vld [vmem:[#allocation7 + $0x178] sm:$0xff]
        %1834 = vmatprep.subr.mxu0 %v1787
        %1835 = vmatpush1.msra.mxu0 %v1786
        %1836 = vmatprep.subr.mxu0 %v1790
        %1837 = vmatpush1.msra.mxu0 %v1789
        %1838 = vmatprep.subr.mxu0 %v1793
        %1839 = vmatpush1.msra.mxu0 %v1792
        %1840 = vmatprep.subr.mxu0 %v1796
        %1841 = vmatpush1.msra.mxu0 %v1795
        %1842 = vmatprep.subr.mxu0 %v1799
        %1843 = vmatpush1.msra.mxu0 %v1798
        %1844 = vmatprep.subr.mxu0 %v1802
        %1845 = vmatpush1.msra.mxu0 %v1801
        %1846 = vmatprep.subr.mxu0 %v1805
        %1847 = vmatpush1.msra.mxu0 %v1804
        %1848 = vmatprep.subr.mxu0 %v1808
        %1849 = vmatpush1.msra.mxu0 %v1807
        %1850 = vmatprep.subr.mxu0 %v1811
        %1851 = vmatpush1.msra.mxu0 %v1810
        %1852 = vmatprep.subr.mxu0 %v1814
        %1853 = vmatpush1.msra.mxu0 %v1813
        %1854 = vmatprep.subr.mxu0 %v1817
        %1855 = vmatpush1.msra.mxu0 %v1816
        %1856 = vmatprep.subr.mxu0 %v1820
        %1857 = vmatpush1.msra.mxu0 %v1819
        %1858 = vmatprep.subr.mxu0 %v1823
        %1859 = vmatpush1.msra.mxu0 %v1822
        %1860 = vmatprep.subr.mxu0 %v1826
        %1861 = vmatpush1.msra.mxu0 %v1825
        %1862 = vmatprep.subr.mxu0 %v1829
        %1863 = vmatpush1.msra.mxu0 %v1828
        %1864 = vmatprep.subr.mxu0 %v1832
        %1865 = vmatpush1.msra.mxu0 %v1831
        %1866 = vmatprep.subr.mxu0 0.0
        %1867 = vmatpush1.msra.mxu0 0.0
        %1868 = vmatprep.subr.mxu0 0.0
        %1869 = vmatpush1.msra.mxu0 0.0
        %1870 = vmatprep.subr.mxu0 0.0
        %1871 = vmatpush1.msra.mxu0 0.0
        %1872 = vmatprep.subr.mxu0 0.0
        %1873 = vmatpush1.msra.mxu0 0.0
        %1874 = vmatprep.subr.mxu0 0.0
        %1875 = vmatpush1.msra.mxu0 0.0
        %1876 = vmatprep.subr.mxu0 0.0
        %1877 = vmatpush1.msra.mxu0 0.0
        %1878 = vmatprep.subr.mxu0 0.0
        %1879 = vmatpush1.msra.mxu0 0.0
        %1880 = vmatprep.subr.mxu0 0.0
        %1881 = vmatpush1.msra.mxu0 0.0
        %1882 = vmatprep.subr.mxu0 0.0
        %1883 = vmatpush1.msra.mxu0 0.0
        %1884 = vmatprep.subr.mxu0 0.0
        %1885 = vmatpush1.msra.mxu0 0.0
        %1886 = vmatprep.subr.mxu0 0.0
        %1887 = vmatpush1.msra.mxu0 0.0
        %1888 = vmatprep.subr.mxu0 0.0
        %1889 = vmatpush1.msra.mxu0 0.0
        %1890 = vmatprep.subr.mxu0 0.0
        %1891 = vmatpush1.msra.mxu0 0.0
        %1892 = vmatprep.subr.mxu0 0.0
        %1893 = vmatpush1.msra.mxu0 0.0
        %1894 = vmatprep.subr.mxu0 0.0
        %1895 = vmatpush1.msra.mxu0 0.0
        %1896 = vmatprep.subr.mxu0 0.0
        %1897 = vmatpush1.msra.mxu0 0.0
        %1898 = vmatprep.mubr.f32.mxu0 0.0
        %1899 = vmatmul.mubr.f32.gmra.mrb[0].mxu0 %v1346
        %v1900 = vpop.f32.mrb[0].mxu0
        %v1901 = vadd.f32 0.0, %v1900
        %v1902 = vpop.f32.mrb[0].mxu0
        %v1903 = vadd.f32 0.0, %v1902
        %1904 = vmatprep.mubr.f32.mxu0 0.0
        %1905 = vmatmul.mubr.f32.gmra.mrb[0].mxu0 %v1347
        %v1906 = vpop.f32.mrb[0].mxu0
        %v1907 = vadd.f32 0.0, %v1906
        %v1908 = vpop.f32.mrb[0].mxu0
        %v1909 = vadd.f32 0.0, %v1908
        %1910 = vmatprep.mubr.f32.mxu0 0.0
        %1911 = vmatmul.mubr.f32.gmra.mrb[0].mxu0 %v1348
        %v1912 = vpop.f32.mrb[0].mxu0
        %v1913 = vadd.f32 0.0, %v1912
        %v1914 = vpop.f32.mrb[0].mxu0
        %v1915 = vadd.f32 0.0, %v1914
        %1916 = vmatprep.mubr.f32.mxu0 0.0
        %1917 = vmatmul.mubr.f32.gmra.mrb[0].mxu0 %v1349
        %v1918 = vpop.f32.mrb[0].mxu0
        %v1919 = vadd.f32 0.0, %v1918
        %v1920 = vpop.f32.mrb[0].mxu0
        %v1921 = vadd.f32 0.0, %v1920
        %1922 = vmatprep.mubr.f32.mxu0 0.0
        %1923 = vmatmul.mubr.f32.gmra.mrb[0].mxu0 %v1350
        %v1924 = vpop.f32.mrb[0].mxu0
        %v1925 = vadd.f32 0.0, %v1924
        %v1926 = vpop.f32.mrb[0].mxu0
        %v1927 = vadd.f32 0.0, %v1926
        %1928 = vmatprep.mubr.f32.mxu0 0.0
        %1929 = vmatmul.mubr.f32.gmra.mrb[0].mxu0 %v1351
        %v1930 = vpop.f32.mrb[0].mxu0
        %v1931 = vadd.f32 0.0, %v1930
        %v1932 = vpop.f32.mrb[0].mxu0
        %v1933 = vadd.f32 0.0, %v1932
        %1934 = vmatprep.mubr.f32.mxu0 0.0
        %1935 = vmatmul.mubr.f32.gmra.mrb[0].mxu0 %v1352
        %v1936 = vpop.f32.mrb[0].mxu0
        %v1937 = vadd.f32 0.0, %v1936
        %v1938 = vpop.f32.mrb[0].mxu0
        %v1939 = vadd.f32 0.0, %v1938
        %1940 = vmatprep.mubr.f32.mxu0 0.0
        %1941 = vmatmul.mubr.f32.gmra.mrb[0].mxu0 %v1353
        %v1942 = vpop.f32.mrb[0].mxu0
        %v1943 = vadd.f32 0.0, %v1942
        %v1944 = vpop.f32.mrb[0].mxu0
        %v1945 = vadd.f32 0.0, %v1944
        %1946 = vmatprep.mubr.f32.mxu0 0.0
        %1947 = vmatmul.mubr.f32.gmra.mrb[0].mxu0 %v1354
        %v1948 = vpop.f32.mrb[0].mxu0
        %v1949 = vadd.f32 0.0, %v1948
        %v1950 = vpop.f32.mrb[0].mxu0
        %v1951 = vadd.f32 0.0, %v1950
        %1952 = vmatprep.mubr.f32.mxu0 0.0
        %1953 = vmatmul.mubr.f32.gmra.mrb[0].mxu0 %v1355
        %v1954 = vpop.f32.mrb[0].mxu0
        %v1955 = vadd.f32 0.0, %v1954
        %v1956 = vpop.f32.mrb[0].mxu0
        %v1957 = vadd.f32 0.0, %v1956
        %1958 = vmatprep.mubr.f32.mxu0 0.0
        %1959 = vmatmul.mubr.f32.gmra.mrb[0].mxu0 %v1356
        %v1960 = vpop.f32.mrb[0].mxu0
        %v1961 = vadd.f32 0.0, %v1960
        %v1962 = vpop.f32.mrb[0].mxu0
        %v1963 = vadd.f32 0.0, %v1962
        %1964 = vmatprep.mubr.f32.mxu0 0.0
        %1965 = vmatmul.mubr.f32.gmra.mrb[0].mxu0 %v1357
        %v1966 = vpop.f32.mrb[0].mxu0
        %v1967 = vadd.f32 0.0, %v1966
        %v1968 = vpop.f32.mrb[0].mxu0
        %v1969 = vadd.f32 0.0, %v1968
        %1970 = vmatprep.mubr.f32.mxu0 0.0
        %1971 = vmatmul.mubr.f32.gmra.mrb[0].mxu0 %v1358
        %v1972 = vpop.f32.mrb[0].mxu0
        %v1973 = vadd.f32 0.0, %v1972
        %v1974 = vpop.f32.mrb[0].mxu0
        %v1975 = vadd.f32 0.0, %v1974
        %1976 = vmatprep.mubr.f32.mxu0 0.0
        %1977 = vmatmul.mubr.f32.gmra.mrb[0].mxu0 %v1359
        %v1978 = vpop.f32.mrb[0].mxu0
        %v1979 = vadd.f32 0.0, %v1978
        %v1980 = vpop.f32.mrb[0].mxu0
        %v1981 = vadd.f32 0.0, %v1980
        %1982 = vmatprep.mubr.f32.mxu0 0.0
        %1983 = vmatmul.mubr.f32.gmra.mrb[0].mxu0 %v1360
        %v1984 = vpop.f32.mrb[0].mxu0
        %v1985 = vadd.f32 0.0, %v1984
        %v1986 = vpop.f32.mrb[0].mxu0
        %v1987 = vadd.f32 0.0, %v1986
        %1988 = vmatprep.mubr.f32.mxu0 0.0
        %1989 = vmatmul.mubr.f32.gmra.mrb[0].mxu0 %v1361
        %v1990 = vpop.f32.mrb[0].mxu0
        %v1991 = vadd.f32 0.0, %v1990
        %v1992 = vpop.f32.mrb[0].mxu0
        %v1993 = vadd.f32 0.0, %v1992
        %1994 = vdwg.mxu0
        %1995 = vmatprep.subr.mxu0 0.0
        %1996 = vmatpush1.msra.mxu0 %v1788
        %1997 = vmatprep.subr.mxu0 0.0
        %1998 = vmatpush1.msra.mxu0 %v1791
        %1999 = vmatprep.subr.mxu0 0.0
        %2000 = vmatpush1.msra.mxu0 %v1794
        %2001 = vmatprep.subr.mxu0 0.0
        %2002 = vmatpush1.msra.mxu0 %v1797
        %2003 = vmatprep.subr.mxu0 0.0
        %2004 = vmatpush1.msra.mxu0 %v1800
        %2005 = vmatprep.subr.mxu0 0.0
        %2006 = vmatpush1.msra.mxu0 %v1803
        %2007 = vmatprep.subr.mxu0 0.0
        %2008 = vmatpush1.msra.mxu0 %v1806
        %2009 = vmatprep.subr.mxu0 0.0
        %2010 = vmatpush1.msra.mxu0 %v1809
        %2011 = vmatprep.subr.mxu0 0.0
        %2012 = vmatpush1.msra.mxu0 %v1812
        %2013 = vmatprep.subr.mxu0 0.0
        %2014 = vmatpush1.msra.mxu0 %v1815
        %2015 = vmatprep.subr.mxu0 0.0
        %2016 = vmatpush1.msra.mxu0 %v1818
        %2017 = vmatprep.subr.mxu0 0.0
        %2018 = vmatpush1.msra.mxu0 %v1821
        %2019 = vmatprep.subr.mxu0 0.0
        %2020 = vmatpush1.msra.mxu0 %v1824
        %2021 = vmatprep.subr.mxu0 0.0
        %2022 = vmatpush1.msra.mxu0 %v1827
        %2023 = vmatprep.subr.mxu0 0.0
        %2024 = vmatpush1.msra.mxu0 %v1830
        %2025 = vmatprep.subr.mxu0 0.0
        %2026 = vmatpush1.msra.mxu0 %v1833
        %2027 = vmatprep.subr.mxu0 0.0
        %2028 = vmatpush1.msra.mxu0 0.0
        %2029 = vmatprep.subr.mxu0 0.0
        %2030 = vmatpush1.msra.mxu0 0.0
        %2031 = vmatprep.subr.mxu0 0.0
        %2032 = vmatpush1.msra.mxu0 0.0
        %2033 = vmatprep.subr.mxu0 0.0
        %2034 = vmatpush1.msra.mxu0 0.0
        %2035 = vmatprep.subr.mxu0 0.0
        %2036 = vmatpush1.msra.mxu0 0.0
        %2037 = vmatprep.subr.mxu0 0.0
        %2038 = vmatpush1.msra.mxu0 0.0
        %2039 = vmatprep.subr.mxu0 0.0
        %2040 = vmatpush1.msra.mxu0 0.0
        %2041 = vmatprep.subr.mxu0 0.0
        %2042 = vmatpush1.msra.mxu0 0.0
        %2043 = vmatprep.subr.mxu0 0.0
        %2044 = vmatpush1.msra.mxu0 0.0
        %2045 = vmatprep.subr.mxu0 0.0
        %2046 = vmatpush1.msra.mxu0 0.0
        %2047 = vmatprep.subr.mxu0 0.0
        %2048 = vmatpush1.msra.mxu0 0.0
        %2049 = vmatprep.subr.mxu0 0.0
        %2050 = vmatpush1.msra.mxu0 0.0
        %2051 = vmatprep.subr.mxu0 0.0
        %2052 = vmatpush1.msra.mxu0 0.0
        %2053 = vmatprep.subr.mxu0 0.0
        %2054 = vmatpush1.msra.mxu0 0.0
        %2055 = vmatprep.subr.mxu0 0.0
        %2056 = vmatpush1.msra.mxu0 0.0
        %2057 = vmatprep.subr.mxu0 0.0
        %2058 = vmatpush1.msra.mxu0 0.0
        %2059 = vmatprep.mubr.f32.mxu0 0.0
        %2060 = vmatmul.mubr.f32.gmra.mrb[0].mxu0 %v1346
        %v2061 = vpop.f32.mrb[0].mxu0
        %v2062 = vadd.f32 0.0, %v2061
        %v2063 = vpop.f32.mrb[0].mxu0
        %2064 = vmatprep.mubr.f32.mxu0 0.0
        %2065 = vmatmul.mubr.f32.gmra.mrb[0].mxu0 %v1347
        %v2066 = vpop.f32.mrb[0].mxu0
        %v2067 = vadd.f32 0.0, %v2066
        %v2068 = vpop.f32.mrb[0].mxu0
        %2069 = vmatprep.mubr.f32.mxu0 0.0
        %2070 = vmatmul.mubr.f32.gmra.mrb[0].mxu0 %v1348
        %v2071 = vpop.f32.mrb[0].mxu0
        %v2072 = vadd.f32 0.0, %v2071
        %v2073 = vpop.f32.mrb[0].mxu0
        %2074 = vmatprep.mubr.f32.mxu0 0.0
        %2075 = vmatmul.mubr.f32.gmra.mrb[0].mxu0 %v1349
        %v2076 = vpop.f32.mrb[0].mxu0
        %v2077 = vadd.f32 0.0, %v2076
        %v2078 = vpop.f32.mrb[0].mxu0
        %2079 = vmatprep.mubr.f32.mxu0 0.0
        %2080 = vmatmul.mubr.f32.gmra.mrb[0].mxu0 %v1350
        %v2081 = vpop.f32.mrb[0].mxu0
        %v2082 = vadd.f32 0.0, %v2081
        %v2083 = vpop.f32.mrb[0].mxu0
        %2084 = vmatprep.mubr.f32.mxu0 0.0
        %2085 = vmatmul.mubr.f32.gmra.mrb[0].mxu0 %v1351
        %v2086 = vpop.f32.mrb[0].mxu0
        %v2087 = vadd.f32 0.0, %v2086
        %v2088 = vpop.f32.mrb[0].mxu0
        %2089 = vmatprep.mubr.f32.mxu0 0.0
        %2090 = vmatmul.mubr.f32.gmra.mrb[0].mxu0 %v1352
        %v2091 = vpop.f32.mrb[0].mxu0
        %v2092 = vadd.f32 0.0, %v2091
        %v2093 = vpop.f32.mrb[0].mxu0
        %2094 = vmatprep.mubr.f32.mxu0 0.0
        %2095 = vmatmul.mubr.f32.gmra.mrb[0].mxu0 %v1353
        %v2096 = vpop.f32.mrb[0].mxu0
        %v2097 = vadd.f32 0.0, %v2096
        %v2098 = vpop.f32.mrb[0].mxu0
        %2099 = vmatprep.mubr.f32.mxu0 0.0
        %2100 = vmatmul.mubr.f32.gmra.mrb[0].mxu0 %v1354
        %v2101 = vpop.f32.mrb[0].mxu0
        %v2102 = vadd.f32 0.0, %v2101
        %v2103 = vpop.f32.mrb[0].mxu0
        %2104 = vmatprep.mubr.f32.mxu0 0.0
        %2105 = vmatmul.mubr.f32.gmra.mrb[0].mxu0 %v1355
        %v2106 = vpop.f32.mrb[0].mxu0
        %v2107 = vadd.f32 0.0, %v2106
        %v2108 = vpop.f32.mrb[0].mxu0
        %2109 = vmatprep.mubr.f32.mxu0 0.0
        %2110 = vmatmul.mubr.f32.gmra.mrb[0].mxu0 %v1356
        %v2111 = vpop.f32.mrb[0].mxu0
        %v2112 = vadd.f32 0.0, %v2111
        %v2113 = vpop.f32.mrb[0].mxu0
        %2114 = vmatprep.mubr.f32.mxu0 0.0
        %2115 = vmatmul.mubr.f32.gmra.mrb[0].mxu0 %v1357
        %v2116 = vpop.f32.mrb[0].mxu0
        %v2117 = vadd.f32 0.0, %v2116
        %v2118 = vpop.f32.mrb[0].mxu0
        %2119 = vmatprep.mubr.f32.mxu0 0.0
        %2120 = vmatmul.mubr.f32.gmra.mrb[0].mxu0 %v1358
        %v2121 = vpop.f32.mrb[0].mxu0
        %v2122 = vadd.f32 0.0, %v2121
        %v2123 = vpop.f32.mrb[0].mxu0
        %2124 = vmatprep.mubr.f32.mxu0 0.0
        %2125 = vmatmul.mubr.f32.gmra.mrb[0].mxu0 %v1359
        %v2126 = vpop.f32.mrb[0].mxu0
        %v2127 = vadd.f32 0.0, %v2126
        %v2128 = vpop.f32.mrb[0].mxu0
        %2129 = vmatprep.mubr.f32.mxu0 0.0
        %2130 = vmatmul.mubr.f32.gmra.mrb[0].mxu0 %v1360
        %v2131 = vpop.f32.mrb[0].mxu0
        %v2132 = vadd.f32 0.0, %v2131
        %v2133 = vpop.f32.mrb[0].mxu0
        %2134 = vmatprep.mubr.f32.mxu0 0.0
        %2135 = vmatmul.mubr.f32.gmra.mrb[0].mxu0 %v1361
        %v2136 = vpop.f32.mrb[0].mxu0
        %v2137 = vadd.f32 0.0, %v2136
        %v2138 = vpop.f32.mrb[0].mxu0
        %2139 = vdwg.mxu0
        %v2140 = vld [vmem:[%s448] sm:$0xff]
        %v2141 = vld [vmem:[%s448 + $0x8] sm:$0xff]
        %v2142 = vld [vmem:[%s448 + $0x10] sm:$0xff]
        %v2143 = vld [vmem:[%s448 + $0x18] sm:$0xff]
        %v2144 = vld [vmem:[%s448 + $0x20] sm:$0xff]
        %v2145 = vld [vmem:[%s448 + $0x28] sm:$0xff]
        %v2146 = vld [vmem:[%s448 + $0x30] sm:$0xff]
        %v2147 = vld [vmem:[%s448 + $0x38] sm:$0xff]
        %v2148 = vld [vmem:[%s448 + $0x40] sm:$0xff]
        %v2149 = vld [vmem:[%s448 + $0x48] sm:$0xff]
        %v2150 = vld [vmem:[%s448 + $0x50] sm:$0xff]
        %v2151 = vld [vmem:[%s448 + $0x58] sm:$0xff]
        %v2152 = vld [vmem:[%s448 + $0x60] sm:$0xff]
        %v2153 = vld [vmem:[%s448 + $0x68] sm:$0xff]
        %v2154 = vld [vmem:[%s448 + $0x70] sm:$0xff]
        %v2155 = vld [vmem:[%s448 + $0x78] sm:$0xff]
        %v2156 = vld [vmem:[%s448 + $0x80] sm:$0xff]
        %v2157 = vld [vmem:[%s448 + $0x88] sm:$0xff]
        %v2158 = vld [vmem:[%s448 + $0x90] sm:$0xff]
        %v2159 = vld [vmem:[%s448 + $0x98] sm:$0xff]
        %v2160 = vld [vmem:[%s448 + $0xa0] sm:$0xff]
        %v2161 = vld [vmem:[%s448 + $0xa8] sm:$0xff]
        %v2162 = vld [vmem:[%s448 + $0xb0] sm:$0xff]
        %v2163 = vld [vmem:[%s448 + $0xb8] sm:$0xff]
        %v2164 = vld [vmem:[%s448 + $0xc0] sm:$0xff]
        %v2165 = vld [vmem:[%s448 + $0xc8] sm:$0xff]
        %v2166 = vld [vmem:[%s448 + $0xd0] sm:$0xff]
        %v2167 = vld [vmem:[%s448 + $0xd8] sm:$0xff]
        %v2168 = vld [vmem:[%s448 + $0xe0] sm:$0xff]
        %v2169 = vld [vmem:[%s448 + $0xe8] sm:$0xff]
        %v2170 = vld [vmem:[%s448 + $0xf0] sm:$0xff]
        %v2171 = vld [vmem:[%s448 + $0xf8] sm:$0xff]
        %v2172 = vld [vmem:[%s448 + $0x100] sm:$0xff]
        %v2173 = vld [vmem:[%s448 + $0x108] sm:$0xff]
        %v2174 = vld [vmem:[%s448 + $0x110] sm:$0xff]
        %v2175 = vld [vmem:[%s448 + $0x118] sm:$0xff]
        %v2176 = vld [vmem:[%s448 + $0x120] sm:$0xff]
        %v2177 = vld [vmem:[%s448 + $0x128] sm:$0xff]
        %v2178 = vld [vmem:[%s448 + $0x130] sm:$0xff]
        %v2179 = vld [vmem:[%s448 + $0x138] sm:$0xff]
        %v2180 = vld [vmem:[%s448 + $0x140] sm:$0xff]
        %v2181 = vld [vmem:[%s448 + $0x148] sm:$0xff]
        %v2182 = vld [vmem:[%s448 + $0x150] sm:$0xff]
        %v2183 = vld [vmem:[%s448 + $0x158] sm:$0xff]
        %v2184 = vld [vmem:[%s448 + $0x160] sm:$0xff]
        %v2185 = vld [vmem:[%s448 + $0x168] sm:$0xff]
        %v2186 = vld [vmem:[%s448 + $0x170] sm:$0xff]
        %v2187 = vld [vmem:[%s448 + $0x178] sm:$0xff]
        %v2188 = vmul.f32 %v2140, %v1547
        %v2189 = vmul.f32 %v2141, %v1549
        %v2190 = vmul.f32 %v2142, %v1708
        %v2191 = vmul.f32 %v2143, %v1553
        %v2192 = vmul.f32 %v2144, %v1555
        %v2193 = vmul.f32 %v2145, %v1713
        %v2194 = vmul.f32 %v2146, %v1559
        %v2195 = vmul.f32 %v2147, %v1561
        %v2196 = vmul.f32 %v2148, %v1718
        %v2197 = vmul.f32 %v2149, %v1565
        %v2198 = vmul.f32 %v2150, %v1567
        %v2199 = vmul.f32 %v2151, %v1723
        %v2200 = vmul.f32 %v2152, %v1571
        %v2201 = vmul.f32 %v2153, %v1573
        %v2202 = vmul.f32 %v2154, %v1728
        %v2203 = vmul.f32 %v2155, %v1577
        %v2204 = vmul.f32 %v2156, %v1579
        %v2205 = vmul.f32 %v2157, %v1733
        %v2206 = vmul.f32 %v2158, %v1583
        %v2207 = vmul.f32 %v2159, %v1585
        %v2208 = vmul.f32 %v2160, %v1738
        %v2209 = vmul.f32 %v2161, %v1589
        %v2210 = vmul.f32 %v2162, %v1591
        %v2211 = vmul.f32 %v2163, %v1743
        %v2212 = vmul.f32 %v2164, %v1595
        %v2213 = vmul.f32 %v2165, %v1597
        %v2214 = vmul.f32 %v2166, %v1748
        %v2215 = vmul.f32 %v2167, %v1601
        %v2216 = vmul.f32 %v2168, %v1603
        %v2217 = vmul.f32 %v2169, %v1753
        %v2218 = vmul.f32 %v2170, %v1607
        %v2219 = vmul.f32 %v2171, %v1609
        %v2220 = vmul.f32 %v2172, %v1758
        %v2221 = vmul.f32 %v2173, %v1613
        %v2222 = vmul.f32 %v2174, %v1615
        %v2223 = vmul.f32 %v2175, %v1763
        %v2224 = vmul.f32 %v2176, %v1619
        %v2225 = vmul.f32 %v2177, %v1621
        %v2226 = vmul.f32 %v2178, %v1768
        %v2227 = vmul.f32 %v2179, %v1625
        %v2228 = vmul.f32 %v2180, %v1627
        %v2229 = vmul.f32 %v2181, %v1773
        %v2230 = vmul.f32 %v2182, %v1631
        %v2231 = vmul.f32 %v2183, %v1633
        %v2232 = vmul.f32 %v2184, %v1778
        %v2233 = vmul.f32 %v2185, %v1637
        %v2234 = vmul.f32 %v2186, %v1639
        %v2235 = vmul.f32 %v2187, %v1783
        %v2236 = vld [vmem:[%s454] sm:$0xff]
        %v2237 = vld [vmem:[%s454 + $0x8] sm:$0xff]
        %v2238 = vld [vmem:[%s454 + $0x10] sm:$0xff]
        %v2239 = vld [vmem:[%s454 + $0x18] sm:$0xff]
        %v2240 = vld [vmem:[%s454 + $0x20] sm:$0xff]
        %v2241 = vld [vmem:[%s454 + $0x28] sm:$0xff]
        %v2242 = vld [vmem:[%s454 + $0x30] sm:$0xff]
        %v2243 = vld [vmem:[%s454 + $0x38] sm:$0xff]
        %v2244 = vld [vmem:[%s454 + $0x40] sm:$0xff]
        %v2245 = vld [vmem:[%s454 + $0x48] sm:$0xff]
        %v2246 = vld [vmem:[%s454 + $0x50] sm:$0xff]
        %v2247 = vld [vmem:[%s454 + $0x58] sm:$0xff]
        %v2248 = vld [vmem:[%s454 + $0x60] sm:$0xff]
        %v2249 = vld [vmem:[%s454 + $0x68] sm:$0xff]
        %v2250 = vld [vmem:[%s454 + $0x70] sm:$0xff]
        %v2251 = vld [vmem:[%s454 + $0x78] sm:$0xff]
        %2253 = vset.pattern.permute.xlu0 0
        %2254 = vperm.xlu0 %2253, %v2236
        %v2255 = vpop.permute.xlu0 %2254
        %2258 = vset.pattern.permute.xlu0 0
        %2259 = vperm.xlu0 %2258, %v2237
        %v2260 = vpop.permute.xlu0 %2259
        %2263 = vset.pattern.permute.xlu0 0
        %2264 = vperm.xlu0 %2263, %v2238
        %v2265 = vpop.permute.xlu0 %2264
        %2268 = vset.pattern.permute.xlu0 0
        %2269 = vperm.xlu0 %2268, %v2239
        %v2270 = vpop.permute.xlu0 %2269
        %2273 = vset.pattern.permute.xlu0 0
        %2274 = vperm.xlu0 %2273, %v2240
        %v2275 = vpop.permute.xlu0 %2274
        %2278 = vset.pattern.permute.xlu0 0
        %2279 = vperm.xlu0 %2278, %v2241
        %v2280 = vpop.permute.xlu0 %2279
        %2283 = vset.pattern.permute.xlu0 0
        %2284 = vperm.xlu0 %2283, %v2242
        %v2285 = vpop.permute.xlu0 %2284
        %2288 = vset.pattern.permute.xlu0 0
        %2289 = vperm.xlu0 %2288, %v2243
        %v2290 = vpop.permute.xlu0 %2289
        %2293 = vset.pattern.permute.xlu0 0
        %2294 = vperm.xlu0 %2293, %v2244
        %v2295 = vpop.permute.xlu0 %2294
        %2298 = vset.pattern.permute.xlu0 0
        %2299 = vperm.xlu0 %2298, %v2245
        %v2300 = vpop.permute.xlu0 %2299
        %2303 = vset.pattern.permute.xlu0 0
        %2304 = vperm.xlu0 %2303, %v2246
        %v2305 = vpop.permute.xlu0 %2304
        %2308 = vset.pattern.permute.xlu0 0
        %2309 = vperm.xlu0 %2308, %v2247
        %v2310 = vpop.permute.xlu0 %2309
        %2313 = vset.pattern.permute.xlu0 0
        %2314 = vperm.xlu0 %2313, %v2248
        %v2315 = vpop.permute.xlu0 %2314
        %2318 = vset.pattern.permute.xlu0 0
        %2319 = vperm.xlu0 %2318, %v2249
        %v2320 = vpop.permute.xlu0 %2319
        %2323 = vset.pattern.permute.xlu0 0
        %2324 = vperm.xlu0 %2323, %v2250
        %v2325 = vpop.permute.xlu0 %2324
        %2328 = vset.pattern.permute.xlu0 0
        %2329 = vperm.xlu0 %2328, %v2251
        %v2330 = vpop.permute.xlu0 %2329
        %v2332 = vmul.f32 %v2189, %v2255
        %v2333 = vmul.f32 %v2192, %v2260
        %v2334 = vmul.f32 %v2195, %v2265
        %v2335 = vmul.f32 %v2198, %v2270
        %v2336 = vmul.f32 %v2201, %v2275
        %v2337 = vmul.f32 %v2204, %v2280
        %v2338 = vmul.f32 %v2207, %v2285
        %v2339 = vmul.f32 %v2210, %v2290
        %v2340 = vmul.f32 %v2213, %v2295
        %v2341 = vmul.f32 %v2216, %v2300
        %v2342 = vmul.f32 %v2219, %v2305
        %v2343 = vmul.f32 %v2222, %v2310
        %v2344 = vmul.f32 %v2225, %v2315
        %v2345 = vmul.f32 %v2228, %v2320
        %v2346 = vmul.f32 %v2231, %v2325
        %v2347 = vmul.f32 %v2234, %v2330
        %v2348 = vmul.f32 %v2190, %v1901
        %v2349 = vmul.f32 %v2193, %v1907
        %v2350 = vmul.f32 %v2196, %v1913
        %v2351 = vmul.f32 %v2199, %v1919
        %v2352 = vmul.f32 %v2202, %v1925
        %v2353 = vmul.f32 %v2205, %v1931
        %v2354 = vmul.f32 %v2208, %v1937
        %v2355 = vmul.f32 %v2211, %v1943
        %v2356 = vmul.f32 %v2214, %v1949
        %v2357 = vmul.f32 %v2217, %v1955
        %v2358 = vmul.f32 %v2220, %v1961
        %v2359 = vmul.f32 %v2223, %v1967
        %v2360 = vmul.f32 %v2226, %v1973
        %v2361 = vmul.f32 %v2229, %v1979
        %v2362 = vmul.f32 %v2232, %v1985
        %v2363 = vmul.f32 %v2235, %v1991
        %v2364 = vadd.f32 %v2332, %v2348
        %v2365 = vadd.f32 %v2333, %v2349
        %v2366 = vadd.f32 %v2334, %v2350
        %v2367 = vadd.f32 %v2335, %v2351
        %v2368 = vadd.f32 %v2336, %v2352
        %v2369 = vadd.f32 %v2337, %v2353
        %v2370 = vadd.f32 %v2338, %v2354
        %v2371 = vadd.f32 %v2339, %v2355
        %v2372 = vadd.f32 %v2340, %v2356
        %v2373 = vadd.f32 %v2341, %v2357
        %v2374 = vadd.f32 %v2342, %v2358
        %v2375 = vadd.f32 %v2343, %v2359
        %v2376 = vadd.f32 %v2344, %v2360
        %v2377 = vadd.f32 %v2345, %v2361
        %v2378 = vadd.f32 %v2346, %v2362
        %v2379 = vadd.f32 %v2347, %v2363
        %2380 = vset.pattern.permute.xlu0 1
        %2381 = vperm.xlu0 %2380, %v2236
        %v2382 = vpop.permute.xlu0 %2381
        %2384 = vset.pattern.permute.xlu0 1
        %2385 = vperm.xlu0 %2384, %v2237
        %v2386 = vpop.permute.xlu0 %2385
        %2388 = vset.pattern.permute.xlu0 1
        %2389 = vperm.xlu0 %2388, %v2238
        %v2390 = vpop.permute.xlu0 %2389
        %2392 = vset.pattern.permute.xlu0 1
        %2393 = vperm.xlu0 %2392, %v2239
        %v2394 = vpop.permute.xlu0 %2393
        %2396 = vset.pattern.permute.xlu0 1
        %2397 = vperm.xlu0 %2396, %v2240
        %v2398 = vpop.permute.xlu0 %2397
        %2400 = vset.pattern.permute.xlu0 1
        %2401 = vperm.xlu0 %2400, %v2241
        %v2402 = vpop.permute.xlu0 %2401
        %2404 = vset.pattern.permute.xlu0 1
        %2405 = vperm.xlu0 %2404, %v2242
        %v2406 = vpop.permute.xlu0 %2405
        %2408 = vset.pattern.permute.xlu0 1
        %2409 = vperm.xlu0 %2408, %v2243
        %v2410 = vpop.permute.xlu0 %2409
        %2412 = vset.pattern.permute.xlu0 1
        %2413 = vperm.xlu0 %2412, %v2244
        %v2414 = vpop.permute.xlu0 %2413
        %2416 = vset.pattern.permute.xlu0 1
        %2417 = vperm.xlu0 %2416, %v2245
        %v2418 = vpop.permute.xlu0 %2417
        %2420 = vset.pattern.permute.xlu0 1
        %2421 = vperm.xlu0 %2420, %v2246
        %v2422 = vpop.permute.xlu0 %2421
        %2424 = vset.pattern.permute.xlu0 1
        %2425 = vperm.xlu0 %2424, %v2247
        %v2426 = vpop.permute.xlu0 %2425
        %2428 = vset.pattern.permute.xlu0 1
        %2429 = vperm.xlu0 %2428, %v2248
        %v2430 = vpop.permute.xlu0 %2429
        %2432 = vset.pattern.permute.xlu0 1
        %2433 = vperm.xlu0 %2432, %v2249
        %v2434 = vpop.permute.xlu0 %2433
        %2436 = vset.pattern.permute.xlu0 1
        %2437 = vperm.xlu0 %2436, %v2250
        %v2438 = vpop.permute.xlu0 %2437
        %2440 = vset.pattern.permute.xlu0 1
        %2441 = vperm.xlu0 %2440, %v2251
        %v2442 = vpop.permute.xlu0 %2441
        %v2444 = vmul.f32 %v2189, %v2382
        %v2445 = vmul.f32 %v2192, %v2386
        %v2446 = vmul.f32 %v2195, %v2390
        %v2447 = vmul.f32 %v2198, %v2394
        %v2448 = vmul.f32 %v2201, %v2398
        %v2449 = vmul.f32 %v2204, %v2402
        %v2450 = vmul.f32 %v2207, %v2406
        %v2451 = vmul.f32 %v2210, %v2410
        %v2452 = vmul.f32 %v2213, %v2414
        %v2453 = vmul.f32 %v2216, %v2418
        %v2454 = vmul.f32 %v2219, %v2422
        %v2455 = vmul.f32 %v2222, %v2426
        %v2456 = vmul.f32 %v2225, %v2430
        %v2457 = vmul.f32 %v2228, %v2434
        %v2458 = vmul.f32 %v2231, %v2438
        %v2459 = vmul.f32 %v2234, %v2442
        %v2460 = vmul.f32 %v2190, %v1903
        %v2461 = vmul.f32 %v2193, %v1909
        %v2462 = vmul.f32 %v2196, %v1915
        %v2463 = vmul.f32 %v2199, %v1921
        %v2464 = vmul.f32 %v2202, %v1927
        %v2465 = vmul.f32 %v2205, %v1933
        %v2466 = vmul.f32 %v2208, %v1939
        %v2467 = vmul.f32 %v2211, %v1945
        %v2468 = vmul.f32 %v2214, %v1951
        %v2469 = vmul.f32 %v2217, %v1957
        %v2470 = vmul.f32 %v2220, %v1963
        %v2471 = vmul.f32 %v2223, %v1969
        %v2472 = vmul.f32 %v2226, %v1975
        %v2473 = vmul.f32 %v2229, %v1981
        %v2474 = vmul.f32 %v2232, %v1987
        %v2475 = vmul.f32 %v2235, %v1993
        %v2476 = vadd.f32 %v2444, %v2460
        %v2477 = vadd.f32 %v2445, %v2461
        %v2478 = vadd.f32 %v2446, %v2462
        %v2479 = vadd.f32 %v2447, %v2463
        %v2480 = vadd.f32 %v2448, %v2464
        %v2481 = vadd.f32 %v2449, %v2465
        %v2482 = vadd.f32 %v2450, %v2466
        %v2483 = vadd.f32 %v2451, %v2467
        %v2484 = vadd.f32 %v2452, %v2468
        %v2485 = vadd.f32 %v2453, %v2469
        %v2486 = vadd.f32 %v2454, %v2470
        %v2487 = vadd.f32 %v2455, %v2471
        %v2488 = vadd.f32 %v2456, %v2472
        %v2489 = vadd.f32 %v2457, %v2473
        %v2490 = vadd.f32 %v2458, %v2474
        %v2491 = vadd.f32 %v2459, %v2475
        %2492 = vset.pattern.permute.xlu0 2
        %2493 = vperm.xlu0 %2492, %v2236
        %v2494 = vpop.permute.xlu0 %2493
        %2496 = vset.pattern.permute.xlu0 2
        %2497 = vperm.xlu0 %2496, %v2237
        %v2498 = vpop.permute.xlu0 %2497
        %2500 = vset.pattern.permute.xlu0 2
        %2501 = vperm.xlu0 %2500, %v2238
        %v2502 = vpop.permute.xlu0 %2501
        %2504 = vset.pattern.permute.xlu0 2
        %2505 = vperm.xlu0 %2504, %v2239
        %v2506 = vpop.permute.xlu0 %2505
        %2508 = vset.pattern.permute.xlu0 2
        %2509 = vperm.xlu0 %2508, %v2240
        %v2510 = vpop.permute.xlu0 %2509
        %2512 = vset.pattern.permute.xlu0 2
        %2513 = vperm.xlu0 %2512, %v2241
        %v2514 = vpop.permute.xlu0 %2513
        %2516 = vset.pattern.permute.xlu0 2
        %2517 = vperm.xlu0 %2516, %v2242
        %v2518 = vpop.permute.xlu0 %2517
        %2520 = vset.pattern.permute.xlu0 2
        %2521 = vperm.xlu0 %2520, %v2243
        %v2522 = vpop.permute.xlu0 %2521
        %2524 = vset.pattern.permute.xlu0 2
        %2525 = vperm.xlu0 %2524, %v2244
        %v2526 = vpop.permute.xlu0 %2525
        %2528 = vset.pattern.permute.xlu0 2
        %2529 = vperm.xlu0 %2528, %v2245
        %v2530 = vpop.permute.xlu0 %2529
        %2532 = vset.pattern.permute.xlu0 2
        %2533 = vperm.xlu0 %2532, %v2246
        %v2534 = vpop.permute.xlu0 %2533
        %2536 = vset.pattern.permute.xlu0 2
        %2537 = vperm.xlu0 %2536, %v2247
        %v2538 = vpop.permute.xlu0 %2537
        %2540 = vset.pattern.permute.xlu0 2
        %2541 = vperm.xlu0 %2540, %v2248
        %v2542 = vpop.permute.xlu0 %2541
        %2544 = vset.pattern.permute.xlu0 2
        %2545 = vperm.xlu0 %2544, %v2249
        %v2546 = vpop.permute.xlu0 %2545
        %2548 = vset.pattern.permute.xlu0 2
        %2549 = vperm.xlu0 %2548, %v2250
        %v2550 = vpop.permute.xlu0 %2549
        %2552 = vset.pattern.permute.xlu0 2
        %2553 = vperm.xlu0 %2552, %v2251
        %v2554 = vpop.permute.xlu0 %2553
        %v2556 = vmul.f32 %v2189, %v2494
        %v2557 = vmul.f32 %v2192, %v2498
        %v2558 = vmul.f32 %v2195, %v2502
        %v2559 = vmul.f32 %v2198, %v2506
        %v2560 = vmul.f32 %v2201, %v2510
        %v2561 = vmul.f32 %v2204, %v2514
        %v2562 = vmul.f32 %v2207, %v2518
        %v2563 = vmul.f32 %v2210, %v2522
        %v2564 = vmul.f32 %v2213, %v2526
        %v2565 = vmul.f32 %v2216, %v2530
        %v2566 = vmul.f32 %v2219, %v2534
        %v2567 = vmul.f32 %v2222, %v2538
        %v2568 = vmul.f32 %v2225, %v2542
        %v2569 = vmul.f32 %v2228, %v2546
        %v2570 = vmul.f32 %v2231, %v2550
        %v2571 = vmul.f32 %v2234, %v2554
        %v2572 = vmul.f32 %v2190, %v2062
        %v2573 = vmul.f32 %v2193, %v2067
        %v2574 = vmul.f32 %v2196, %v2072
        %v2575 = vmul.f32 %v2199, %v2077
        %v2576 = vmul.f32 %v2202, %v2082
        %v2577 = vmul.f32 %v2205, %v2087
        %v2578 = vmul.f32 %v2208, %v2092
        %v2579 = vmul.f32 %v2211, %v2097
        %v2580 = vmul.f32 %v2214, %v2102
        %v2581 = vmul.f32 %v2217, %v2107
        %v2582 = vmul.f32 %v2220, %v2112
        %v2583 = vmul.f32 %v2223, %v2117
        %v2584 = vmul.f32 %v2226, %v2122
        %v2585 = vmul.f32 %v2229, %v2127
        %v2586 = vmul.f32 %v2232, %v2132
        %v2587 = vmul.f32 %v2235, %v2137
        %v2588 = vadd.f32 %v2556, %v2572
        %v2589 = vadd.f32 %v2557, %v2573
        %v2590 = vadd.f32 %v2558, %v2574
        %v2591 = vadd.f32 %v2559, %v2575
        %v2592 = vadd.f32 %v2560, %v2576
        %v2593 = vadd.f32 %v2561, %v2577
        %v2594 = vadd.f32 %v2562, %v2578
        %v2595 = vadd.f32 %v2563, %v2579
        %v2596 = vadd.f32 %v2564, %v2580
        %v2597 = vadd.f32 %v2565, %v2581
        %v2598 = vadd.f32 %v2566, %v2582
        %v2599 = vadd.f32 %v2567, %v2583
        %v2600 = vadd.f32 %v2568, %v2584
        %v2601 = vadd.f32 %v2569, %v2585
        %v2602 = vadd.f32 %v2570, %v2586
        %v2603 = vadd.f32 %v2571, %v2587
        %v2604 = vld [vmem:[#allocation3] sm:$0xff]
        %v2605 = vld [vmem:[#allocation3 + $0x8] sm:$0xff]
        %v2606 = vld [vmem:[#allocation3 + $0x10] sm:$0xff]
        %v2607 = vld [vmem:[#allocation3 + $0x18] sm:$0xff]
        %v2608 = vld [vmem:[#allocation3 + $0x20] sm:$0xff]
        %v2609 = vld [vmem:[#allocation3 + $0x28] sm:$0xff]
        %v2610 = vld [vmem:[#allocation3 + $0x30] sm:$0xff]
        %v2611 = vld [vmem:[#allocation3 + $0x38] sm:$0xff]
        %v2612 = vld [vmem:[#allocation3 + $0x40] sm:$0xff]
        %v2613 = vld [vmem:[#allocation3 + $0x48] sm:$0xff]
        %v2614 = vld [vmem:[#allocation3 + $0x50] sm:$0xff]
        %v2615 = vld [vmem:[#allocation3 + $0x58] sm:$0xff]
        %v2616 = vld [vmem:[#allocation3 + $0x60] sm:$0xff]
        %v2617 = vld [vmem:[#allocation3 + $0x68] sm:$0xff]
        %v2618 = vld [vmem:[#allocation3 + $0x70] sm:$0xff]
        %v2619 = vld [vmem:[#allocation3 + $0x78] sm:$0xff]
        %v2620 = vld [vmem:[#allocation3 + $0x80] sm:$0xff]
        %v2621 = vld [vmem:[#allocation3 + $0x88] sm:$0xff]
        %v2622 = vld [vmem:[#allocation3 + $0x90] sm:$0xff]
        %v2623 = vld [vmem:[#allocation3 + $0x98] sm:$0xff]
        %v2624 = vld [vmem:[#allocation3 + $0xa0] sm:$0xff]
        %v2625 = vld [vmem:[#allocation3 + $0xa8] sm:$0xff]
        %v2626 = vld [vmem:[#allocation3 + $0xb0] sm:$0xff]
        %v2627 = vld [vmem:[#allocation3 + $0xb8] sm:$0xff]
        %v2628 = vld [vmem:[#allocation3 + $0xc0] sm:$0xff]
        %v2629 = vld [vmem:[#allocation3 + $0xc8] sm:$0xff]
        %v2630 = vld [vmem:[#allocation3 + $0xd0] sm:$0xff]
        %v2631 = vld [vmem:[#allocation3 + $0xd8] sm:$0xff]
        %v2632 = vld [vmem:[#allocation3 + $0xe0] sm:$0xff]
        %v2633 = vld [vmem:[#allocation3 + $0xe8] sm:$0xff]
        %v2634 = vld [vmem:[#allocation3 + $0xf0] sm:$0xff]
        %v2635 = vld [vmem:[#allocation3 + $0xf8] sm:$0xff]
        %v2636 = vld [vmem:[#allocation3 + $0x100] sm:$0xff]
        %v2637 = vld [vmem:[#allocation3 + $0x108] sm:$0xff]
        %v2638 = vld [vmem:[#allocation3 + $0x110] sm:$0xff]
        %v2639 = vld [vmem:[#allocation3 + $0x118] sm:$0xff]
        %v2640 = vld [vmem:[#allocation3 + $0x120] sm:$0xff]
        %v2641 = vld [vmem:[#allocation3 + $0x128] sm:$0xff]
        %v2642 = vld [vmem:[#allocation3 + $0x130] sm:$0xff]
        %v2643 = vld [vmem:[#allocation3 + $0x138] sm:$0xff]
        %v2644 = vld [vmem:[#allocation3 + $0x140] sm:$0xff]
        %v2645 = vld [vmem:[#allocation3 + $0x148] sm:$0xff]
        %v2646 = vld [vmem:[#allocation3 + $0x150] sm:$0xff]
        %v2647 = vld [vmem:[#allocation3 + $0x158] sm:$0xff]
        %v2648 = vld [vmem:[#allocation3 + $0x160] sm:$0xff]
        %v2649 = vld [vmem:[#allocation3 + $0x168] sm:$0xff]
        %v2650 = vld [vmem:[#allocation3 + $0x170] sm:$0xff]
        %v2651 = vld [vmem:[#allocation3 + $0x178] sm:$0xff]
        %v2652 = vld [vmem:[#allocation3 + $0x180] sm:$0xff]
        %v2653 = vld [vmem:[#allocation3 + $0x188] sm:$0xff]
        %v2654 = vld [vmem:[#allocation3 + $0x190] sm:$0xff]
        %v2655 = vld [vmem:[#allocation3 + $0x198] sm:$0xff]
        %v2656 = vld [vmem:[#allocation3 + $0x1a0] sm:$0xff]
        %v2657 = vld [vmem:[#allocation3 + $0x1a8] sm:$0xff]
        %v2658 = vld [vmem:[#allocation3 + $0x1b0] sm:$0xff]
        %v2659 = vld [vmem:[#allocation3 + $0x1b8] sm:$0xff]
        %v2660 = vld [vmem:[#allocation3 + $0x1c0] sm:$0xff]
        %v2661 = vld [vmem:[#allocation3 + $0x1c8] sm:$0xff]
        %v2662 = vld [vmem:[#allocation3 + $0x1d0] sm:$0xff]
        %v2663 = vld [vmem:[#allocation3 + $0x1d8] sm:$0xff]
        %v2664 = vld [vmem:[#allocation3 + $0x1e0] sm:$0xff]
        %v2665 = vld [vmem:[#allocation3 + $0x1e8] sm:$0xff]
        %v2666 = vld [vmem:[#allocation3 + $0x1f0] sm:$0xff]
        %v2667 = vld [vmem:[#allocation3 + $0x1f8] sm:$0xff]
        %2668 = vmatprep.subr.mxu0 %v2364
        %2669 = vmatpush1.msra.mxu0 %v2188
        %2670 = vmatprep.subr.mxu0 %v2365
        %2671 = vmatpush1.msra.mxu0 %v2191
        %2672 = vmatprep.subr.mxu0 %v2366
        %2673 = vmatpush1.msra.mxu0 %v2194
        %2674 = vmatprep.subr.mxu0 %v2367
        %2675 = vmatpush1.msra.mxu0 %v2197
        %2676 = vmatprep.subr.mxu0 %v2368
        %2677 = vmatpush1.msra.mxu0 %v2200
        %2678 = vmatprep.subr.mxu0 %v2369
        %2679 = vmatpush1.msra.mxu0 %v2203
        %2680 = vmatprep.subr.mxu0 %v2370
        %2681 = vmatpush1.msra.mxu0 %v2206
        %2682 = vmatprep.subr.mxu0 %v2371
        %2683 = vmatpush1.msra.mxu0 %v2209
        %2684 = vmatprep.subr.mxu0 %v2372
        %2685 = vmatpush1.msra.mxu0 %v2212
        %2686 = vmatprep.subr.mxu0 %v2373
        %2687 = vmatpush1.msra.mxu0 %v2215
        %2688 = vmatprep.subr.mxu0 %v2374
        %2689 = vmatpush1.msra.mxu0 %v2218
        %2690 = vmatprep.subr.mxu0 %v2375
        %2691 = vmatpush1.msra.mxu0 %v2221
        %2692 = vmatprep.subr.mxu0 %v2376
        %2693 = vmatpush1.msra.mxu0 %v2224
        %2694 = vmatprep.subr.mxu0 %v2377
        %2695 = vmatpush1.msra.mxu0 %v2227
        %2696 = vmatprep.subr.mxu0 %v2378
        %2697 = vmatpush1.msra.mxu0 %v2230
        %2698 = vmatprep.subr.mxu0 %v2379
        %2699 = vmatpush1.msra.mxu0 %v2233
        %2700 = vmatprep.subr.mxu0 0.0
        %2701 = vmatpush1.msra.mxu0 0.0
        %2702 = vmatprep.subr.mxu0 0.0
        %2703 = vmatpush1.msra.mxu0 0.0
        %2704 = vmatprep.subr.mxu0 0.0
        %2705 = vmatpush1.msra.mxu0 0.0
        %2706 = vmatprep.subr.mxu0 0.0
        %2707 = vmatpush1.msra.mxu0 0.0
        %2708 = vmatprep.subr.mxu0 0.0
        %2709 = vmatpush1.msra.mxu0 0.0
        %2710 = vmatprep.subr.mxu0 0.0
        %2711 = vmatpush1.msra.mxu0 0.0
        %2712 = vmatprep.subr.mxu0 0.0
        %2713 = vmatpush1.msra.mxu0 0.0
        %2714 = vmatprep.subr.mxu0 0.0
        %2715 = vmatpush1.msra.mxu0 0.0
        %2716 = vmatprep.subr.mxu0 0.0
        %2717 = vmatpush1.msra.mxu0 0.0
        %2718 = vmatprep.subr.mxu0 0.0
        %2719 = vmatpush1.msra.mxu0 0.0
        %2720 = vmatprep.subr.mxu0 0.0
        %2721 = vmatpush1.msra.mxu0 0.0
        %2722 = vmatprep.subr.mxu0 0.0
        %2723 = vmatpush1.msra.mxu0 0.0
        %2724 = vmatprep.subr.mxu0 0.0
        %2725 = vmatpush1.msra.mxu0 0.0
        %2726 = vmatprep.subr.mxu0 0.0
        %2727 = vmatpush1.msra.mxu0 0.0
        %2728 = vmatprep.subr.mxu0 0.0
        %2729 = vmatpush1.msra.mxu0 0.0
        %2730 = vmatprep.subr.mxu0 0.0
        %2731 = vmatpush1.msra.mxu0 0.0
        %2732 = vmatprep.mubr.f32.mxu0 0.0
        %2733 = vmatmul.mubr.f32.gmra.mrb[0].mxu0 %v1416
        %v2734 = vpop.f32.mrb[0].mxu0
        %v2735 = vadd.f32 0.0, %v2734
        %v2736 = vpop.f32.mrb[0].mxu0
        %v2737 = vadd.f32 0.0, %v2736
        %2738 = vmatprep.mubr.f32.mxu0 0.0
        %2739 = vmatmul.mubr.f32.gmra.mrb[0].mxu0 %v1417
        %v2740 = vpop.f32.mrb[0].mxu0
        %v2741 = vadd.f32 0.0, %v2740
        %v2742 = vpop.f32.mrb[0].mxu0
        %v2743 = vadd.f32 0.0, %v2742
        %2744 = vmatprep.mubr.f32.mxu0 0.0
        %2745 = vmatmul.mubr.f32.gmra.mrb[0].mxu0 %v1418
        %v2746 = vpop.f32.mrb[0].mxu0
        %v2747 = vadd.f32 0.0, %v2746
        %v2748 = vpop.f32.mrb[0].mxu0
        %v2749 = vadd.f32 0.0, %v2748
        %2750 = vmatprep.mubr.f32.mxu0 0.0
        %2751 = vmatmul.mubr.f32.gmra.mrb[0].mxu0 %v1419
        %v2752 = vpop.f32.mrb[0].mxu0
        %v2753 = vadd.f32 0.0, %v2752
        %v2754 = vpop.f32.mrb[0].mxu0
        %v2755 = vadd.f32 0.0, %v2754
        %2756 = vmatprep.mubr.f32.mxu0 0.0
        %2757 = vmatmul.mubr.f32.gmra.mrb[0].mxu0 %v1420
        %v2758 = vpop.f32.mrb[0].mxu0
        %v2759 = vadd.f32 0.0, %v2758
        %v2760 = vpop.f32.mrb[0].mxu0
        %v2761 = vadd.f32 0.0, %v2760
        %2762 = vmatprep.mubr.f32.mxu0 0.0
        %2763 = vmatmul.mubr.f32.gmra.mrb[0].mxu0 %v1421
        %v2764 = vpop.f32.mrb[0].mxu0
        %v2765 = vadd.f32 0.0, %v2764
        %v2766 = vpop.f32.mrb[0].mxu0
        %v2767 = vadd.f32 0.0, %v2766
        %2768 = vmatprep.mubr.f32.mxu0 0.0
        %2769 = vmatmul.mubr.f32.gmra.mrb[0].mxu0 %v1422
        %v2770 = vpop.f32.mrb[0].mxu0
        %v2771 = vadd.f32 0.0, %v2770
        %v2772 = vpop.f32.mrb[0].mxu0
        %v2773 = vadd.f32 0.0, %v2772
        %2774 = vmatprep.mubr.f32.mxu0 0.0
        %2775 = vmatmul.mubr.f32.gmra.mrb[0].mxu0 %v1423
        %v2776 = vpop.f32.mrb[0].mxu0
        %v2777 = vadd.f32 0.0, %v2776
        %v2778 = vpop.f32.mrb[0].mxu0
        %v2779 = vadd.f32 0.0, %v2778
        %2780 = vmatprep.mubr.f32.mxu0 0.0
        %2781 = vmatmul.mubr.f32.gmra.mrb[0].mxu0 %v1424
        %v2782 = vpop.f32.mrb[0].mxu0
        %v2783 = vadd.f32 0.0, %v2782
        %v2784 = vpop.f32.mrb[0].mxu0
        %v2785 = vadd.f32 0.0, %v2784
        %2786 = vmatprep.mubr.f32.mxu0 0.0
        %2787 = vmatmul.mubr.f32.gmra.mrb[0].mxu0 %v1425
        %v2788 = vpop.f32.mrb[0].mxu0
        %v2789 = vadd.f32 0.0, %v2788
        %v2790 = vpop.f32.mrb[0].mxu0
        %v2791 = vadd.f32 0.0, %v2790
        %2792 = vmatprep.mubr.f32.mxu0 0.0
        %2793 = vmatmul.mubr.f32.gmra.mrb[0].mxu0 %v1426
        %v2794 = vpop.f32.mrb[0].mxu0
        %v2795 = vadd.f32 0.0, %v2794
        %v2796 = vpop.f32.mrb[0].mxu0
        %v2797 = vadd.f32 0.0, %v2796
        %2798 = vmatprep.mubr.f32.mxu0 0.0
        %2799 = vmatmul.mubr.f32.gmra.mrb[0].mxu0 %v1427
        %v2800 = vpop.f32.mrb[0].mxu0
        %v2801 = vadd.f32 0.0, %v2800
        %v2802 = vpop.f32.mrb[0].mxu0
        %v2803 = vadd.f32 0.0, %v2802
        %2804 = vmatprep.mubr.f32.mxu0 0.0
        %2805 = vmatmul.mubr.f32.gmra.mrb[0].mxu0 %v1428
        %v2806 = vpop.f32.mrb[0].mxu0
        %v2807 = vadd.f32 0.0, %v2806
        %v2808 = vpop.f32.mrb[0].mxu0
        %v2809 = vadd.f32 0.0, %v2808
        %2810 = vmatprep.mubr.f32.mxu0 0.0
        %2811 = vmatmul.mubr.f32.gmra.mrb[0].mxu0 %v1429
        %v2812 = vpop.f32.mrb[0].mxu0
        %v2813 = vadd.f32 0.0, %v2812
        %v2814 = vpop.f32.mrb[0].mxu0
        %v2815 = vadd.f32 0.0, %v2814
        %2816 = vmatprep.mubr.f32.mxu0 0.0
        %2817 = vmatmul.mubr.f32.gmra.mrb[0].mxu0 %v1430
        %v2818 = vpop.f32.mrb[0].mxu0
        %v2819 = vadd.f32 0.0, %v2818
        %v2820 = vpop.f32.mrb[0].mxu0
        %v2821 = vadd.f32 0.0, %v2820
        %2822 = vmatprep.mubr.f32.mxu0 0.0
        %2823 = vmatmul.mubr.f32.gmra.mrb[0].mxu0 %v1431
        %v2824 = vpop.f32.mrb[0].mxu0
        %v2825 = vadd.f32 0.0, %v2824
        %v2826 = vpop.f32.mrb[0].mxu0
        %v2827 = vadd.f32 0.0, %v2826
        %2828 = vdwg.mxu0
        %2829 = vmatprep.subr.mxu0 %v2588
        %2830 = vmatpush1.msra.mxu0 %v2476
        %2831 = vmatprep.subr.mxu0 %v2589
        %2832 = vmatpush1.msra.mxu0 %v2477
        %2833 = vmatprep.subr.mxu0 %v2590
        %2834 = vmatpush1.msra.mxu0 %v2478
        %2835 = vmatprep.subr.mxu0 %v2591
        %2836 = vmatpush1.msra.mxu0 %v2479
        %2837 = vmatprep.subr.mxu0 %v2592
        %2838 = vmatpush1.msra.mxu0 %v2480
        %2839 = vmatprep.subr.mxu0 %v2593
        %2840 = vmatpush1.msra.mxu0 %v2481
        %2841 = vmatprep.subr.mxu0 %v2594
        %2842 = vmatpush1.msra.mxu0 %v2482
        %2843 = vmatprep.subr.mxu0 %v2595
        %2844 = vmatpush1.msra.mxu0 %v2483
        %2845 = vmatprep.subr.mxu0 %v2596
        %2846 = vmatpush1.msra.mxu0 %v2484
        %2847 = vmatprep.subr.mxu0 %v2597
        %2848 = vmatpush1.msra.mxu0 %v2485
        %2849 = vmatprep.subr.mxu0 %v2598
        %2850 = vmatpush1.msra.mxu0 %v2486
        %2851 = vmatprep.subr.mxu0 %v2599
        %2852 = vmatpush1.msra.mxu0 %v2487
        %2853 = vmatprep.subr.mxu0 %v2600
        %2854 = vmatpush1.msra.mxu0 %v2488
        %2855 = vmatprep.subr.mxu0 %v2601
        %2856 = vmatpush1.msra.mxu0 %v2489
        %2857 = vmatprep.subr.mxu0 %v2602
        %2858 = vmatpush1.msra.mxu0 %v2490
        %2859 = vmatprep.subr.mxu0 %v2603
        %2860 = vmatpush1.msra.mxu0 %v2491
        %2861 = vmatprep.subr.mxu0 0.0
        %2862 = vmatpush1.msra.mxu0 0.0
        %2863 = vmatprep.subr.mxu0 0.0
        %2864 = vmatpush1.msra.mxu0 0.0
        %2865 = vmatprep.subr.mxu0 0.0
        %2866 = vmatpush1.msra.mxu0 0.0
        %2867 = vmatprep.subr.mxu0 0.0
        %2868 = vmatpush1.msra.mxu0 0.0
        %2869 = vmatprep.subr.mxu0 0.0
        %2870 = vmatpush1.msra.mxu0 0.0
        %2871 = vmatprep.subr.mxu0 0.0
        %2872 = vmatpush1.msra.mxu0 0.0
        %2873 = vmatprep.subr.mxu0 0.0
        %2874 = vmatpush1.msra.mxu0 0.0
        %2875 = vmatprep.subr.mxu0 0.0
        %2876 = vmatpush1.msra.mxu0 0.0
        %2877 = vmatprep.subr.mxu0 0.0
        %2878 = vmatpush1.msra.mxu0 0.0
        %2879 = vmatprep.subr.mxu0 0.0
        %2880 = vmatpush1.msra.mxu0 0.0
        %2881 = vmatprep.subr.mxu0 0.0
        %2882 = vmatpush1.msra.mxu0 0.0
        %2883 = vmatprep.subr.mxu0 0.0
        %2884 = vmatpush1.msra.mxu0 0.0
        %2885 = vmatprep.subr.mxu0 0.0
        %2886 = vmatpush1.msra.mxu0 0.0
        %2887 = vmatprep.subr.mxu0 0.0
        %2888 = vmatpush1.msra.mxu0 0.0
        %2889 = vmatprep.subr.mxu0 0.0
        %2890 = vmatpush1.msra.mxu0 0.0
        %2891 = vmatprep.subr.mxu0 0.0
        %2892 = vmatpush1.msra.mxu0 0.0
        %2893 = vmatprep.mubr.f32.mxu0 0.0
        %2894 = vmatmul.mubr.f32.gmra.mrb[0].mxu0 %v1416
        %v2895 = vpop.f32.mrb[0].mxu0
        %v2896 = vadd.f32 0.0, %v2895
        %v2897 = vpop.f32.mrb[0].mxu0
        %v2898 = vadd.f32 0.0, %v2897
        %2899 = vmatprep.mubr.f32.mxu0 0.0
        %2900 = vmatmul.mubr.f32.gmra.mrb[0].mxu0 %v1417
        %v2901 = vpop.f32.mrb[0].mxu0
        %v2902 = vadd.f32 0.0, %v2901
        %v2903 = vpop.f32.mrb[0].mxu0
        %v2904 = vadd.f32 0.0, %v2903
        %2905 = vmatprep.mubr.f32.mxu0 0.0
        %2906 = vmatmul.mubr.f32.gmra.mrb[0].mxu0 %v1418
        %v2907 = vpop.f32.mrb[0].mxu0
        %v2908 = vadd.f32 0.0, %v2907
        %v2909 = vpop.f32.mrb[0].mxu0
        %v2910 = vadd.f32 0.0, %v2909
        %2911 = vmatprep.mubr.f32.mxu0 0.0
        %2912 = vmatmul.mubr.f32.gmra.mrb[0].mxu0 %v1419
        %v2913 = vpop.f32.mrb[0].mxu0
        %v2914 = vadd.f32 0.0, %v2913
        %v2915 = vpop.f32.mrb[0].mxu0
        %v2916 = vadd.f32 0.0, %v2915
        %2917 = vmatprep.mubr.f32.mxu0 0.0
        %2918 = vmatmul.mubr.f32.gmra.mrb[0].mxu0 %v1420
        %v2919 = vpop.f32.mrb[0].mxu0
        %v2920 = vadd.f32 0.0, %v2919
        %v2921 = vpop.f32.mrb[0].mxu0
        %v2922 = vadd.f32 0.0, %v2921
        %2923 = vmatprep.mubr.f32.mxu0 0.0
        %2924 = vmatmul.mubr.f32.gmra.mrb[0].mxu0 %v1421
        %v2925 = vpop.f32.mrb[0].mxu0
        %v2926 = vadd.f32 0.0, %v2925
        %v2927 = vpop.f32.mrb[0].mxu0
        %v2928 = vadd.f32 0.0, %v2927
        %2929 = vmatprep.mubr.f32.mxu0 0.0
        %2930 = vmatmul.mubr.f32.gmra.mrb[0].mxu0 %v1422
        %v2931 = vpop.f32.mrb[0].mxu0
        %v2932 = vadd.f32 0.0, %v2931
        %v2933 = vpop.f32.mrb[0].mxu0
        %v2934 = vadd.f32 0.0, %v2933
        %2935 = vmatprep.mubr.f32.mxu0 0.0
        %2936 = vmatmul.mubr.f32.gmra.mrb[0].mxu0 %v1423
        %v2937 = vpop.f32.mrb[0].mxu0
        %v2938 = vadd.f32 0.0, %v2937
        %v2939 = vpop.f32.mrb[0].mxu0
        %v2940 = vadd.f32 0.0, %v2939
        %2941 = vmatprep.mubr.f32.mxu0 0.0
        %2942 = vmatmul.mubr.f32.gmra.mrb[0].mxu0 %v1424
        %v2943 = vpop.f32.mrb[0].mxu0
        %v2944 = vadd.f32 0.0, %v2943
        %v2945 = vpop.f32.mrb[0].mxu0
        %v2946 = vadd.f32 0.0, %v2945
        %2947 = vmatprep.mubr.f32.mxu0 0.0
        %2948 = vmatmul.mubr.f32.gmra.mrb[0].mxu0 %v1425
        %v2949 = vpop.f32.mrb[0].mxu0
        %v2950 = vadd.f32 0.0, %v2949
        %v2951 = vpop.f32.mrb[0].mxu0
        %v2952 = vadd.f32 0.0, %v2951
        %2953 = vmatprep.mubr.f32.mxu0 0.0
        %2954 = vmatmul.mubr.f32.gmra.mrb[0].mxu0 %v1426
        %v2955 = vpop.f32.mrb[0].mxu0
        %v2956 = vadd.f32 0.0, %v2955
        %v2957 = vpop.f32.mrb[0].mxu0
        %v2958 = vadd.f32 0.0, %v2957
        %2959 = vmatprep.mubr.f32.mxu0 0.0
        %2960 = vmatmul.mubr.f32.gmra.mrb[0].mxu0 %v1427
        %v2961 = vpop.f32.mrb[0].mxu0
        %v2962 = vadd.f32 0.0, %v2961
        %v2963 = vpop.f32.mrb[0].mxu0
        %v2964 = vadd.f32 0.0, %v2963
        %2965 = vmatprep.mubr.f32.mxu0 0.0
        %2966 = vmatmul.mubr.f32.gmra.mrb[0].mxu0 %v1428
        %v2967 = vpop.f32.mrb[0].mxu0
        %v2968 = vadd.f32 0.0, %v2967
        %v2969 = vpop.f32.mrb[0].mxu0
        %v2970 = vadd.f32 0.0, %v2969
        %2971 = vmatprep.mubr.f32.mxu0 0.0
        %2972 = vmatmul.mubr.f32.gmra.mrb[0].mxu0 %v1429
        %v2973 = vpop.f32.mrb[0].mxu0
        %v2974 = vadd.f32 0.0, %v2973
        %v2975 = vpop.f32.mrb[0].mxu0
        %v2976 = vadd.f32 0.0, %v2975
        %2977 = vmatprep.mubr.f32.mxu0 0.0
        %2978 = vmatmul.mubr.f32.gmra.mrb[0].mxu0 %v1430
        %v2979 = vpop.f32.mrb[0].mxu0
        %v2980 = vadd.f32 0.0, %v2979
        %v2981 = vpop.f32.mrb[0].mxu0
        %v2982 = vadd.f32 0.0, %v2981
        %2983 = vmatprep.mubr.f32.mxu0 0.0
        %2984 = vmatmul.mubr.f32.gmra.mrb[0].mxu0 %v1431
        %v2985 = vpop.f32.mrb[0].mxu0
        %v2986 = vadd.f32 0.0, %v2985
        %v2987 = vpop.f32.mrb[0].mxu0
        %v2988 = vadd.f32 0.0, %v2987
        %2989 = vdwg.mxu0
        %v2990 = vadd.f32 %v2604, %v2735
        %v2991 = vadd.f32 %v2605, %v2737
        %v2992 = vadd.f32 %v2606, %v2896
        %v2993 = vadd.f32 %v2607, %v2898
        %v2994 = vadd.f32 %v2608, %v2741
        %v2995 = vadd.f32 %v2609, %v2743
        %v2996 = vadd.f32 %v2610, %v2902
        %v2997 = vadd.f32 %v2611, %v2904
        %v2998 = vadd.f32 %v2612, %v2747
        %v2999 = vadd.f32 %v2613, %v2749
        %v3000 = vadd.f32 %v2614, %v2908
        %v3001 = vadd.f32 %v2615, %v2910
        %v3002 = vadd.f32 %v2616, %v2753
        %v3003 = vadd.f32 %v2617, %v2755
        %v3004 = vadd.f32 %v2618, %v2914
        %v3005 = vadd.f32 %v2619, %v2916
        %v3006 = vadd.f32 %v2620, %v2759
        %v3007 = vadd.f32 %v2621, %v2761
        %v3008 = vadd.f32 %v2622, %v2920
        %v3009 = vadd.f32 %v2623, %v2922
        %v3010 = vadd.f32 %v2624, %v2765
        %v3011 = vadd.f32 %v2625, %v2767
        %v3012 = vadd.f32 %v2626, %v2926
        %v3013 = vadd.f32 %v2627, %v2928
        %v3014 = vadd.f32 %v2628, %v2771
        %v3015 = vadd.f32 %v2629, %v2773
        %v3016 = vadd.f32 %v2630, %v2932
        %v3017 = vadd.f32 %v2631, %v2934
        %v3018 = vadd.f32 %v2632, %v2777
        %v3019 = vadd.f32 %v2633, %v2779
        %v3020 = vadd.f32 %v2634, %v2938
        %v3021 = vadd.f32 %v2635, %v2940
        %v3022 = vadd.f32 %v2636, %v2783
        %v3023 = vadd.f32 %v2637, %v2785
        %v3024 = vadd.f32 %v2638, %v2944
        %v3025 = vadd.f32 %v2639, %v2946
        %v3026 = vadd.f32 %v2640, %v2789
        %v3027 = vadd.f32 %v2641, %v2791
        %v3028 = vadd.f32 %v2642, %v2950
        %v3029 = vadd.f32 %v2643, %v2952
        %v3030 = vadd.f32 %v2644, %v2795
        %v3031 = vadd.f32 %v2645, %v2797
        %v3032 = vadd.f32 %v2646, %v2956
        %v3033 = vadd.f32 %v2647, %v2958
        %v3034 = vadd.f32 %v2648, %v2801
        %v3035 = vadd.f32 %v2649, %v2803
        %v3036 = vadd.f32 %v2650, %v2962
        %v3037 = vadd.f32 %v2651, %v2964
        %v3038 = vadd.f32 %v2652, %v2807
        %v3039 = vadd.f32 %v2653, %v2809
        %v3040 = vadd.f32 %v2654, %v2968
        %v3041 = vadd.f32 %v2655, %v2970
        %v3042 = vadd.f32 %v2656, %v2813
        %v3043 = vadd.f32 %v2657, %v2815
        %v3044 = vadd.f32 %v2658, %v2974
        %v3045 = vadd.f32 %v2659, %v2976
        %v3046 = vadd.f32 %v2660, %v2819
        %v3047 = vadd.f32 %v2661, %v2821
        %v3048 = vadd.f32 %v2662, %v2980
        %v3049 = vadd.f32 %v2663, %v2982
        %v3050 = vadd.f32 %v2664, %v2825
        %v3051 = vadd.f32 %v2665, %v2827
        %v3052 = vadd.f32 %v2666, %v2986
        %v3053 = vadd.f32 %v2667, %v2988
        %3054 = vst [vmem:[#allocation3] sm:$0xff] %v2990
        %3055 = vst [vmem:[#allocation3 + $0x8] sm:$0xff] %v2991
        %3056 = vst [vmem:[#allocation3 + $0x10] sm:$0xff] %v2992
        %3057 = vst [vmem:[#allocation3 + $0x18] sm:$0xff] %v2993
        %3058 = vst [vmem:[#allocation3 + $0x20] sm:$0xff] %v2994
        %3059 = vst [vmem:[#allocation3 + $0x28] sm:$0xff] %v2995
        %3060 = vst [vmem:[#allocation3 + $0x30] sm:$0xff] %v2996
        %3061 = vst [vmem:[#allocation3 + $0x38] sm:$0xff] %v2997
        %3062 = vst [vmem:[#allocation3 + $0x40] sm:$0xff] %v2998
        %3063 = vst [vmem:[#allocation3 + $0x48] sm:$0xff] %v2999
        %3064 = vst [vmem:[#allocation3 + $0x50] sm:$0xff] %v3000
        %3065 = vst [vmem:[#allocation3 + $0x58] sm:$0xff] %v3001
        %3066 = vst [vmem:[#allocation3 + $0x60] sm:$0xff] %v3002
        %3067 = vst [vmem:[#allocation3 + $0x68] sm:$0xff] %v3003
        %3068 = vst [vmem:[#allocation3 + $0x70] sm:$0xff] %v3004
        %3069 = vst [vmem:[#allocation3 + $0x78] sm:$0xff] %v3005
        %3070 = vst [vmem:[#allocation3 + $0x80] sm:$0xff] %v3006
        %3071 = vst [vmem:[#allocation3 + $0x88] sm:$0xff] %v3007
        %3072 = vst [vmem:[#allocation3 + $0x90] sm:$0xff] %v3008
        %3073 = vst [vmem:[#allocation3 + $0x98] sm:$0xff] %v3009
        %3074 = vst [vmem:[#allocation3 + $0xa0] sm:$0xff] %v3010
        %3075 = vst [vmem:[#allocation3 + $0xa8] sm:$0xff] %v3011
        %3076 = vst [vmem:[#allocation3 + $0xb0] sm:$0xff] %v3012
        %3077 = vst [vmem:[#allocation3 + $0xb8] sm:$0xff] %v3013
        %3078 = vst [vmem:[#allocation3 + $0xc0] sm:$0xff] %v3014
        %3079 = vst [vmem:[#allocation3 + $0xc8] sm:$0xff] %v3015
        %3080 = vst [vmem:[#allocation3 + $0xd0] sm:$0xff] %v3016
        %3081 = vst [vmem:[#allocation3 + $0xd8] sm:$0xff] %v3017
        %3082 = vst [vmem:[#allocation3 + $0xe0] sm:$0xff] %v3018
        %3083 = vst [vmem:[#allocation3 + $0xe8] sm:$0xff] %v3019
        %3084 = vst [vmem:[#allocation3 + $0xf0] sm:$0xff] %v3020
        %3085 = vst [vmem:[#allocation3 + $0xf8] sm:$0xff] %v3021
        %3086 = vst [vmem:[#allocation3 + $0x100] sm:$0xff] %v3022
        %3087 = vst [vmem:[#allocation3 + $0x108] sm:$0xff] %v3023
        %3088 = vst [vmem:[#allocation3 + $0x110] sm:$0xff] %v3024
        %3089 = vst [vmem:[#allocation3 + $0x118] sm:$0xff] %v3025
        %3090 = vst [vmem:[#allocation3 + $0x120] sm:$0xff] %v3026
        %3091 = vst [vmem:[#allocation3 + $0x128] sm:$0xff] %v3027
        %3092 = vst [vmem:[#allocation3 + $0x130] sm:$0xff] %v3028
        %3093 = vst [vmem:[#allocation3 + $0x138] sm:$0xff] %v3029
        %3094 = vst [vmem:[#allocation3 + $0x140] sm:$0xff] %v3030
        %3095 = vst [vmem:[#allocation3 + $0x148] sm:$0xff] %v3031
        %3096 = vst [vmem:[#allocation3 + $0x150] sm:$0xff] %v3032
        %3097 = vst [vmem:[#allocation3 + $0x158] sm:$0xff] %v3033
        %3098 = vst [vmem:[#allocation3 + $0x160] sm:$0xff] %v3034
        %3099 = vst [vmem:[#allocation3 + $0x168] sm:$0xff] %v3035
        %3100 = vst [vmem:[#allocation3 + $0x170] sm:$0xff] %v3036
        %3101 = vst [vmem:[#allocation3 + $0x178] sm:$0xff] %v3037
        %3102 = vst [vmem:[#allocation3 + $0x180] sm:$0xff] %v3038
        %3103 = vst [vmem:[#allocation3 + $0x188] sm:$0xff] %v3039
        %3104 = vst [vmem:[#allocation3 + $0x190] sm:$0xff] %v3040
        %3105 = vst [vmem:[#allocation3 + $0x198] sm:$0xff] %v3041
        %3106 = vst [vmem:[#allocation3 + $0x1a0] sm:$0xff] %v3042
        %3107 = vst [vmem:[#allocation3 + $0x1a8] sm:$0xff] %v3043
        %3108 = vst [vmem:[#allocation3 + $0x1b0] sm:$0xff] %v3044
        %3109 = vst [vmem:[#allocation3 + $0x1b8] sm:$0xff] %v3045
        %3110 = vst [vmem:[#allocation3 + $0x1c0] sm:$0xff] %v3046
        %3111 = vst [vmem:[#allocation3 + $0x1c8] sm:$0xff] %v3047
        %3112 = vst [vmem:[#allocation3 + $0x1d0] sm:$0xff] %v3048
        %3113 = vst [vmem:[#allocation3 + $0x1d8] sm:$0xff] %v3049
        %3114 = vst [vmem:[#allocation3 + $0x1e0] sm:$0xff] %v3050
        %3115 = vst [vmem:[#allocation3 + $0x1e8] sm:$0xff] %v3051
        %3116 = vst [vmem:[#allocation3 + $0x1f0] sm:$0xff] %v3052
        %3117 = vst [vmem:[#allocation3 + $0x1f8] sm:$0xff] %v3053
        %p3118 = scmp.eq.s32.totalorder %s27, 2
        // Predicated region
        $region73: #{tpu_custom_call.1} parent=59 // pred_check
          %p3119 = pneg %p3118
        $region74: #{tpu_custom_call.1} parent=59 // pred_check_branch
          %3121 = sbr.rel (%p3119) target = $region76
        $region75: #{tpu_custom_call.1} parent=59 // pred_region
          %v3122 = vld [vmem:[#allocation3] sm:$0xff]
          %v3123 = vld [vmem:[#allocation3 + $0x8] sm:$0xff]
          %v3124 = vld [vmem:[#allocation3 + $0x10] sm:$0xff]
          %v3125 = vld [vmem:[#allocation3 + $0x18] sm:$0xff]
          %v3126 = vld [vmem:[#allocation3 + $0x20] sm:$0xff]
          %v3127 = vld [vmem:[#allocation3 + $0x28] sm:$0xff]
          %v3128 = vld [vmem:[#allocation3 + $0x30] sm:$0xff]
          %v3129 = vld [vmem:[#allocation3 + $0x38] sm:$0xff]
          %v3130 = vld [vmem:[#allocation3 + $0x40] sm:$0xff]
          %v3131 = vld [vmem:[#allocation3 + $0x48] sm:$0xff]
          %v3132 = vld [vmem:[#allocation3 + $0x50] sm:$0xff]
          %v3133 = vld [vmem:[#allocation3 + $0x58] sm:$0xff]
          %v3134 = vld [vmem:[#allocation3 + $0x60] sm:$0xff]
          %v3135 = vld [vmem:[#allocation3 + $0x68] sm:$0xff]
          %v3136 = vld [vmem:[#allocation3 + $0x70] sm:$0xff]
          %v3137 = vld [vmem:[#allocation3 + $0x78] sm:$0xff]
          %v3138 = vld [vmem:[#allocation3 + $0x80] sm:$0xff]
          %v3139 = vld [vmem:[#allocation3 + $0x88] sm:$0xff]
          %v3140 = vld [vmem:[#allocation3 + $0x90] sm:$0xff]
          %v3141 = vld [vmem:[#allocation3 + $0x98] sm:$0xff]
          %v3142 = vld [vmem:[#allocation3 + $0xa0] sm:$0xff]
          %v3143 = vld [vmem:[#allocation3 + $0xa8] sm:$0xff]
          %v3144 = vld [vmem:[#allocation3 + $0xb0] sm:$0xff]
          %v3145 = vld [vmem:[#allocation3 + $0xb8] sm:$0xff]
          %v3146 = vld [vmem:[#allocation3 + $0xc0] sm:$0xff]
          %v3147 = vld [vmem:[#allocation3 + $0xc8] sm:$0xff]
          %v3148 = vld [vmem:[#allocation3 + $0xd0] sm:$0xff]
          %v3149 = vld [vmem:[#allocation3 + $0xd8] sm:$0xff]
          %v3150 = vld [vmem:[#allocation3 + $0xe0] sm:$0xff]
          %v3151 = vld [vmem:[#allocation3 + $0xe8] sm:$0xff]
          %v3152 = vld [vmem:[#allocation3 + $0xf0] sm:$0xff]
          %v3153 = vld [vmem:[#allocation3 + $0xf8] sm:$0xff]
          %v3154 = vld [vmem:[#allocation3 + $0x100] sm:$0xff]
          %v3155 = vld [vmem:[#allocation3 + $0x108] sm:$0xff]
          %v3156 = vld [vmem:[#allocation3 + $0x110] sm:$0xff]
          %v3157 = vld [vmem:[#allocation3 + $0x118] sm:$0xff]
          %v3158 = vld [vmem:[#allocation3 + $0x120] sm:$0xff]
          %v3159 = vld [vmem:[#allocation3 + $0x128] sm:$0xff]
          %v3160 = vld [vmem:[#allocation3 + $0x130] sm:$0xff]
          %v3161 = vld [vmem:[#allocation3 + $0x138] sm:$0xff]
          %v3162 = vld [vmem:[#allocation3 + $0x140] sm:$0xff]
          %v3163 = vld [vmem:[#allocation3 + $0x148] sm:$0xff]
          %v3164 = vld [vmem:[#allocation3 + $0x150] sm:$0xff]
          %v3165 = vld [vmem:[#allocation3 + $0x158] sm:$0xff]
          %v3166 = vld [vmem:[#allocation3 + $0x160] sm:$0xff]
          %v3167 = vld [vmem:[#allocation3 + $0x168] sm:$0xff]
          %v3168 = vld [vmem:[#allocation3 + $0x170] sm:$0xff]
          %v3169 = vld [vmem:[#allocation3 + $0x178] sm:$0xff]
          %v3170 = vld [vmem:[#allocation3 + $0x180] sm:$0xff]
          %v3171 = vld [vmem:[#allocation3 + $0x188] sm:$0xff]
          %v3172 = vld [vmem:[#allocation3 + $0x190] sm:$0xff]
          %v3173 = vld [vmem:[#allocation3 + $0x198] sm:$0xff]
          %v3174 = vld [vmem:[#allocation3 + $0x1a0] sm:$0xff]
          %v3175 = vld [vmem:[#allocation3 + $0x1a8] sm:$0xff]
          %v3176 = vld [vmem:[#allocation3 + $0x1b0] sm:$0xff]
          %v3177 = vld [vmem:[#allocation3 + $0x1b8] sm:$0xff]
          %v3178 = vld [vmem:[#allocation3 + $0x1c0] sm:$0xff]
          %v3179 = vld [vmem:[#allocation3 + $0x1c8] sm:$0xff]
          %v3180 = vld [vmem:[#allocation3 + $0x1d0] sm:$0xff]
          %v3181 = vld [vmem:[#allocation3 + $0x1d8] sm:$0xff]
          %v3182 = vld [vmem:[#allocation3 + $0x1e0] sm:$0xff]
          %v3183 = vld [vmem:[#allocation3 + $0x1e8] sm:$0xff]
          %v3184 = vld [vmem:[#allocation3 + $0x1f0] sm:$0xff]
          %v3185 = vld [vmem:[#allocation3 + $0x1f8] sm:$0xff]
          %v3186 = vld [vmem:[#allocation4] sm:$0xff]
          %v3187 = vld [vmem:[#allocation4 + $0x8] sm:$0xff]
          %v3188 = vld [vmem:[#allocation4 + $0x10] sm:$0xff]
          %v3189 = vld [vmem:[#allocation4 + $0x18] sm:$0xff]
          %v3190 = vld [vmem:[#allocation4 + $0x20] sm:$0xff]
          %v3191 = vld [vmem:[#allocation4 + $0x28] sm:$0xff]
          %v3192 = vld [vmem:[#allocation4 + $0x30] sm:$0xff]
          %v3193 = vld [vmem:[#allocation4 + $0x38] sm:$0xff]
          %v3194 = vld [vmem:[#allocation4 + $0x40] sm:$0xff]
          %v3195 = vld [vmem:[#allocation4 + $0x48] sm:$0xff]
          %v3196 = vld [vmem:[#allocation4 + $0x50] sm:$0xff]
          %v3197 = vld [vmem:[#allocation4 + $0x58] sm:$0xff]
          %v3198 = vld [vmem:[#allocation4 + $0x60] sm:$0xff]
          %v3199 = vld [vmem:[#allocation4 + $0x68] sm:$0xff]
          %v3200 = vld [vmem:[#allocation4 + $0x70] sm:$0xff]
          %v3201 = vld [vmem:[#allocation4 + $0x78] sm:$0xff]
          %v3202 = vadd.f32 %v3186, %v3122
          %v3203 = vadd.f32 %v3187, %v3126
          %v3204 = vadd.f32 %v3188, %v3130
          %v3205 = vadd.f32 %v3189, %v3134
          %v3206 = vadd.f32 %v3190, %v3138
          %v3207 = vadd.f32 %v3191, %v3142
          %v3208 = vadd.f32 %v3192, %v3146
          %v3209 = vadd.f32 %v3193, %v3150
          %v3210 = vadd.f32 %v3194, %v3154
          %v3211 = vadd.f32 %v3195, %v3158
          %v3212 = vadd.f32 %v3196, %v3162
          %v3213 = vadd.f32 %v3197, %v3166
          %v3214 = vadd.f32 %v3198, %v3170
          %v3215 = vadd.f32 %v3199, %v3174
          %v3216 = vadd.f32 %v3200, %v3178
          %v3217 = vadd.f32 %v3201, %v3182
          %3218 = vst [vmem:[#allocation9] sm:$0xff] %v3202
          %3219 = vst [vmem:[#allocation9 + $0x8] sm:$0xff] %v3203
          %3220 = vst [vmem:[#allocation9 + $0x10] sm:$0xff] %v3204
          %3221 = vst [vmem:[#allocation9 + $0x18] sm:$0xff] %v3205
          %3222 = vst [vmem:[#allocation9 + $0x20] sm:$0xff] %v3206
          %3223 = vst [vmem:[#allocation9 + $0x28] sm:$0xff] %v3207
          %3224 = vst [vmem:[#allocation9 + $0x30] sm:$0xff] %v3208
          %3225 = vst [vmem:[#allocation9 + $0x38] sm:$0xff] %v3209
          %3226 = vst [vmem:[#allocation9 + $0x40] sm:$0xff] %v3210
          %3227 = vst [vmem:[#allocation9 + $0x48] sm:$0xff] %v3211
          %3228 = vst [vmem:[#allocation9 + $0x50] sm:$0xff] %v3212
          %3229 = vst [vmem:[#allocation9 + $0x58] sm:$0xff] %v3213
          %3230 = vst [vmem:[#allocation9 + $0x60] sm:$0xff] %v3214
          %3231 = vst [vmem:[#allocation9 + $0x68] sm:$0xff] %v3215
          %3232 = vst [vmem:[#allocation9 + $0x70] sm:$0xff] %v3216
          %3233 = vst [vmem:[#allocation9 + $0x78] sm:$0xff] %v3217
          %v3234 = vld [vmem:[#allocation7] sm:$0xff]
          %v3235 = vld [vmem:[#allocation7 + $0x8] sm:$0xff]
          %v3236 = vld [vmem:[#allocation7 + $0x10] sm:$0xff]
          %v3237 = vld [vmem:[#allocation7 + $0x18] sm:$0xff]
          %v3238 = vld [vmem:[#allocation7 + $0x20] sm:$0xff]
          %v3239 = vld [vmem:[#allocation7 + $0x28] sm:$0xff]
          %v3240 = vld [vmem:[#allocation7 + $0x30] sm:$0xff]
          %v3241 = vld [vmem:[#allocation7 + $0x38] sm:$0xff]
          %v3242 = vld [vmem:[#allocation7 + $0x40] sm:$0xff]
          %v3243 = vld [vmem:[#allocation7 + $0x48] sm:$0xff]
          %v3244 = vld [vmem:[#allocation7 + $0x50] sm:$0xff]
          %v3245 = vld [vmem:[#allocation7 + $0x58] sm:$0xff]
          %v3246 = vld [vmem:[#allocation7 + $0x60] sm:$0xff]
          %v3247 = vld [vmem:[#allocation7 + $0x68] sm:$0xff]
          %v3248 = vld [vmem:[#allocation7 + $0x70] sm:$0xff]
          %v3249 = vld [vmem:[#allocation7 + $0x78] sm:$0xff]
          %v3250 = vld [vmem:[#allocation7 + $0x80] sm:$0xff]
          %v3251 = vld [vmem:[#allocation7 + $0x88] sm:$0xff]
          %v3252 = vld [vmem:[#allocation7 + $0x90] sm:$0xff]
          %v3253 = vld [vmem:[#allocation7 + $0x98] sm:$0xff]
          %v3254 = vld [vmem:[#allocation7 + $0xa0] sm:$0xff]
          %v3255 = vld [vmem:[#allocation7 + $0xa8] sm:$0xff]
          %v3256 = vld [vmem:[#allocation7 + $0xb0] sm:$0xff]
          %v3257 = vld [vmem:[#allocation7 + $0xb8] sm:$0xff]
          %v3258 = vld [vmem:[#allocation7 + $0xc0] sm:$0xff]
          %v3259 = vld [vmem:[#allocation7 + $0xc8] sm:$0xff]
          %v3260 = vld [vmem:[#allocation7 + $0xd0] sm:$0xff]
          %v3261 = vld [vmem:[#allocation7 + $0xd8] sm:$0xff]
          %v3262 = vld [vmem:[#allocation7 + $0xe0] sm:$0xff]
          %v3263 = vld [vmem:[#allocation7 + $0xe8] sm:$0xff]
          %v3264 = vld [vmem:[#allocation7 + $0xf0] sm:$0xff]
          %v3265 = vld [vmem:[#allocation7 + $0xf8] sm:$0xff]
          %v3266 = vld [vmem:[#allocation7 + $0x100] sm:$0xff]
          %v3267 = vld [vmem:[#allocation7 + $0x108] sm:$0xff]
          %v3268 = vld [vmem:[#allocation7 + $0x110] sm:$0xff]
          %v3269 = vld [vmem:[#allocation7 + $0x118] sm:$0xff]
          %v3270 = vld [vmem:[#allocation7 + $0x120] sm:$0xff]
          %v3271 = vld [vmem:[#allocation7 + $0x128] sm:$0xff]
          %v3272 = vld [vmem:[#allocation7 + $0x130] sm:$0xff]
          %v3273 = vld [vmem:[#allocation7 + $0x138] sm:$0xff]
          %v3274 = vld [vmem:[#allocation7 + $0x140] sm:$0xff]
          %v3275 = vld [vmem:[#allocation7 + $0x148] sm:$0xff]
          %v3276 = vld [vmem:[#allocation7 + $0x150] sm:$0xff]
          %v3277 = vld [vmem:[#allocation7 + $0x158] sm:$0xff]
          %v3278 = vld [vmem:[#allocation7 + $0x160] sm:$0xff]
          %v3279 = vld [vmem:[#allocation7 + $0x168] sm:$0xff]
          %v3280 = vld [vmem:[#allocation7 + $0x170] sm:$0xff]
          %v3281 = vld [vmem:[#allocation7 + $0x178] sm:$0xff]
          %v3282 = vadd.f32 %v3234, %v3123
          %v3283 = vadd.f32 %v3235, %v3124
          %v3284 = vadd.f32 %v3236, %v3125
          %v3285 = vadd.f32 %v3237, %v3127
          %v3286 = vadd.f32 %v3238, %v3128
          %v3287 = vadd.f32 %v3239, %v3129
          %v3288 = vadd.f32 %v3240, %v3131
          %v3289 = vadd.f32 %v3241, %v3132
          %v3290 = vadd.f32 %v3242, %v3133
          %v3291 = vadd.f32 %v3243, %v3135
          %v3292 = vadd.f32 %v3244, %v3136
          %v3293 = vadd.f32 %v3245, %v3137
          %v3294 = vadd.f32 %v3246, %v3139
          %v3295 = vadd.f32 %v3247, %v3140
          %v3296 = vadd.f32 %v3248, %v3141
          %v3297 = vadd.f32 %v3249, %v3143
          %v3298 = vadd.f32 %v3250, %v3144
          %v3299 = vadd.f32 %v3251, %v3145
          %v3300 = vadd.f32 %v3252, %v3147
          %v3301 = vadd.f32 %v3253, %v3148
          %v3302 = vadd.f32 %v3254, %v3149
          %v3303 = vadd.f32 %v3255, %v3151
          %v3304 = vadd.f32 %v3256, %v3152
          %v3305 = vadd.f32 %v3257, %v3153
          %v3306 = vadd.f32 %v3258, %v3155
          %v3307 = vadd.f32 %v3259, %v3156
          %v3308 = vadd.f32 %v3260, %v3157
          %v3309 = vadd.f32 %v3261, %v3159
          %v3310 = vadd.f32 %v3262, %v3160
          %v3311 = vadd.f32 %v3263, %v3161
          %v3312 = vadd.f32 %v3264, %v3163
          %v3313 = vadd.f32 %v3265, %v3164
          %v3314 = vadd.f32 %v3266, %v3165
          %v3315 = vadd.f32 %v3267, %v3167
          %v3316 = vadd.f32 %v3268, %v3168
          %v3317 = vadd.f32 %v3269, %v3169
          %v3318 = vadd.f32 %v3270, %v3171
          %v3319 = vadd.f32 %v3271, %v3172
          %v3320 = vadd.f32 %v3272, %v3173
          %v3321 = vadd.f32 %v3273, %v3175
          %v3322 = vadd.f32 %v3274, %v3176
          %v3323 = vadd.f32 %v3275, %v3177
          %v3324 = vadd.f32 %v3276, %v3179
          %v3325 = vadd.f32 %v3277, %v3180
          %v3326 = vadd.f32 %v3278, %v3181
          %v3327 = vadd.f32 %v3279, %v3183
          %v3328 = vadd.f32 %v3280, %v3184
          %v3329 = vadd.f32 %v3281, %v3185
          %3330 = vst [vmem:[#allocation10] sm:$0xff] %v3282
          %3331 = vst [vmem:[#allocation10 + $0x8] sm:$0xff] %v3283
          %3332 = vst [vmem:[#allocation10 + $0x10] sm:$0xff] %v3284
          %3333 = vst [vmem:[#allocation10 + $0x18] sm:$0xff] %v3285
          %3334 = vst [vmem:[#allocation10 + $0x20] sm:$0xff] %v3286
          %3335 = vst [vmem:[#allocation10 + $0x28] sm:$0xff] %v3287
          %3336 = vst [vmem:[#allocation10 + $0x30] sm:$0xff] %v3288
          %3337 = vst [vmem:[#allocation10 + $0x38] sm:$0xff] %v3289
          %3338 = vst [vmem:[#allocation10 + $0x40] sm:$0xff] %v3290
          %3339 = vst [vmem:[#allocation10 + $0x48] sm:$0xff] %v3291
          %3340 = vst [vmem:[#allocation10 + $0x50] sm:$0xff] %v3292
          %3341 = vst [vmem:[#allocation10 + $0x58] sm:$0xff] %v3293
          %3342 = vst [vmem:[#allocation10 + $0x60] sm:$0xff] %v3294
          %3343 = vst [vmem:[#allocation10 + $0x68] sm:$0xff] %v3295
          %3344 = vst [vmem:[#allocation10 + $0x70] sm:$0xff] %v3296
          %3345 = vst [vmem:[#allocation10 + $0x78] sm:$0xff] %v3297
          %3346 = vst [vmem:[#allocation10 + $0x80] sm:$0xff] %v3298
          %3347 = vst [vmem:[#allocation10 + $0x88] sm:$0xff] %v3299
          %3348 = vst [vmem:[#allocation10 + $0x90] sm:$0xff] %v3300
          %3349 = vst [vmem:[#allocation10 + $0x98] sm:$0xff] %v3301
          %3350 = vst [vmem:[#allocation10 + $0xa0] sm:$0xff] %v3302
          %3351 = vst [vmem:[#allocation10 + $0xa8] sm:$0xff] %v3303
          %3352 = vst [vmem:[#allocation10 + $0xb0] sm:$0xff] %v3304
          %3353 = vst [vmem:[#allocation10 + $0xb8] sm:$0xff] %v3305
          %3354 = vst [vmem:[#allocation10 + $0xc0] sm:$0xff] %v3306
          %3355 = vst [vmem:[#allocation10 + $0xc8] sm:$0xff] %v3307
          %3356 = vst [vmem:[#allocation10 + $0xd0] sm:$0xff] %v3308
          %3357 = vst [vmem:[#allocation10 + $0xd8] sm:$0xff] %v3309
          %3358 = vst [vmem:[#allocation10 + $0xe0] sm:$0xff] %v3310
          %3359 = vst [vmem:[#allocation10 + $0xe8] sm:$0xff] %v3311
          %3360 = vst [vmem:[#allocation10 + $0xf0] sm:$0xff] %v3312
          %3361 = vst [vmem:[#allocation10 + $0xf8] sm:$0xff] %v3313
          %3362 = vst [vmem:[#allocation10 + $0x100] sm:$0xff] %v3314
          %3363 = vst [vmem:[#allocation10 + $0x108] sm:$0xff] %v3315
          %3364 = vst [vmem:[#allocation10 + $0x110] sm:$0xff] %v3316
          %3365 = vst [vmem:[#allocation10 + $0x118] sm:$0xff] %v3317
          %3366 = vst [vmem:[#allocation10 + $0x120] sm:$0xff] %v3318
          %3367 = vst [vmem:[#allocation10 + $0x128] sm:$0xff] %v3319
          %3368 = vst [vmem:[#allocation10 + $0x130] sm:$0xff] %v3320
          %3369 = vst [vmem:[#allocation10 + $0x138] sm:$0xff] %v3321
          %3370 = vst [vmem:[#allocation10 + $0x140] sm:$0xff] %v3322
          %3371 = vst [vmem:[#allocation10 + $0x148] sm:$0xff] %v3323
          %3372 = vst [vmem:[#allocation10 + $0x150] sm:$0xff] %v3324
          %3373 = vst [vmem:[#allocation10 + $0x158] sm:$0xff] %v3325
          %3374 = vst [vmem:[#allocation10 + $0x160] sm:$0xff] %v3326
          %3375 = vst [vmem:[#allocation10 + $0x168] sm:$0xff] %v3327
          %3376 = vst [vmem:[#allocation10 + $0x170] sm:$0xff] %v3328
          %3377 = vst [vmem:[#allocation10 + $0x178] sm:$0xff] %v3329
        $region76: #{tpu_custom_call.1} parent=59 // pred_fallthru
          _
        // Predicated region
        $region77: #{tpu_custom_call.1} parent=59 // pred_check
          %p3378 = pneg %p270
        $region78: #{tpu_custom_call.1} parent=59 // pred_check_branch
          %3380 = sbr.rel (%p3378) target = $region80
        $region79: #{tpu_custom_call.1} parent=59 // pred_region
          %s3382 = ssub.s32 2048, 2048
          %3383 = vsyncadd [#allocation6], %s3382
          %s3384 = sshll.u32 [#allocation9], 4
          %s3385 = int_to_ptr.vmem [resolvable:$true] %s3384
          %3390 = dma.vmem_to_hbm [thread:$0]  %s3385, 2048, %s10, [#allocation6], 128, 128, 8
        $region80: #{tpu_custom_call.1} parent=59 // pred_fallthru
          _
        // Predicated region
        $region81: #{tpu_custom_call.1} parent=59 // pred_check
          %p3391 = pneg %p291
        $region82: #{tpu_custom_call.1} parent=59 // pred_check_branch
          %3393 = sbr.rel (%p3391) target = $region84
        $region83: #{tpu_custom_call.1} parent=59 // pred_region
          %s3395 = ssub.s32 6144, 6144
          %3396 = vsyncadd [#allocation11], %s3395
          %s3397 = sshll.u32 [#allocation10], 4
          %s3398 = int_to_ptr.vmem [resolvable:$true] %s3397
          %3403 = dma.vmem_to_hbm [thread:$0]  %s3398, 6144, %s11, [#allocation11], 384, 384, 24
        $region84: #{tpu_custom_call.1} parent=59 // pred_fallthru
          _
        // Predicated region
        $region85: #{tpu_custom_call.1} parent=59 // pred_check
          %p3404 = pneg %p270
        $region86: #{tpu_custom_call.1} parent=59 // pred_check_branch
          %3406 = sbr.rel (%p3404) target = $region88
        $region87: #{tpu_custom_call.1} parent=59 // pred_region
          %3407 = dma.done [#allocation6], 2048
        $region88: #{tpu_custom_call.1} parent=59 // pred_fallthru
          _
        // Predicated region
        $region89: #{tpu_custom_call.1} parent=59 // pred_check
          %p3408 = pneg %p291
        $region90: #{tpu_custom_call.1} parent=59 // pred_check_branch
          %3410 = sbr.rel (%p3408) target = $region92
        $region91: #{tpu_custom_call.1} parent=59 // pred_region
          %3411 = dma.done [#allocation11], 6144
        $region92: #{tpu_custom_call.1} parent=59 // pred_fallthru
          _
      $region60: #{tpu_custom_call.1} parent=5 // pred_fallthru
        _
      %p3412 = scmp.le.s32.totalorder 2, %s22
      // Predicated region
      $region93: #{tpu_custom_call.1} parent=5 // pred_check
        %p3413 = pneg %p3412
      $region94: #{tpu_custom_call.1} parent=5 // pred_check_branch
        %3415 = sbr.rel (%p3413) target = $region96
      $region95: #{tpu_custom_call.1} parent=5 // pred_region
        %s3416 = ssub.s32 %s22, 2
      $region96: #{tpu_custom_call.1} parent=5 // pred_fallthru
        _
    $region6: #{tpu_custom_call.1} parent=1 // loop_footer
      %s26 = sadd.s32 1, %s22
    $region7: #{tpu_custom_call.1} parent=1 // loop_footer_branch
      %21 = sbr.rel target = $region3
    $region8: #{tpu_custom_call.1} parent=1 // loop_exit
      _
    %3417 = vsyncpa [#allocation5], 1
    %s3418 = scalar_lea.sflag [#allocation5], 1
    %3419 = vsyncpa %s3418, 1
    %3420 = vsyncpa [#allocation8], 1
    %3421 = vsyncpa [#allocation6], 1
    %s3422 = scalar_lea.sflag [#allocation6], 1
    %3423 = vsyncpa %s3422, 1
    %3424 = vsyncpa [#allocation11], 1

</llo_original>
